<compile_context>
chip_gen: v5e
topology: v5e:2x2
jax: 0.10.0
libtpu: 0.0.40
codegen_flags: <defaults>
</compile_context>

<pallas_src>
import numpy as np
import jax
import jax.numpy as jnp
from jax import lax
from jax.experimental import pallas as pl
from jax.experimental.pallas import tpu as pltpu


# --------------------------------------------------------------------------
# Generation-aware hardware constants (VMEM capacity, MXU row tile, bf16 EUP)
# --------------------------------------------------------------------------
def _detect_hw():
    kind = ""
    try:
        kind = jax.devices()[0].device_kind.lower()
    except Exception:
        pass
    vmem = None
    try:
        vmem = int(pltpu.get_tpu_info().vmem_capacity_bytes)
    except Exception:
        vmem = None
    if not vmem:
        # v5e/v6e (and older) have 128 MiB VMEM per core; v7x has 64 MiB. Unknown -> conservative.
        vmem = 64 * 1024 * 1024 if ("v7" in kind or kind == "") else 128 * 1024 * 1024
    newer = ("v6" in kind) or ("v7" in kind)
    mxu_rows = 256 if newer else 128       # MXU row tile: 128 on v5e, 256 on v6e/v7x
    bf16_act = newer                       # bf16 EUP/VPU path exists on v6e/v7x only
    return vmem, mxu_rows, bf16_act


_VMEM_CAPACITY, _MXU_ROWS, _BF16_ACTIVATIONS = _detect_hw()
_VMEM_BUDGET_BYTES = int(_VMEM_CAPACITY * 0.72)   # sizing target for per-tile working set
_VMEM_LIMIT_BYTES = int(_VMEM_CAPACITY * 0.86)    # raised scoped-VMEM limit (< physical)
_UNROLL_T_MAX = 16                                # fully unroll serial loop up to this T


def _cdiv(a, b):
    return -(-a // b)


def _round_up(a, m):
    return _cdiv(a, m) * m


# --------------------------------------------------------------------------
# Pallas kernel: one fused bidirectional LSTM layer (optionally + time-mean)
# --------------------------------------------------------------------------
def _make_bilstm_kernel(T, H, fuse_mean, act_dtype):
    """Fused bi-LSTM layer kernel.

    Refs:
      x_ref    : (T, TB, Din)   time-major input batch-tile (bf16)
      wih_ref  : (Din, 8H)      [W_ih_fwd | W_ih_bwd], pre-transposed, bf16
      b_ref    : (1, 8H)        [b_fwd | b_bwd] (ih + hh biases folded), f32
      whhf_ref : (H, 4H)        forward W_hh, pre-transposed, bf16
      whhb_ref : (H, 4H)        backward W_hh, pre-transposed, bf16
      out_ref  : (T, TB, 2H)    hidden sequence          (fuse_mean=False)
                 (TB, 2H)       time-mean of hidden seq  (fuse_mean=True)
      gxf, gxb : (T, TB, 4H)    bf16 VMEM scratch with the hoisted input projections
    """

    def kernel(x_ref, wih_ref, b_ref, whhf_ref, whhb_ref, out_ref, gxf, gxb):
        TB = x_ref.shape[1]
        Din = x_ref.shape[2]

        # ---- Phase 1: recurrence-independent input projection, ONE big MXU matmul ----
        # (T, TB, Din) -> (T*TB, Din) is a leading-dim merge (layout-free); both direction
        # weights are pre-concatenated to (Din, 8H), so one dot replaces 2T small dots.
        # f32 accumulation, bf16 storage in the scratches (halves scratch VMEM).
        x2 = x_ref[...].reshape(T * TB, Din).astype(jnp.bfloat16)
        gx = jnp.dot(x2, wih_ref[...], preferred_element_type=jnp.float32) + b_ref[...]
        gxf[...] = gx[:, : 4 * H].reshape(T, TB, 4 * H).astype(jnp.bfloat16)
        gxb[...] = gx[:, 4 * H:].reshape(T, TB, 4 * H).astype(jnp.bfloat16)

        # ---- Phase 2: serial recurrence, forward + backward directions fused ----
        def cell(gates, c_prev):
            # PyTorch gate order: i, f, g, o. Activations optionally in bf16 (v6e/v7x EUP
            # bf16 path ~2x throughput); cell state c and hidden h stay f32.
            gates = gates.astype(act_dtype)
            i = jax.nn.sigmoid(gates[:, 0 * H:1 * H])
            f = jax.nn.sigmoid(gates[:, 1 * H:2 * H])
            g = jnp.tanh(gates[:, 2 * H:3 * H])
            o = jax.nn.sigmoid(gates[:, 3 * H:4 * H])
            c = f * c_prev + i * g              # promotes to f32 (c_prev is f32)
            h = o * jnp.tanh(c)                 # f32
            return h, c

        def step(t, tr, h_f, c_f, h_b, c_b):
            gates_f = gxf[t] + jnp.dot(h_f.astype(jnp.bfloat16), whhf_ref[...],
                                       preferred_element_type=jnp.float32)
            h_f, c_f = cell(gates_f, c_f)
            gates_b = gxb[tr] + jnp.dot(h_b.astype(jnp.bfloat16), whhb_ref[...],
                                        preferred_element_type=jnp.float32)
            h_b, c_b = cell(gates_b, c_b)
            return h_f, c_f, h_b, c_b

        zero = jnp.zeros((TB, H), jnp.float32)
        h_f = c_f = h_b = c_b = zero
        if fuse_mean:
            acc_f = acc_b = zero

        if T <= _UNROLL_T_MAX:
            # Short fixed trip count: full static unroll (LLO scheduling visibility).
            for t in range(T):
                tr = T - 1 - t
                h_f, c_f, h_b, c_b = step(t, tr, h_f, c_f, h_b, c_b)
                if fuse_mean:
                    acc_f = acc_f + h_f
                    acc_b = acc_b + h_b
                else:
                    out_ref[t, :, 0:H] = h_f.astype(out_ref.dtype)
                    out_ref[tr, :, H:2 * H] = h_b.astype(out_ref.dtype)
        else:
            # Longer sequences: visible fori_loop with modest unroll to bound live ranges
            # and code size while keeping scheduler visibility.
            def body(t, carry):
                tr = T - 1 - t
                if fuse_mean:
                    hf, cf, hb, cb, af, ab = carry
                    hf, cf, hb, cb = step(t, tr, hf, cf, hb, cb)
                    return (hf, cf, hb, cb, af + hf, ab + hb)
                hf, cf, hb, cb = carry
                hf, cf, hb, cb = step(t, tr, hf, cf, hb, cb)
                out_ref[t, :, 0:H] = hf.astype(out_ref.dtype)
                out_ref[tr, :, H:2 * H] = hb.astype(out_ref.dtype)
                return (hf, cf, hb, cb)

            init = (h_f, c_f, h_b, c_b, acc_f, acc_b) if fuse_mean else (h_f, c_f, h_b, c_b)
            carry = lax.fori_loop(0, T, body, init, unroll=2)
            if fuse_mean:
                h_f, c_f, h_b, c_b, acc_f, acc_b = carry

        if fuse_mean:
            inv_t = jnp.float32(1.0 / T)
            # Write the two halves directly: no lane-concatenated (TB, 2H) temporary.
            out_ref[:, 0:H] = (acc_f * inv_t).astype(out_ref.dtype)
            out_ref[:, H:2 * H] = (acc_b * inv_t).astype(out_ref.dtype)

    return kernel


# --------------------------------------------------------------------------
# Batch-tile sizing (VMEM-budget aware, generation aware, padding-friendly)
# --------------------------------------------------------------------------
def _choose_batch_tile(B, T, Din, H, x_bytes, out_bytes):
    """Pick a batch tile TB (multiple of 8) whose estimated VMEM working set fits the
    budget.  The caller pads B up to a multiple of TB, so TB never has to divide B
    (removes the old 'no divisor fits -> over budget' failure mode).  When B >= 16 the
    tile is capped so the grid has >= 2 iterations (keeps both v7x TensorCores busy)."""
    if B <= 8:
        return B
    per_row = (2 * T * Din * x_bytes            # input block  (double-buffered)
               + 2 * T * 2 * H * out_bytes      # output block (double-buffered, worst case)
               + 2 * T * 4 * H * 2              # gxf + gxb VMEM scratch (bf16)
               + T * 8 * H * 4                  # transient f32 Phase-1 projection
               + 8 * H * 4)                     # live h/c/acc f32 state
    fixed = 2 * (Din * 8 * H * 2                # W_ih concat (bf16, double-buffered)
                 + 2 * (H * 4 * H * 2)          # W_hh fwd + bwd (bf16)
                 + 8 * H * 4)                   # folded biases (f32)
    tb_max = max(8, ((_VMEM_BUDGET_BYTES - fixed) // per_row // 8) * 8)
    if tb_max >= _MXU_ROWS:
        tb_max = (tb_max // _MXU_ROWS) * _MXU_ROWS    # keep MXU row pushes fully occupied
    min_tiles = 2 if B >= 16 else 1
    n_tiles = max(min_tiles, _cdiv(B, tb_max))
    tb = _round_up(_cdiv(B, n_tiles), 8)
    if tb >= _MXU_ROWS:
        tb = min(_round_up(tb, _MXU_ROWS), tb_max)
    return tb


# --------------------------------------------------------------------------
# Python wrapper: one bidirectional layer == one pallas_call
# --------------------------------------------------------------------------
def bilstm_layer(x_seq, fwd_params, bwd_params, fuse_mean=False, out_dtype=jnp.float32):
    """x_seq: (T, B, Din) time-major. Returns (T, B, 2H) [out_dtype], or (B, 2H) if fuse_mean."""
    T, B, Din = x_seq.shape
    wf_ih, wf_hh, bf_ih, bf_hh = fwd_params
    wb_ih, wb_hh, bb_ih, bb_hh = bwd_params
    H = wf_hh.shape[1]

    # Weight prep (outside the kernel, once per trace): transpose to (rows, 4H) layout,
    # concat the two direction W_ih into one (Din, 8H) operand (single Phase-1 matmul),
    # fold ih+hh biases, cast MXU operands to bf16 (accumulation stays f32 in-kernel).
    wih = jnp.concatenate([jnp.transpose(wf_ih), jnp.transpose(wb_ih)],
                          axis=1).astype(jnp.bfloat16)                   # (Din, 8H)
    bias = jnp.concatenate([bf_ih + bf_hh, bb_ih + bb_hh]
                           ).reshape(1, 8 * H).astype(jnp.float32)       # (1, 8H)
    whhf = jnp.transpose(wf_hh).astype(jnp.bfloat16)                     # (H, 4H)
    whhb = jnp.transpose(wb_hh).astype(jnp.bfloat16)                     # (H, 4H)

    x_seq = x_seq.astype(jnp.bfloat16)     # matmul operand dtype; halves HBM/VMEM traffic
    TB = _choose_batch_tile(B, T, Din, H,
                            x_bytes=2, out_bytes=jnp.dtype(out_dtype).itemsize)
    B_pad = _round_up(B, TB)
    if B_pad != B:
        x_seq = jnp.pad(x_seq, ((0, 0), (0, B_pad - B), (0, 0)))
    grid = (B_pad // TB,)                  # batch-parallel grid axis

    in_specs = [
        pl.BlockSpec((T, TB, Din), lambda b: (0, b, 0)),
        pl.BlockSpec((Din, 8 * H), lambda b: (0, 0)),
        pl.BlockSpec((1, 8 * H), lambda b: (0, 0)),
        pl.BlockSpec((H, 4 * H), lambda b: (0, 0)),
        pl.BlockSpec((H, 4 * H), lambda b: (0, 0)),
    ]
    if fuse_mean:
        out_shape = jax.ShapeDtypeStruct((B_pad, 2 * H), out_dtype)
        out_specs = pl.BlockSpec((TB, 2 * H), lambda b: (b, 0))
    else:
        out_shape = jax.ShapeDtypeStruct((T, B_pad, 2 * H), out_dtype)
        out_specs = pl.BlockSpec((T, TB, 2 * H), lambda b: (0, b, 0))

    act_dtype = jnp.bfloat16 if _BF16_ACTIVATIONS else jnp.float32

    out = pl.pallas_call(
        _make_bilstm_kernel(T, H, fuse_mean, act_dtype),
        out_shape=out_shape,
        grid=grid,
        in_specs=in_specs,
        out_specs=out_specs,
        scratch_shapes=[
            pltpu.VMEM((T, TB, 4 * H), jnp.bfloat16),   # gxf: hoisted fwd input projection
            pltpu.VMEM((T, TB, 4 * H), jnp.bfloat16),   # gxb: hoisted bwd input projection
        ],
        compiler_params=pltpu.CompilerParams(
            dimension_semantics=("parallel",),          # batch tiles independent -> megacore/v7x
            vmem_limit_bytes=_VMEM_LIMIT_BYTES,
        ),
    )(x_seq, wih, bias, whhf, whhb)

    if B_pad != B:
        out = out[:B] if fuse_mean else out[:, :B]
    return out


# --------------------------------------------------------------------------
# Parameters (deterministic init matching nn.LSTM shapes; cell == 'LSTM')
# --------------------------------------------------------------------------
def init_params(key, wordvec_len, hidden_num, layer_num):
    params = []
    k = 1.0 / np.sqrt(hidden_num)
    keys = jax.random.split(key, layer_num * 2 * 4)
    idx = 0
    for l in range(layer_num):
        in_size = wordvec_len if l == 0 else 2 * hidden_num
        layer = []
        for _d in range(2):  # forward, reverse
            w_ih = jax.random.uniform(keys[idx], (4 * hidden_num, in_size),
                                      jnp.float32, -k, k); idx += 1
            w_hh = jax.random.uniform(keys[idx], (4 * hidden_num, hidden_num),
                                      jnp.float32, -k, k); idx += 1
            b_ih = jax.random.uniform(keys[idx], (4 * hidden_num,),
                                      jnp.float32, -k, k); idx += 1
            b_hh = jax.random.uniform(keys[idx], (4 * hidden_num,),
                                      jnp.float32, -k, k); idx += 1
            layer.append((w_ih, w_hh, b_ih, b_hh))
        params.append(layer)
    return params


# --------------------------------------------------------------------------
# Full forward (== deepsingalRNN.forward with cell='LSTM', eval mode)
# --------------------------------------------------------------------------
def deepsignal_rnn_forward(x, params):
    # x: (batch, seq, wordvec_len) -> (batch, 2*HIDDEN_NUM)
    h = jnp.transpose(x, (1, 0, 2))                     # time-major (T, B, D)
    n_layers = len(params)
    for li, layer in enumerate(params):
        last = (li == n_layers - 1)
        # Inter-layer activations carried in bf16 (halves HBM writeback / re-read);
        # the final fused time-mean is produced in f32.
        h = bilstm_layer(h, layer[0], layer[1], fuse_mean=last,
                         out_dtype=jnp.float32 if last else jnp.bfloat16)
        # TODO(synk): inter-layer dropout is train-mode only; eval forward applies none.
    return h                                            # (B, 2H)


# --------------------------------------------------------------------------
# Pure-JAX f32 reference (correctness check only)
# --------------------------------------------------------------------------
def _ref_lstm_dir(x_seq, w_ih, w_hh, b_ih, b_hh):
    T, B, _ = x_seq.shape
    H = w_hh.shape[1]

    def step(carry, x_t):
        h, c = carry
        gates = x_t @ w_ih.T + b_ih + h @ w_hh.T + b_hh
        i, f, g, o = jnp.split(gates, 4, axis=-1)
        i, f, o = jax.nn.sigmoid(i), jax.nn.sigmoid(f), jax.nn.sigmoid(o)
        g = jnp.tanh(g)
        c = f * c + i * g
        h = o * jnp.tanh(c)
        return (h, c), h

    init = (jnp.zeros((B, H), jnp.float32), jnp.zeros((B, H), jnp.float32))
    _, outs = lax.scan(step, init, x_seq)
    return outs


def reference_forward(x, params):
    h = jnp.transpose(x, (1, 0, 2)).astype(jnp.float32)
    for layer in params:
        (wf_ih, wf_hh, bf_ih, bf_hh) = layer[0]
        (wb_ih, wb_hh, bb_ih, bb_hh) = layer[1]
        out_f = _ref_lstm_dir(h, wf_ih, wf_hh, bf_ih, bf_hh)
        out_b = _ref_lstm_dir(h[::-1], wb_ih, wb_hh, bb_ih, bb_hh)[::-1]
        h = jnp.concatenate([out_f, out_b], axis=-1)
    return jnp.mean(h, axis=0)


# --------------------------------------------------------------------------
if __name__ == "__main__":
    B, T, WORDVEC_LEN, HIDDEN_NUM, LAYER_NUM = 2, 8, 4, 32, 2

    key = jax.random.PRNGKey(0)
    kx, kp = jax.random.split(key)
    x = jax.random.normal(kx, (B, T, WORDVEC_LEN), jnp.float32)
    params = init_params(kp, WORDVEC_LEN, HIDDEN_NUM, LAYER_NUM)

    fwd = jax.jit(deepsignal_rnn_forward)
    out = jax.block_until_ready(fwd(x, params))
    assert out.shape == (B, 2 * HIDDEN_NUM)

    # f32 reference; kernel uses bf16 MXU operands / bf16 carried activations with f32
    # accumulation and f32 cell state -> slightly looser tolerance.
    ref = jax.block_until_ready(reference_forward(x, params))
    np.testing.assert_allclose(np.asarray(out), np.asarray(ref), rtol=5e-2, atol=5e-2)

    print("KERNEL_OK")
</pallas_src>

<mosaic_0001>
module attributes {stable_mosaic.version = 11 : i64} {
  func.func @kernel(%arg0: i32, %arg1: memref<8x2x64xbf16, #tpu.memory_space<vmem>>, %arg2: memref<64x256xbf16, #tpu.memory_space<vmem>>, %arg3: memref<1x256xf32, #tpu.memory_space<vmem>>, %arg4: memref<32x128xbf16, #tpu.memory_space<vmem>>, %arg5: memref<32x128xbf16, #tpu.memory_space<vmem>>, %arg6: memref<2x64xf32, #tpu.memory_space<vmem>>, %arg7: memref<8x2x128xbf16, #tpu.memory_space<vmem>>, %arg8: memref<8x2x128xbf16, #tpu.memory_space<vmem>>) attributes {dimension_semantics = [#tpu.dimension_semantics<parallel>], iteration_bounds = array<i64: 1>, scalar_prefetch = 0 : i64, scratch_operands = 2 : i64, tpu.core_type = #tpu.core_type<tc>, window_params = [{transform_indices = @transform_0, window_bounds = array<i64: 8, 2, 64>}, {pipeline_mode = #tpu.pipeline_mode<synchronous>, transform_indices = @transform_1, window_bounds = array<i64: 64, 256>}, {pipeline_mode = #tpu.pipeline_mode<synchronous>, transform_indices = @transform_2, window_bounds = array<i64: 1, 256>}, {pipeline_mode = #tpu.pipeline_mode<synchronous>, transform_indices = @transform_3, window_bounds = array<i64: 32, 128>}, {pipeline_mode = #tpu.pipeline_mode<synchronous>, transform_indices = @transform_4, window_bounds = array<i64: 32, 128>}, {transform_indices = @transform_5, window_bounds = array<i64: 2, 64>}]} {
    %c0 = arith.constant 0 : index
    %c0_0 = arith.constant 0 : index
    %c0_1 = arith.constant 0 : index
    %0 = vector.load %arg1[%c0, %c0_0, %c0_1] : memref<8x2x64xbf16, #tpu.memory_space<vmem>>, vector<8x2x64xbf16>
    %1 = vector.shape_cast %0 : vector<8x2x64xbf16> to vector<16x64xbf16>
    %c0_2 = arith.constant 0 : index
    %c0_3 = arith.constant 0 : index
    %2 = vector.load %arg2[%c0_2, %c0_3] : memref<64x256xbf16, #tpu.memory_space<vmem>>, vector<64x256xbf16>
    %cst = arith.constant dense<0.000000e+00> : vector<16x256xf32>
    %3 = tpu.matmul %1, %2, %cst {dimension_numbers = #tpu.dot_dimension_numbers<[1], [0], [0], [1], [0, 0, 1, 1], [], []>} : vector<16x64xbf16>, vector<64x256xbf16>, vector<16x256xf32> -> vector<16x256xf32>
    %c0_4 = arith.constant 0 : index
    %c0_5 = arith.constant 0 : index
    %4 = vector.load %arg3[%c0_4, %c0_5] : memref<1x256xf32, #tpu.memory_space<vmem>>, vector<1x256xf32>
    %5 = vector.broadcast %4 : vector<1x256xf32> to vector<16x256xf32>
    %6 = arith.addf %3, %5 : vector<16x256xf32>
    %7 = vector.extract_strided_slice %6 {offsets = [0, 0], sizes = [16, 128], strides = [1, 1]} : vector<16x256xf32> to vector<16x128xf32>
    %8 = vector.shape_cast %7 : vector<16x128xf32> to vector<8x2x128xf32>
    %9 = arith.truncf %8 : vector<8x2x128xf32> to vector<8x2x128xbf16>
    %c0_6 = arith.constant 0 : index
    %c0_7 = arith.constant 0 : index
    %c0_8 = arith.constant 0 : index
    %10 = vector.load %arg7[%c0_6, %c0_7, %c0_8] : memref<8x2x128xbf16, #tpu.memory_space<vmem>>, vector<8x2x128xbf16>
    tpu.vector_store %arg7[%c0_6, %c0_7, %c0_8], %9 {strides = array<i32>} : memref<8x2x128xbf16, #tpu.memory_space<vmem>>, vector<8x2x128xbf16>,
    %11 = vector.extract_strided_slice %6 {offsets = [0, 128], sizes = [16, 128], strides = [1, 1]} : vector<16x256xf32> to vector<16x128xf32>
    %12 = vector.shape_cast %11 : vector<16x128xf32> to vector<8x2x128xf32>
    %13 = arith.truncf %12 : vector<8x2x128xf32> to vector<8x2x128xbf16>
    %c0_9 = arith.constant 0 : index
    %c0_10 = arith.constant 0 : index
    %c0_11 = arith.constant 0 : index
    %14 = vector.load %arg8[%c0_9, %c0_10, %c0_11] : memref<8x2x128xbf16, #tpu.memory_space<vmem>>, vector<8x2x128xbf16>
    tpu.vector_store %arg8[%c0_9, %c0_10, %c0_11], %13 {strides = array<i32>} : memref<8x2x128xbf16, #tpu.memory_space<vmem>>, vector<8x2x128xbf16>,
    %cst_12 = arith.constant 0.000000e+00 : f32
    %15 = vector.broadcast %cst_12 : f32 to vector<2x32xf32>
    %c0_13 = arith.constant 0 : index
    %c0_14 = arith.constant 0 : index
    %c0_15 = arith.constant 0 : index
    %16 = vector.load %arg7[%c0_13, %c0_14, %c0_15] : memref<8x2x128xbf16, #tpu.memory_space<vmem>>, vector<1x2x128xbf16>
    %17 = vector.shape_cast %16 : vector<1x2x128xbf16> to vector<2x128xbf16>
    %18 = arith.truncf %15 : vector<2x32xf32> to vector<2x32xbf16>
    %c0_16 = arith.constant 0 : index
    %c0_17 = arith.constant 0 : index
    %19 = vector.load %arg4[%c0_16, %c0_17] : memref<32x128xbf16, #tpu.memory_space<vmem>>, vector<32x128xbf16>
    %cst_18 = arith.constant dense<0.000000e+00> : vector<2x128xf32>
    %20 = tpu.matmul %18, %19, %cst_18 {dimension_numbers = #tpu.dot_dimension_numbers<[1], [0], [0], [1], [0, 0, 1, 1], [], []>} : vector<2x32xbf16>, vector<32x128xbf16>, vector<2x128xf32> -> vector<2x128xf32>
    %21 = arith.extf %17 : vector<2x128xbf16> to vector<2x128xf32>
    %22 = arith.addf %21, %20 : vector<2x128xf32>
    %23 = vector.extract_strided_slice %22 {offsets = [0, 0], sizes = [2, 32], strides = [1, 1]} : vector<2x128xf32> to vector<2x32xf32>
    %24 = arith.negf %23 : vector<2x32xf32>
    %25 = math.exp %24 : vector<2x32xf32>
    %cst_19 = arith.constant 1.000000e+00 : f32
    %26 = vector.broadcast %cst_19 : f32 to vector<2x32xf32>
    %27 = arith.addf %26, %25 : vector<2x32xf32>
    %28 = arith.divf %26, %27 : vector<2x32xf32>
    %29 = vector.extract_strided_slice %22 {offsets = [0, 32], sizes = [2, 32], strides = [1, 1]} : vector<2x128xf32> to vector<2x32xf32>
    %30 = arith.negf %29 : vector<2x32xf32>
    %31 = math.exp %30 : vector<2x32xf32>
    %cst_20 = arith.constant 1.000000e+00 : f32
    %32 = vector.broadcast %cst_20 : f32 to vector<2x32xf32>
    %33 = arith.addf %32, %31 : vector<2x32xf32>
    %34 = arith.divf %32, %33 : vector<2x32xf32>
    %35 = vector.extract_strided_slice %22 {offsets = [0, 64], sizes = [2, 32], strides = [1, 1]} : vector<2x128xf32> to vector<2x32xf32>
    %36 = math.tanh %35 : vector<2x32xf32>
    %37 = vector.extract_strided_slice %22 {offsets = [0, 96], sizes = [2, 32], strides = [1, 1]} : vector<2x128xf32> to vector<2x32xf32>
    %38 = arith.negf %37 : vector<2x32xf32>
    %39 = math.exp %38 : vector<2x32xf32>
    %cst_21 = arith.constant 1.000000e+00 : f32
    %40 = vector.broadcast %cst_21 : f32 to vector<2x32xf32>
    %41 = arith.addf %40, %39 : vector<2x32xf32>
    %42 = arith.divf %40, %41 : vector<2x32xf32>
    %43 = arith.mulf %34, %15 : vector<2x32xf32>
    %44 = arith.mulf %28, %36 : vector<2x32xf32>
    %45 = arith.addf %43, %44 : vector<2x32xf32>
    %46 = math.tanh %45 : vector<2x32xf32>
    %47 = arith.mulf %42, %46 : vector<2x32xf32>
    %c7 = arith.constant 7 : index
    %c0_22 = arith.constant 0 : index
    %c0_23 = arith.constant 0 : index
    %48 = vector.load %arg8[%c7, %c0_22, %c0_23] : memref<8x2x128xbf16, #tpu.memory_space<vmem>>, vector<1x2x128xbf16>
    %49 = vector.shape_cast %48 : vector<1x2x128xbf16> to vector<2x128xbf16>
    %50 = arith.truncf %15 : vector<2x32xf32> to vector<2x32xbf16>
    %c0_24 = arith.constant 0 : index
    %c0_25 = arith.constant 0 : index
    %51 = vector.load %arg5[%c0_24, %c0_25] : memref<32x128xbf16, #tpu.memory_space<vmem>>, vector<32x128xbf16>
    %cst_26 = arith.constant dense<0.000000e+00> : vector<2x128xf32>
    %52 = tpu.matmul %50, %51, %cst_26 {dimension_numbers = #tpu.dot_dimension_numbers<[1], [0], [0], [1], [0, 0, 1, 1], [], []>} : vector<2x32xbf16>, vector<32x128xbf16>, vector<2x128xf32> -> vector<2x128xf32>
    %53 = arith.extf %49 : vector<2x128xbf16> to vector<2x128xf32>
    %54 = arith.addf %53, %52 : vector<2x128xf32>
    %55 = vector.extract_strided_slice %54 {offsets = [0, 0], sizes = [2, 32], strides = [1, 1]} : vector<2x128xf32> to vector<2x32xf32>
    %56 = arith.negf %55 : vector<2x32xf32>
    %57 = math.exp %56 : vector<2x32xf32>
    %cst_27 = arith.constant 1.000000e+00 : f32
    %58 = vector.broadcast %cst_27 : f32 to vector<2x32xf32>
    %59 = arith.addf %58, %57 : vector<2x32xf32>
    %60 = arith.divf %58, %59 : vector<2x32xf32>
    %61 = vector.extract_strided_slice %54 {offsets = [0, 32], sizes = [2, 32], strides = [1, 1]} : vector<2x128xf32> to vector<2x32xf32>
    %62 = arith.negf %61 : vector<2x32xf32>
    %63 = math.exp %62 : vector<2x32xf32>
    %cst_28 = arith.constant 1.000000e+00 : f32
    %64 = vector.broadcast %cst_28 : f32 to vector<2x32xf32>
    %65 = arith.addf %64, %63 : vector<2x32xf32>
    %66 = arith.divf %64, %65 : vector<2x32xf32>
    %67 = vector.extract_strided_slice %54 {offsets = [0, 64], sizes = [2, 32], strides = [1, 1]} : vector<2x128xf32> to vector<2x32xf32>
    %68 = math.tanh %67 : vector<2x32xf32>
    %69 = vector.extract_strided_slice %54 {offsets = [0, 96], sizes = [2, 32], strides = [1, 1]} : vector<2x128xf32> to vector<2x32xf32>
    %70 = arith.negf %69 : vector<2x32xf32>
    %71 = math.exp %70 : vector<2x32xf32>
    %cst_29 = arith.constant 1.000000e+00 : f32
    %72 = vector.broadcast %cst_29 : f32 to vector<2x32xf32>
    %73 = arith.addf %72, %71 : vector<2x32xf32>
    %74 = arith.divf %72, %73 : vector<2x32xf32>
    %75 = arith.mulf %66, %15 : vector<2x32xf32>
    %76 = arith.mulf %60, %68 : vector<2x32xf32>
    %77 = arith.addf %75, %76 : vector<2x32xf32>
    %78 = math.tanh %77 : vector<2x32xf32>
    %79 = arith.mulf %74, %78 : vector<2x32xf32>
    %80 = arith.addf %15, %47 : vector<2x32xf32>
    %81 = arith.addf %15, %79 : vector<2x32xf32>
    %c1 = arith.constant 1 : index
    %c0_30 = arith.constant 0 : index
    %c0_31 = arith.constant 0 : index
    %82 = vector.load %arg7[%c1, %c0_30, %c0_31] : memref<8x2x128xbf16, #tpu.memory_space<vmem>>, vector<1x2x128xbf16>
    %83 = vector.shape_cast %82 : vector<1x2x128xbf16> to vector<2x128xbf16>
    %84 = arith.truncf %47 : vector<2x32xf32> to vector<2x32xbf16>
    %c0_32 = arith.constant 0 : index
    %c0_33 = arith.constant 0 : index
    %85 = vector.load %arg4[%c0_32, %c0_33] : memref<32x128xbf16, #tpu.memory_space<vmem>>, vector<32x128xbf16>
    %cst_34 = arith.constant dense<0.000000e+00> : vector<2x128xf32>
    %86 = tpu.matmul %84, %85, %cst_34 {dimension_numbers = #tpu.dot_dimension_numbers<[1], [0], [0], [1], [0, 0, 1, 1], [], []>} : vector<2x32xbf16>, vector<32x128xbf16>, vector<2x128xf32> -> vector<2x128xf32>
    %87 = arith.extf %83 : vector<2x128xbf16> to vector<2x128xf32>
    %88 = arith.addf %87, %86 : vector<2x128xf32>
    %89 = vector.extract_strided_slice %88 {offsets = [0, 0], sizes = [2, 32], strides = [1, 1]} : vector<2x128xf32> to vector<2x32xf32>
    %90 = arith.negf %89 : vector<2x32xf32>
    %91 = math.exp %90 : vector<2x32xf32>
    %cst_35 = arith.constant 1.000000e+00 : f32
    %92 = vector.broadcast %cst_35 : f32 to vector<2x32xf32>
    %93 = arith.addf %92, %91 : vector<2x32xf32>
    %94 = arith.divf %92, %93 : vector<2x32xf32>
    %95 = vector.extract_strided_slice %88 {offsets = [0, 32], sizes = [2, 32], strides = [1, 1]} : vector<2x128xf32> to vector<2x32xf32>
    %96 = arith.negf %95 : vector<2x32xf32>
    %97 = math.exp %96 : vector<2x32xf32>
    %cst_36 = arith.constant 1.000000e+00 : f32
    %98 = vector.broadcast %cst_36 : f32 to vector<2x32xf32>
    %99 = arith.addf %98, %97 : vector<2x32xf32>
    %100 = arith.divf %98, %99 : vector<2x32xf32>
    %101 = vector.extract_strided_slice %88 {offsets = [0, 64], sizes = [2, 32], strides = [1, 1]} : vector<2x128xf32> to vector<2x32xf32>
    %102 = math.tanh %101 : vector<2x32xf32>
    %103 = vector.extract_strided_slice %88 {offsets = [0, 96], sizes = [2, 32], strides = [1, 1]} : vector<2x128xf32> to vector<2x32xf32>
    %104 = arith.negf %103 : vector<2x32xf32>
    %105 = math.exp %104 : vector<2x32xf32>
    %cst_37 = arith.constant 1.000000e+00 : f32
    %106 = vector.broadcast %cst_37 : f32 to vector<2x32xf32>
    %107 = arith.addf %106, %105 : vector<2x32xf32>
    %108 = arith.divf %106, %107 : vector<2x32xf32>
    %109 = arith.mulf %100, %45 : vector<2x32xf32>
    %110 = arith.mulf %94, %102 : vector<2x32xf32>
    %111 = arith.addf %109, %110 : vector<2x32xf32>
    %112 = math.tanh %111 : vector<2x32xf32>
    %113 = arith.mulf %108, %112 : vector<2x32xf32>
    %c6 = arith.constant 6 : index
    %c0_38 = arith.constant 0 : index
    %c0_39 = arith.constant 0 : index
    %114 = vector.load %arg8[%c6, %c0_38, %c0_39] : memref<8x2x128xbf16, #tpu.memory_space<vmem>>, vector<1x2x128xbf16>
    %115 = vector.shape_cast %114 : vector<1x2x128xbf16> to vector<2x128xbf16>
    %116 = arith.truncf %79 : vector<2x32xf32> to vector<2x32xbf16>
    %c0_40 = arith.constant 0 : index
    %c0_41 = arith.constant 0 : index
    %117 = vector.load %arg5[%c0_40, %c0_41] : memref<32x128xbf16, #tpu.memory_space<vmem>>, vector<32x128xbf16>
    %cst_42 = arith.constant dense<0.000000e+00> : vector<2x128xf32>
    %118 = tpu.matmul %116, %117, %cst_42 {dimension_numbers = #tpu.dot_dimension_numbers<[1], [0], [0], [1], [0, 0, 1, 1], [], []>} : vector<2x32xbf16>, vector<32x128xbf16>, vector<2x128xf32> -> vector<2x128xf32>
    %119 = arith.extf %115 : vector<2x128xbf16> to vector<2x128xf32>
    %120 = arith.addf %119, %118 : vector<2x128xf32>
    %121 = vector.extract_strided_slice %120 {offsets = [0, 0], sizes = [2, 32], strides = [1, 1]} : vector<2x128xf32> to vector<2x32xf32>
    %122 = arith.negf %121 : vector<2x32xf32>
    %123 = math.exp %122 : vector<2x32xf32>
    %cst_43 = arith.constant 1.000000e+00 : f32
    %124 = vector.broadcast %cst_43 : f32 to vector<2x32xf32>
    %125 = arith.addf %124, %123 : vector<2x32xf32>
    %126 = arith.divf %124, %125 : vector<2x32xf32>
    %127 = vector.extract_strided_slice %120 {offsets = [0, 32], sizes = [2, 32], strides = [1, 1]} : vector<2x128xf32> to vector<2x32xf32>
    %128 = arith.negf %127 : vector<2x32xf32>
    %129 = math.exp %128 : vector<2x32xf32>
    %cst_44 = arith.constant 1.000000e+00 : f32
    %130 = vector.broadcast %cst_44 : f32 to vector<2x32xf32>
    %131 = arith.addf %130, %129 : vector<2x32xf32>
    %132 = arith.divf %130, %131 : vector<2x32xf32>
    %133 = vector.extract_strided_slice %120 {offsets = [0, 64], sizes = [2, 32], strides = [1, 1]} : vector<2x128xf32> to vector<2x32xf32>
    %134 = math.tanh %133 : vector<2x32xf32>
    %135 = vector.extract_strided_slice %120 {offsets = [0, 96], sizes = [2, 32], strides = [1, 1]} : vector<2x128xf32> to vector<2x32xf32>
    %136 = arith.negf %135 : vector<2x32xf32>
    %137 = math.exp %136 : vector<2x32xf32>
    %cst_45 = arith.constant 1.000000e+00 : f32
    %138 = vector.broadcast %cst_45 : f32 to vector<2x32xf32>
    %139 = arith.addf %138, %137 : vector<2x32xf32>
    %140 = arith.divf %138, %139 : vector<2x32xf32>
    %141 = arith.mulf %132, %77 : vector<2x32xf32>
    %142 = arith.mulf %126, %134 : vector<2x32xf32>
    %143 = arith.addf %141, %142 : vector<2x32xf32>
    %144 = math.tanh %143 : vector<2x32xf32>
    %145 = arith.mulf %140, %144 : vector<2x32xf32>
    %146 = arith.addf %80, %113 : vector<2x32xf32>
    %147 = arith.addf %81, %145 : vector<2x32xf32>
    %c2 = arith.constant 2 : index
    %c0_46 = arith.constant 0 : index
    %c0_47 = arith.constant 0 : index
    %148 = vector.load %arg7[%c2, %c0_46, %c0_47] : memref<8x2x128xbf16, #tpu.memory_space<vmem>>, vector<1x2x128xbf16>
    %149 = vector.shape_cast %148 : vector<1x2x128xbf16> to vector<2x128xbf16>
    %150 = arith.truncf %113 : vector<2x32xf32> to vector<2x32xbf16>
    %c0_48 = arith.constant 0 : index
    %c0_49 = arith.constant 0 : index
    %151 = vector.load %arg4[%c0_48, %c0_49] : memref<32x128xbf16, #tpu.memory_space<vmem>>, vector<32x128xbf16>
    %cst_50 = arith.constant dense<0.000000e+00> : vector<2x128xf32>
    %152 = tpu.matmul %150, %151, %cst_50 {dimension_numbers = #tpu.dot_dimension_numbers<[1], [0], [0], [1], [0, 0, 1, 1], [], []>} : vector<2x32xbf16>, vector<32x128xbf16>, vector<2x128xf32> -> vector<2x128xf32>
    %153 = arith.extf %149 : vector<2x128xbf16> to vector<2x128xf32>
    %154 = arith.addf %153, %152 : vector<2x128xf32>
    %155 = vector.extract_strided_slice %154 {offsets = [0, 0], sizes = [2, 32], strides = [1, 1]} : vector<2x128xf32> to vector<2x32xf32>
    %156 = arith.negf %155 : vector<2x32xf32>
    %157 = math.exp %156 : vector<2x32xf32>
    %cst_51 = arith.constant 1.000000e+00 : f32
    %158 = vector.broadcast %cst_51 : f32 to vector<2x32xf32>
    %159 = arith.addf %158, %157 : vector<2x32xf32>
    %160 = arith.divf %158, %159 : vector<2x32xf32>
    %161 = vector.extract_strided_slice %154 {offsets = [0, 32], sizes = [2, 32], strides = [1, 1]} : vector<2x128xf32> to vector<2x32xf32>
    %162 = arith.negf %161 : vector<2x32xf32>
    %163 = math.exp %162 : vector<2x32xf32>
    %cst_52 = arith.constant 1.000000e+00 : f32
    %164 = vector.broadcast %cst_52 : f32 to vector<2x32xf32>
    %165 = arith.addf %164, %163 : vector<2x32xf32>
    %166 = arith.divf %164, %165 : vector<2x32xf32>
    %167 = vector.extract_strided_slice %154 {offsets = [0, 64], sizes = [2, 32], strides = [1, 1]} : vector<2x128xf32> to vector<2x32xf32>
    %168 = math.tanh %167 : vector<2x32xf32>
    %169 = vector.extract_strided_slice %154 {offsets = [0, 96], sizes = [2, 32], strides = [1, 1]} : vector<2x128xf32> to vector<2x32xf32>
    %170 = arith.negf %169 : vector<2x32xf32>
    %171 = math.exp %170 : vector<2x32xf32>
    %cst_53 = arith.constant 1.000000e+00 : f32
    %172 = vector.broadcast %cst_53 : f32 to vector<2x32xf32>
    %173 = arith.addf %172, %171 : vector<2x32xf32>
    %174 = arith.divf %172, %173 : vector<2x32xf32>
    %175 = arith.mulf %166, %111 : vector<2x32xf32>
    %176 = arith.mulf %160, %168 : vector<2x32xf32>
    %177 = arith.addf %175, %176 : vector<2x32xf32>
    %178 = math.tanh %177 : vector<2x32xf32>
    %179 = arith.mulf %174, %178 : vector<2x32xf32>
    %c5 = arith.constant 5 : index
    %c0_54 = arith.constant 0 : index
    %c0_55 = arith.constant 0 : index
    %180 = vector.load %arg8[%c5, %c0_54, %c0_55] : memref<8x2x128xbf16, #tpu.memory_space<vmem>>, vector<1x2x128xbf16>
    %181 = vector.shape_cast %180 : vector<1x2x128xbf16> to vector<2x128xbf16>
    %182 = arith.truncf %145 : vector<2x32xf32> to vector<2x32xbf16>
    %c0_56 = arith.constant 0 : index
    %c0_57 = arith.constant 0 : index
    %183 = vector.load %arg5[%c0_56, %c0_57] : memref<32x128xbf16, #tpu.memory_space<vmem>>, vector<32x128xbf16>
    %cst_58 = arith.constant dense<0.000000e+00> : vector<2x128xf32>
    %184 = tpu.matmul %182, %183, %cst_58 {dimension_numbers = #tpu.dot_dimension_numbers<[1], [0], [0], [1], [0, 0, 1, 1], [], []>} : vector<2x32xbf16>, vector<32x128xbf16>, vector<2x128xf32> -> vector<2x128xf32>
    %185 = arith.extf %181 : vector<2x128xbf16> to vector<2x128xf32>
    %186 = arith.addf %185, %184 : vector<2x128xf32>
    %187 = vector.extract_strided_slice %186 {offsets = [0, 0], sizes = [2, 32], strides = [1, 1]} : vector<2x128xf32> to vector<2x32xf32>
    %188 = arith.negf %187 : vector<2x32xf32>
    %189 = math.exp %188 : vector<2x32xf32>
    %cst_59 = arith.constant 1.000000e+00 : f32
    %190 = vector.broadcast %cst_59 : f32 to vector<2x32xf32>
    %191 = arith.addf %190, %189 : vector<2x32xf32>
    %192 = arith.divf %190, %191 : vector<2x32xf32>
    %193 = vector.extract_strided_slice %186 {offsets = [0, 32], sizes = [2, 32], strides = [1, 1]} : vector<2x128xf32> to vector<2x32xf32>
    %194 = arith.negf %193 : vector<2x32xf32>
    %195 = math.exp %194 : vector<2x32xf32>
    %cst_60 = arith.constant 1.000000e+00 : f32
    %196 = vector.broadcast %cst_60 : f32 to vector<2x32xf32>
    %197 = arith.addf %196, %195 : vector<2x32xf32>
    %198 = arith.divf %196, %197 : vector<2x32xf32>
    %199 = vector.extract_strided_slice %186 {offsets = [0, 64], sizes = [2, 32], strides = [1, 1]} : vector<2x128xf32> to vector<2x32xf32>
    %200 = math.tanh %199 : vector<2x32xf32>
    %201 = vector.extract_strided_slice %186 {offsets = [0, 96], sizes = [2, 32], strides = [1, 1]} : vector<2x128xf32> to vector<2x32xf32>
    %202 = arith.negf %201 : vector<2x32xf32>
    %203 = math.exp %202 : vector<2x32xf32>
    %cst_61 = arith.constant 1.000000e+00 : f32
    %204 = vector.broadcast %cst_61 : f32 to vector<2x32xf32>
    %205 = arith.addf %204, %203 : vector<2x32xf32>
    %206 = arith.divf %204, %205 : vector<2x32xf32>
    %207 = arith.mulf %198, %143 : vector<2x32xf32>
    %208 = arith.mulf %192, %200 : vector<2x32xf32>
    %209 = arith.addf %207, %208 : vector<2x32xf32>
    %210 = math.tanh %209 : vector<2x32xf32>
    %211 = arith.mulf %206, %210 : vector<2x32xf32>
    %212 = arith.addf %146, %179 : vector<2x32xf32>
    %213 = arith.addf %147, %211 : vector<2x32xf32>
    %c3 = arith.constant 3 : index
    %c0_62 = arith.constant 0 : index
    %c0_63 = arith.constant 0 : index
    %214 = vector.load %arg7[%c3, %c0_62, %c0_63] : memref<8x2x128xbf16, #tpu.memory_space<vmem>>, vector<1x2x128xbf16>
    %215 = vector.shape_cast %214 : vector<1x2x128xbf16> to vector<2x128xbf16>
    %216 = arith.truncf %179 : vector<2x32xf32> to vector<2x32xbf16>
    %c0_64 = arith.constant 0 : index
    %c0_65 = arith.constant 0 : index
    %217 = vector.load %arg4[%c0_64, %c0_65] : memref<32x128xbf16, #tpu.memory_space<vmem>>, vector<32x128xbf16>
    %cst_66 = arith.constant dense<0.000000e+00> : vector<2x128xf32>
    %218 = tpu.matmul %216, %217, %cst_66 {dimension_numbers = #tpu.dot_dimension_numbers<[1], [0], [0], [1], [0, 0, 1, 1], [], []>} : vector<2x32xbf16>, vector<32x128xbf16>, vector<2x128xf32> -> vector<2x128xf32>
    %219 = arith.extf %215 : vector<2x128xbf16> to vector<2x128xf32>
    %220 = arith.addf %219, %218 : vector<2x128xf32>
    %221 = vector.extract_strided_slice %220 {offsets = [0, 0], sizes = [2, 32], strides = [1, 1]} : vector<2x128xf32> to vector<2x32xf32>
    %222 = arith.negf %221 : vector<2x32xf32>
    %223 = math.exp %222 : vector<2x32xf32>
    %cst_67 = arith.constant 1.000000e+00 : f32
    %224 = vector.broadcast %cst_67 : f32 to vector<2x32xf32>
    %225 = arith.addf %224, %223 : vector<2x32xf32>
    %226 = arith.divf %224, %225 : vector<2x32xf32>
    %227 = vector.extract_strided_slice %220 {offsets = [0, 32], sizes = [2, 32], strides = [1, 1]} : vector<2x128xf32> to vector<2x32xf32>
    %228 = arith.negf %227 : vector<2x32xf32>
    %229 = math.exp %228 : vector<2x32xf32>
    %cst_68 = arith.constant 1.000000e+00 : f32
    %230 = vector.broadcast %cst_68 : f32 to vector<2x32xf32>
    %231 = arith.addf %230, %229 : vector<2x32xf32>
    %232 = arith.divf %230, %231 : vector<2x32xf32>
    %233 = vector.extract_strided_slice %220 {offsets = [0, 64], sizes = [2, 32], strides = [1, 1]} : vector<2x128xf32> to vector<2x32xf32>
    %234 = math.tanh %233 : vector<2x32xf32>
    %235 = vector.extract_strided_slice %220 {offsets = [0, 96], sizes = [2, 32], strides = [1, 1]} : vector<2x128xf32> to vector<2x32xf32>
    %236 = arith.negf %235 : vector<2x32xf32>
    %237 = math.exp %236 : vector<2x32xf32>
    %cst_69 = arith.constant 1.000000e+00 : f32
    %238 = vector.broadcast %cst_69 : f32 to vector<2x32xf32>
    %239 = arith.addf %238, %237 : vector<2x32xf32>
    %240 = arith.divf %238, %239 : vector<2x32xf32>
    %241 = arith.mulf %232, %177 : vector<2x32xf32>
    %242 = arith.mulf %226, %234 : vector<2x32xf32>
    %243 = arith.addf %241, %242 : vector<2x32xf32>
    %244 = math.tanh %243 : vector<2x32xf32>
    %245 = arith.mulf %240, %244 : vector<2x32xf32>
    %c4 = arith.constant 4 : index
    %c0_70 = arith.constant 0 : index
    %c0_71 = arith.constant 0 : index
    %246 = vector.load %arg8[%c4, %c0_70, %c0_71] : memref<8x2x128xbf16, #tpu.memory_space<vmem>>, vector<1x2x128xbf16>
    %247 = vector.shape_cast %246 : vector<1x2x128xbf16> to vector<2x128xbf16>
    %248 = arith.truncf %211 : vector<2x32xf32> to vector<2x32xbf16>
    %c0_72 = arith.constant 0 : index
    %c0_73 = arith.constant 0 : index
    %249 = vector.load %arg5[%c0_72, %c0_73] : memref<32x128xbf16, #tpu.memory_space<vmem>>, vector<32x128xbf16>
    %cst_74 = arith.constant dense<0.000000e+00> : vector<2x128xf32>
    %250 = tpu.matmul %248, %249, %cst_74 {dimension_numbers = #tpu.dot_dimension_numbers<[1], [0], [0], [1], [0, 0, 1, 1], [], []>} : vector<2x32xbf16>, vector<32x128xbf16>, vector<2x128xf32> -> vector<2x128xf32>
    %251 = arith.extf %247 : vector<2x128xbf16> to vector<2x128xf32>
    %252 = arith.addf %251, %250 : vector<2x128xf32>
    %253 = vector.extract_strided_slice %252 {offsets = [0, 0], sizes = [2, 32], strides = [1, 1]} : vector<2x128xf32> to vector<2x32xf32>
    %254 = arith.negf %253 : vector<2x32xf32>
    %255 = math.exp %254 : vector<2x32xf32>
    %cst_75 = arith.constant 1.000000e+00 : f32
    %256 = vector.broadcast %cst_75 : f32 to vector<2x32xf32>
    %257 = arith.addf %256, %255 : vector<2x32xf32>
    %258 = arith.divf %256, %257 : vector<2x32xf32>
    %259 = vector.extract_strided_slice %252 {offsets = [0, 32], sizes = [2, 32], strides = [1, 1]} : vector<2x128xf32> to vector<2x32xf32>
    %260 = arith.negf %259 : vector<2x32xf32>
    %261 = math.exp %260 : vector<2x32xf32>
    %cst_76 = arith.constant 1.000000e+00 : f32
    %262 = vector.broadcast %cst_76 : f32 to vector<2x32xf32>
    %263 = arith.addf %262, %261 : vector<2x32xf32>
    %264 = arith.divf %262, %263 : vector<2x32xf32>
    %265 = vector.extract_strided_slice %252 {offsets = [0, 64], sizes = [2, 32], strides = [1, 1]} : vector<2x128xf32> to vector<2x32xf32>
    %266 = math.tanh %265 : vector<2x32xf32>
    %267 = vector.extract_strided_slice %252 {offsets = [0, 96], sizes = [2, 32], strides = [1, 1]} : vector<2x128xf32> to vector<2x32xf32>
    %268 = arith.negf %267 : vector<2x32xf32>
    %269 = math.exp %268 : vector<2x32xf32>
    %cst_77 = arith.constant 1.000000e+00 : f32
    %270 = vector.broadcast %cst_77 : f32 to vector<2x32xf32>
    %271 = arith.addf %270, %269 : vector<2x32xf32>
    %272 = arith.divf %270, %271 : vector<2x32xf32>
    %273 = arith.mulf %264, %209 : vector<2x32xf32>
    %274 = arith.mulf %258, %266 : vector<2x32xf32>
    %275 = arith.addf %273, %274 : vector<2x32xf32>
    %276 = math.tanh %275 : vector<2x32xf32>
    %277 = arith.mulf %272, %276 : vector<2x32xf32>
    %278 = arith.addf %212, %245 : vector<2x32xf32>
    %279 = arith.addf %213, %277 : vector<2x32xf32>
    %c4_78 = arith.constant 4 : index
    %c0_79 = arith.constant 0 : index
    %c0_80 = arith.constant 0 : index
    %280 = vector.load %arg7[%c4_78, %c0_79, %c0_80] : memref<8x2x128xbf16, #tpu.memory_space<vmem>>, vector<1x2x128xbf16>
    %281 = vector.shape_cast %280 : vector<1x2x128xbf16> to vector<2x128xbf16>
    %282 = arith.truncf %245 : vector<2x32xf32> to vector<2x32xbf16>
    %c0_81 = arith.constant 0 : index
    %c0_82 = arith.constant 0 : index
    %283 = vector.load %arg4[%c0_81, %c0_82] : memref<32x128xbf16, #tpu.memory_space<vmem>>, vector<32x128xbf16>
    %cst_83 = arith.constant dense<0.000000e+00> : vector<2x128xf32>
    %284 = tpu.matmul %282, %283, %cst_83 {dimension_numbers = #tpu.dot_dimension_numbers<[1], [0], [0], [1], [0, 0, 1, 1], [], []>} : vector<2x32xbf16>, vector<32x128xbf16>, vector<2x128xf32> -> vector<2x128xf32>
    %285 = arith.extf %281 : vector<2x128xbf16> to vector<2x128xf32>
    %286 = arith.addf %285, %284 : vector<2x128xf32>
    %287 = vector.extract_strided_slice %286 {offsets = [0, 0], sizes = [2, 32], strides = [1, 1]} : vector<2x128xf32> to vector<2x32xf32>
    %288 = arith.negf %287 : vector<2x32xf32>
    %289 = math.exp %288 : vector<2x32xf32>
    %cst_84 = arith.constant 1.000000e+00 : f32
    %290 = vector.broadcast %cst_84 : f32 to vector<2x32xf32>
    %291 = arith.addf %290, %289 : vector<2x32xf32>
    %292 = arith.divf %290, %291 : vector<2x32xf32>
    %293 = vector.extract_strided_slice %286 {offsets = [0, 32], sizes = [2, 32], strides = [1, 1]} : vector<2x128xf32> to vector<2x32xf32>
    %294 = arith.negf %293 : vector<2x32xf32>
    %295 = math.exp %294 : vector<2x32xf32>
    %cst_85 = arith.constant 1.000000e+00 : f32
    %296 = vector.broadcast %cst_85 : f32 to vector<2x32xf32>
    %297 = arith.addf %296, %295 : vector<2x32xf32>
    %298 = arith.divf %296, %297 : vector<2x32xf32>
    %299 = vector.extract_strided_slice %286 {offsets = [0, 64], sizes = [2, 32], strides = [1, 1]} : vector<2x128xf32> to vector<2x32xf32>
    %300 = math.tanh %299 : vector<2x32xf32>
    %301 = vector.extract_strided_slice %286 {offsets = [0, 96], sizes = [2, 32], strides = [1, 1]} : vector<2x128xf32> to vector<2x32xf32>
    %302 = arith.negf %301 : vector<2x32xf32>
    %303 = math.exp %302 : vector<2x32xf32>
    %cst_86 = arith.constant 1.000000e+00 : f32
    %304 = vector.broadcast %cst_86 : f32 to vector<2x32xf32>
    %305 = arith.addf %304, %303 : vector<2x32xf32>
    %306 = arith.divf %304, %305 : vector<2x32xf32>
    %307 = arith.mulf %298, %243 : vector<2x32xf32>
    %308 = arith.mulf %292, %300 : vector<2x32xf32>
    %309 = arith.addf %307, %308 : vector<2x32xf32>
    %310 = math.tanh %309 : vector<2x32xf32>
    %311 = arith.mulf %306, %310 : vector<2x32xf32>
    %c3_87 = arith.constant 3 : index
    %c0_88 = arith.constant 0 : index
    %c0_89 = arith.constant 0 : index
    %312 = vector.load %arg8[%c3_87, %c0_88, %c0_89] : memref<8x2x128xbf16, #tpu.memory_space<vmem>>, vector<1x2x128xbf16>
    %313 = vector.shape_cast %312 : vector<1x2x128xbf16> to vector<2x128xbf16>
    %314 = arith.truncf %277 : vector<2x32xf32> to vector<2x32xbf16>
    %c0_90 = arith.constant 0 : index
    %c0_91 = arith.constant 0 : index
    %315 = vector.load %arg5[%c0_90, %c0_91] : memref<32x128xbf16, #tpu.memory_space<vmem>>, vector<32x128xbf16>
    %cst_92 = arith.constant dense<0.000000e+00> : vector<2x128xf32>
    %316 = tpu.matmul %314, %315, %cst_92 {dimension_numbers = #tpu.dot_dimension_numbers<[1], [0], [0], [1], [0, 0, 1, 1], [], []>} : vector<2x32xbf16>, vector<32x128xbf16>, vector<2x128xf32> -> vector<2x128xf32>
    %317 = arith.extf %313 : vector<2x128xbf16> to vector<2x128xf32>
    %318 = arith.addf %317, %316 : vector<2x128xf32>
    %319 = vector.extract_strided_slice %318 {offsets = [0, 0], sizes = [2, 32], strides = [1, 1]} : vector<2x128xf32> to vector<2x32xf32>
    %320 = arith.negf %319 : vector<2x32xf32>
    %321 = math.exp %320 : vector<2x32xf32>
    %cst_93 = arith.constant 1.000000e+00 : f32
    %322 = vector.broadcast %cst_93 : f32 to vector<2x32xf32>
    %323 = arith.addf %322, %321 : vector<2x32xf32>
    %324 = arith.divf %322, %323 : vector<2x32xf32>
    %325 = vector.extract_strided_slice %318 {offsets = [0, 32], sizes = [2, 32], strides = [1, 1]} : vector<2x128xf32> to vector<2x32xf32>
    %326 = arith.negf %325 : vector<2x32xf32>
    %327 = math.exp %326 : vector<2x32xf32>
    %cst_94 = arith.constant 1.000000e+00 : f32
    %328 = vector.broadcast %cst_94 : f32 to vector<2x32xf32>
    %329 = arith.addf %328, %327 : vector<2x32xf32>
    %330 = arith.divf %328, %329 : vector<2x32xf32>
    %331 = vector.extract_strided_slice %318 {offsets = [0, 64], sizes = [2, 32], strides = [1, 1]} : vector<2x128xf32> to vector<2x32xf32>
    %332 = math.tanh %331 : vector<2x32xf32>
    %333 = vector.extract_strided_slice %318 {offsets = [0, 96], sizes = [2, 32], strides = [1, 1]} : vector<2x128xf32> to vector<2x32xf32>
    %334 = arith.negf %333 : vector<2x32xf32>
    %335 = math.exp %334 : vector<2x32xf32>
    %cst_95 = arith.constant 1.000000e+00 : f32
    %336 = vector.broadcast %cst_95 : f32 to vector<2x32xf32>
    %337 = arith.addf %336, %335 : vector<2x32xf32>
    %338 = arith.divf %336, %337 : vector<2x32xf32>
    %339 = arith.mulf %330, %275 : vector<2x32xf32>
    %340 = arith.mulf %324, %332 : vector<2x32xf32>
    %341 = arith.addf %339, %340 : vector<2x32xf32>
    %342 = math.tanh %341 : vector<2x32xf32>
    %343 = arith.mulf %338, %342 : vector<2x32xf32>
    %344 = arith.addf %278, %311 : vector<2x32xf32>
    %345 = arith.addf %279, %343 : vector<2x32xf32>
    %c5_96 = arith.constant 5 : index
    %c0_97 = arith.constant 0 : index
    %c0_98 = arith.constant 0 : index
    %346 = vector.load %arg7[%c5_96, %c0_97, %c0_98] : memref<8x2x128xbf16, #tpu.memory_space<vmem>>, vector<1x2x128xbf16>
    %347 = vector.shape_cast %346 : vector<1x2x128xbf16> to vector<2x128xbf16>
    %348 = arith.truncf %311 : vector<2x32xf32> to vector<2x32xbf16>
    %c0_99 = arith.constant 0 : index
    %c0_100 = arith.constant 0 : index
    %349 = vector.load %arg4[%c0_99, %c0_100] : memref<32x128xbf16, #tpu.memory_space<vmem>>, vector<32x128xbf16>
    %cst_101 = arith.constant dense<0.000000e+00> : vector<2x128xf32>
    %350 = tpu.matmul %348, %349, %cst_101 {dimension_numbers = #tpu.dot_dimension_numbers<[1], [0], [0], [1], [0, 0, 1, 1], [], []>} : vector<2x32xbf16>, vector<32x128xbf16>, vector<2x128xf32> -> vector<2x128xf32>
    %351 = arith.extf %347 : vector<2x128xbf16> to vector<2x128xf32>
    %352 = arith.addf %351, %350 : vector<2x128xf32>
    %353 = vector.extract_strided_slice %352 {offsets = [0, 0], sizes = [2, 32], strides = [1, 1]} : vector<2x128xf32> to vector<2x32xf32>
    %354 = arith.negf %353 : vector<2x32xf32>
    %355 = math.exp %354 : vector<2x32xf32>
    %cst_102 = arith.constant 1.000000e+00 : f32
    %356 = vector.broadcast %cst_102 : f32 to vector<2x32xf32>
    %357 = arith.addf %356, %355 : vector<2x32xf32>
    %358 = arith.divf %356, %357 : vector<2x32xf32>
    %359 = vector.extract_strided_slice %352 {offsets = [0, 32], sizes = [2, 32], strides = [1, 1]} : vector<2x128xf32> to vector<2x32xf32>
    %360 = arith.negf %359 : vector<2x32xf32>
    %361 = math.exp %360 : vector<2x32xf32>
    %cst_103 = arith.constant 1.000000e+00 : f32
    %362 = vector.broadcast %cst_103 : f32 to vector<2x32xf32>
    %363 = arith.addf %362, %361 : vector<2x32xf32>
    %364 = arith.divf %362, %363 : vector<2x32xf32>
    %365 = vector.extract_strided_slice %352 {offsets = [0, 64], sizes = [2, 32], strides = [1, 1]} : vector<2x128xf32> to vector<2x32xf32>
    %366 = math.tanh %365 : vector<2x32xf32>
    %367 = vector.extract_strided_slice %352 {offsets = [0, 96], sizes = [2, 32], strides = [1, 1]} : vector<2x128xf32> to vector<2x32xf32>
    %368 = arith.negf %367 : vector<2x32xf32>
    %369 = math.exp %368 : vector<2x32xf32>
    %cst_104 = arith.constant 1.000000e+00 : f32
    %370 = vector.broadcast %cst_104 : f32 to vector<2x32xf32>
    %371 = arith.addf %370, %369 : vector<2x32xf32>
    %372 = arith.divf %370, %371 : vector<2x32xf32>
    %373 = arith.mulf %364, %309 : vector<2x32xf32>
    %374 = arith.mulf %358, %366 : vector<2x32xf32>
    %375 = arith.addf %373, %374 : vector<2x32xf32>
    %376 = math.tanh %375 : vector<2x32xf32>
    %377 = arith.mulf %372, %376 : vector<2x32xf32>
    %c2_105 = arith.constant 2 : index
    %c0_106 = arith.constant 0 : index
    %c0_107 = arith.constant 0 : index
    %378 = vector.load %arg8[%c2_105, %c0_106, %c0_107] : memref<8x2x128xbf16, #tpu.memory_space<vmem>>, vector<1x2x128xbf16>
    %379 = vector.shape_cast %378 : vector<1x2x128xbf16> to vector<2x128xbf16>
    %380 = arith.truncf %343 : vector<2x32xf32> to vector<2x32xbf16>
    %c0_108 = arith.constant 0 : index
    %c0_109 = arith.constant 0 : index
    %381 = vector.load %arg5[%c0_108, %c0_109] : memref<32x128xbf16, #tpu.memory_space<vmem>>, vector<32x128xbf16>
    %cst_110 = arith.constant dense<0.000000e+00> : vector<2x128xf32>
    %382 = tpu.matmul %380, %381, %cst_110 {dimension_numbers = #tpu.dot_dimension_numbers<[1], [0], [0], [1], [0, 0, 1, 1], [], []>} : vector<2x32xbf16>, vector<32x128xbf16>, vector<2x128xf32> -> vector<2x128xf32>
    %383 = arith.extf %379 : vector<2x128xbf16> to vector<2x128xf32>
    %384 = arith.addf %383, %382 : vector<2x128xf32>
    %385 = vector.extract_strided_slice %384 {offsets = [0, 0], sizes = [2, 32], strides = [1, 1]} : vector<2x128xf32> to vector<2x32xf32>
    %386 = arith.negf %385 : vector<2x32xf32>
    %387 = math.exp %386 : vector<2x32xf32>
    %cst_111 = arith.constant 1.000000e+00 : f32
    %388 = vector.broadcast %cst_111 : f32 to vector<2x32xf32>
    %389 = arith.addf %388, %387 : vector<2x32xf32>
    %390 = arith.divf %388, %389 : vector<2x32xf32>
    %391 = vector.extract_strided_slice %384 {offsets = [0, 32], sizes = [2, 32], strides = [1, 1]} : vector<2x128xf32> to vector<2x32xf32>
    %392 = arith.negf %391 : vector<2x32xf32>
    %393 = math.exp %392 : vector<2x32xf32>
    %cst_112 = arith.constant 1.000000e+00 : f32
    %394 = vector.broadcast %cst_112 : f32 to vector<2x32xf32>
    %395 = arith.addf %394, %393 : vector<2x32xf32>
    %396 = arith.divf %394, %395 : vector<2x32xf32>
    %397 = vector.extract_strided_slice %384 {offsets = [0, 64], sizes = [2, 32], strides = [1, 1]} : vector<2x128xf32> to vector<2x32xf32>
    %398 = math.tanh %397 : vector<2x32xf32>
    %399 = vector.extract_strided_slice %384 {offsets = [0, 96], sizes = [2, 32], strides = [1, 1]} : vector<2x128xf32> to vector<2x32xf32>
    %400 = arith.negf %399 : vector<2x32xf32>
    %401 = math.exp %400 : vector<2x32xf32>
    %cst_113 = arith.constant 1.000000e+00 : f32
    %402 = vector.broadcast %cst_113 : f32 to vector<2x32xf32>
    %403 = arith.addf %402, %401 : vector<2x32xf32>
    %404 = arith.divf %402, %403 : vector<2x32xf32>
    %405 = arith.mulf %396, %341 : vector<2x32xf32>
    %406 = arith.mulf %390, %398 : vector<2x32xf32>
    %407 = arith.addf %405, %406 : vector<2x32xf32>
    %408 = math.tanh %407 : vector<2x32xf32>
    %409 = arith.mulf %404, %408 : vector<2x32xf32>
    %410 = arith.addf %344, %377 : vector<2x32xf32>
    %411 = arith.addf %345, %409 : vector<2x32xf32>
    %c6_114 = arith.constant 6 : index
    %c0_115 = arith.constant 0 : index
    %c0_116 = arith.constant 0 : index
    %412 = vector.load %arg7[%c6_114, %c0_115, %c0_116] : memref<8x2x128xbf16, #tpu.memory_space<vmem>>, vector<1x2x128xbf16>
    %413 = vector.shape_cast %412 : vector<1x2x128xbf16> to vector<2x128xbf16>
    %414 = arith.truncf %377 : vector<2x32xf32> to vector<2x32xbf16>
    %c0_117 = arith.constant 0 : index
    %c0_118 = arith.constant 0 : index
    %415 = vector.load %arg4[%c0_117, %c0_118] : memref<32x128xbf16, #tpu.memory_space<vmem>>, vector<32x128xbf16>
    %cst_119 = arith.constant dense<0.000000e+00> : vector<2x128xf32>
    %416 = tpu.matmul %414, %415, %cst_119 {dimension_numbers = #tpu.dot_dimension_numbers<[1], [0], [0], [1], [0, 0, 1, 1], [], []>} : vector<2x32xbf16>, vector<32x128xbf16>, vector<2x128xf32> -> vector<2x128xf32>
    %417 = arith.extf %413 : vector<2x128xbf16> to vector<2x128xf32>
    %418 = arith.addf %417, %416 : vector<2x128xf32>
    %419 = vector.extract_strided_slice %418 {offsets = [0, 0], sizes = [2, 32], strides = [1, 1]} : vector<2x128xf32> to vector<2x32xf32>
    %420 = arith.negf %419 : vector<2x32xf32>
    %421 = math.exp %420 : vector<2x32xf32>
    %cst_120 = arith.constant 1.000000e+00 : f32
    %422 = vector.broadcast %cst_120 : f32 to vector<2x32xf32>
    %423 = arith.addf %422, %421 : vector<2x32xf32>
    %424 = arith.divf %422, %423 : vector<2x32xf32>
    %425 = vector.extract_strided_slice %418 {offsets = [0, 32], sizes = [2, 32], strides = [1, 1]} : vector<2x128xf32> to vector<2x32xf32>
    %426 = arith.negf %425 : vector<2x32xf32>
    %427 = math.exp %426 : vector<2x32xf32>
    %cst_121 = arith.constant 1.000000e+00 : f32
    %428 = vector.broadcast %cst_121 : f32 to vector<2x32xf32>
    %429 = arith.addf %428, %427 : vector<2x32xf32>
    %430 = arith.divf %428, %429 : vector<2x32xf32>
    %431 = vector.extract_strided_slice %418 {offsets = [0, 64], sizes = [2, 32], strides = [1, 1]} : vector<2x128xf32> to vector<2x32xf32>
    %432 = math.tanh %431 : vector<2x32xf32>
    %433 = vector.extract_strided_slice %418 {offsets = [0, 96], sizes = [2, 32], strides = [1, 1]} : vector<2x128xf32> to vector<2x32xf32>
    %434 = arith.negf %433 : vector<2x32xf32>
    %435 = math.exp %434 : vector<2x32xf32>
    %cst_122 = arith.constant 1.000000e+00 : f32
    %436 = vector.broadcast %cst_122 : f32 to vector<2x32xf32>
    %437 = arith.addf %436, %435 : vector<2x32xf32>
    %438 = arith.divf %436, %437 : vector<2x32xf32>
    %439 = arith.mulf %430, %375 : vector<2x32xf32>
    %440 = arith.mulf %424, %432 : vector<2x32xf32>
    %441 = arith.addf %439, %440 : vector<2x32xf32>
    %442 = math.tanh %441 : vector<2x32xf32>
    %443 = arith.mulf %438, %442 : vector<2x32xf32>
    %c1_123 = arith.constant 1 : index
    %c0_124 = arith.constant 0 : index
    %c0_125 = arith.constant 0 : index
    %444 = vector.load %arg8[%c1_123, %c0_124, %c0_125] : memref<8x2x128xbf16, #tpu.memory_space<vmem>>, vector<1x2x128xbf16>
    %445 = vector.shape_cast %444 : vector<1x2x128xbf16> to vector<2x128xbf16>
    %446 = arith.truncf %409 : vector<2x32xf32> to vector<2x32xbf16>
    %c0_126 = arith.constant 0 : index
    %c0_127 = arith.constant 0 : index
    %447 = vector.load %arg5[%c0_126, %c0_127] : memref<32x128xbf16, #tpu.memory_space<vmem>>, vector<32x128xbf16>
    %cst_128 = arith.constant dense<0.000000e+00> : vector<2x128xf32>
    %448 = tpu.matmul %446, %447, %cst_128 {dimension_numbers = #tpu.dot_dimension_numbers<[1], [0], [0], [1], [0, 0, 1, 1], [], []>} : vector<2x32xbf16>, vector<32x128xbf16>, vector<2x128xf32> -> vector<2x128xf32>
    %449 = arith.extf %445 : vector<2x128xbf16> to vector<2x128xf32>
    %450 = arith.addf %449, %448 : vector<2x128xf32>
    %451 = vector.extract_strided_slice %450 {offsets = [0, 0], sizes = [2, 32], strides = [1, 1]} : vector<2x128xf32> to vector<2x32xf32>
    %452 = arith.negf %451 : vector<2x32xf32>
    %453 = math.exp %452 : vector<2x32xf32>
    %cst_129 = arith.constant 1.000000e+00 : f32
    %454 = vector.broadcast %cst_129 : f32 to vector<2x32xf32>
    %455 = arith.addf %454, %453 : vector<2x32xf32>
    %456 = arith.divf %454, %455 : vector<2x32xf32>
    %457 = vector.extract_strided_slice %450 {offsets = [0, 32], sizes = [2, 32], strides = [1, 1]} : vector<2x128xf32> to vector<2x32xf32>
    %458 = arith.negf %457 : vector<2x32xf32>
    %459 = math.exp %458 : vector<2x32xf32>
    %cst_130 = arith.constant 1.000000e+00 : f32
    %460 = vector.broadcast %cst_130 : f32 to vector<2x32xf32>
    %461 = arith.addf %460, %459 : vector<2x32xf32>
    %462 = arith.divf %460, %461 : vector<2x32xf32>
    %463 = vector.extract_strided_slice %450 {offsets = [0, 64], sizes = [2, 32], strides = [1, 1]} : vector<2x128xf32> to vector<2x32xf32>
    %464 = math.tanh %463 : vector<2x32xf32>
    %465 = vector.extract_strided_slice %450 {offsets = [0, 96], sizes = [2, 32], strides = [1, 1]} : vector<2x128xf32> to vector<2x32xf32>
    %466 = arith.negf %465 : vector<2x32xf32>
    %467 = math.exp %466 : vector<2x32xf32>
    %cst_131 = arith.constant 1.000000e+00 : f32
    %468 = vector.broadcast %cst_131 : f32 to vector<2x32xf32>
    %469 = arith.addf %468, %467 : vector<2x32xf32>
    %470 = arith.divf %468, %469 : vector<2x32xf32>
    %471 = arith.mulf %462, %407 : vector<2x32xf32>
    %472 = arith.mulf %456, %464 : vector<2x32xf32>
    %473 = arith.addf %471, %472 : vector<2x32xf32>
    %474 = math.tanh %473 : vector<2x32xf32>
    %475 = arith.mulf %470, %474 : vector<2x32xf32>
    %476 = arith.addf %410, %443 : vector<2x32xf32>
    %477 = arith.addf %411, %475 : vector<2x32xf32>
    %c7_132 = arith.constant 7 : index
    %c0_133 = arith.constant 0 : index
    %c0_134 = arith.constant 0 : index
    %478 = vector.load %arg7[%c7_132, %c0_133, %c0_134] : memref<8x2x128xbf16, #tpu.memory_space<vmem>>, vector<1x2x128xbf16>
    %479 = vector.shape_cast %478 : vector<1x2x128xbf16> to vector<2x128xbf16>
    %480 = arith.truncf %443 : vector<2x32xf32> to vector<2x32xbf16>
    %c0_135 = arith.constant 0 : index
    %c0_136 = arith.constant 0 : index
    %481 = vector.load %arg4[%c0_135, %c0_136] : memref<32x128xbf16, #tpu.memory_space<vmem>>, vector<32x128xbf16>
    %cst_137 = arith.constant dense<0.000000e+00> : vector<2x128xf32>
    %482 = tpu.matmul %480, %481, %cst_137 {dimension_numbers = #tpu.dot_dimension_numbers<[1], [0], [0], [1], [0, 0, 1, 1], [], []>} : vector<2x32xbf16>, vector<32x128xbf16>, vector<2x128xf32> -> vector<2x128xf32>
    %483 = arith.extf %479 : vector<2x128xbf16> to vector<2x128xf32>
    %484 = arith.addf %483, %482 : vector<2x128xf32>
    %485 = vector.extract_strided_slice %484 {offsets = [0, 0], sizes = [2, 32], strides = [1, 1]} : vector<2x128xf32> to vector<2x32xf32>
    %486 = arith.negf %485 : vector<2x32xf32>
    %487 = math.exp %486 : vector<2x32xf32>
    %cst_138 = arith.constant 1.000000e+00 : f32
    %488 = vector.broadcast %cst_138 : f32 to vector<2x32xf32>
    %489 = arith.addf %488, %487 : vector<2x32xf32>
    %490 = arith.divf %488, %489 : vector<2x32xf32>
    %491 = vector.extract_strided_slice %484 {offsets = [0, 32], sizes = [2, 32], strides = [1, 1]} : vector<2x128xf32> to vector<2x32xf32>
    %492 = arith.negf %491 : vector<2x32xf32>
    %493 = math.exp %492 : vector<2x32xf32>
    %cst_139 = arith.constant 1.000000e+00 : f32
    %494 = vector.broadcast %cst_139 : f32 to vector<2x32xf32>
    %495 = arith.addf %494, %493 : vector<2x32xf32>
    %496 = arith.divf %494, %495 : vector<2x32xf32>
    %497 = vector.extract_strided_slice %484 {offsets = [0, 64], sizes = [2, 32], strides = [1, 1]} : vector<2x128xf32> to vector<2x32xf32>
    %498 = math.tanh %497 : vector<2x32xf32>
    %499 = vector.extract_strided_slice %484 {offsets = [0, 96], sizes = [2, 32], strides = [1, 1]} : vector<2x128xf32> to vector<2x32xf32>
    %500 = arith.negf %499 : vector<2x32xf32>
    %501 = math.exp %500 : vector<2x32xf32>
    %cst_140 = arith.constant 1.000000e+00 : f32
    %502 = vector.broadcast %cst_140 : f32 to vector<2x32xf32>
    %503 = arith.addf %502, %501 : vector<2x32xf32>
    %504 = arith.divf %502, %503 : vector<2x32xf32>
    %505 = arith.mulf %496, %441 : vector<2x32xf32>
    %506 = arith.mulf %490, %498 : vector<2x32xf32>
    %507 = arith.addf %505, %506 : vector<2x32xf32>
    %508 = math.tanh %507 : vector<2x32xf32>
    %509 = arith.mulf %504, %508 : vector<2x32xf32>
    %c0_141 = arith.constant 0 : index
    %c0_142 = arith.constant 0 : index
    %c0_143 = arith.constant 0 : index
    %510 = vector.load %arg8[%c0_141, %c0_142, %c0_143] : memref<8x2x128xbf16, #tpu.memory_space<vmem>>, vector<1x2x128xbf16>
    %511 = vector.shape_cast %510 : vector<1x2x128xbf16> to vector<2x128xbf16>
    %512 = arith.truncf %475 : vector<2x32xf32> to vector<2x32xbf16>
    %c0_144 = arith.constant 0 : index
    %c0_145 = arith.constant 0 : index
    %513 = vector.load %arg5[%c0_144, %c0_145] : memref<32x128xbf16, #tpu.memory_space<vmem>>, vector<32x128xbf16>
    %cst_146 = arith.constant dense<0.000000e+00> : vector<2x128xf32>
    %514 = tpu.matmul %512, %513, %cst_146 {dimension_numbers = #tpu.dot_dimension_numbers<[1], [0], [0], [1], [0, 0, 1, 1], [], []>} : vector<2x32xbf16>, vector<32x128xbf16>, vector<2x128xf32> -> vector<2x128xf32>
    %515 = arith.extf %511 : vector<2x128xbf16> to vector<2x128xf32>
    %516 = arith.addf %515, %514 : vector<2x128xf32>
    %517 = vector.extract_strided_slice %516 {offsets = [0, 0], sizes = [2, 32], strides = [1, 1]} : vector<2x128xf32> to vector<2x32xf32>
    %518 = arith.negf %517 : vector<2x32xf32>
    %519 = math.exp %518 : vector<2x32xf32>
    %cst_147 = arith.constant 1.000000e+00 : f32
    %520 = vector.broadcast %cst_147 : f32 to vector<2x32xf32>
    %521 = arith.addf %520, %519 : vector<2x32xf32>
    %522 = arith.divf %520, %521 : vector<2x32xf32>
    %523 = vector.extract_strided_slice %516 {offsets = [0, 32], sizes = [2, 32], strides = [1, 1]} : vector<2x128xf32> to vector<2x32xf32>
    %524 = arith.negf %523 : vector<2x32xf32>
    %525 = math.exp %524 : vector<2x32xf32>
    %cst_148 = arith.constant 1.000000e+00 : f32
    %526 = vector.broadcast %cst_148 : f32 to vector<2x32xf32>
    %527 = arith.addf %526, %525 : vector<2x32xf32>
    %528 = arith.divf %526, %527 : vector<2x32xf32>
    %529 = vector.extract_strided_slice %516 {offsets = [0, 64], sizes = [2, 32], strides = [1, 1]} : vector<2x128xf32> to vector<2x32xf32>
    %530 = math.tanh %529 : vector<2x32xf32>
    %531 = vector.extract_strided_slice %516 {offsets = [0, 96], sizes = [2, 32], strides = [1, 1]} : vector<2x128xf32> to vector<2x32xf32>
    %532 = arith.negf %531 : vector<2x32xf32>
    %533 = math.exp %532 : vector<2x32xf32>
    %cst_149 = arith.constant 1.000000e+00 : f32
    %534 = vector.broadcast %cst_149 : f32 to vector<2x32xf32>
    %535 = arith.addf %534, %533 : vector<2x32xf32>
    %536 = arith.divf %534, %535 : vector<2x32xf32>
    %537 = arith.mulf %528, %473 : vector<2x32xf32>
    %538 = arith.mulf %522, %530 : vector<2x32xf32>
    %539 = arith.addf %537, %538 : vector<2x32xf32>
    %540 = math.tanh %539 : vector<2x32xf32>
    %541 = arith.mulf %536, %540 : vector<2x32xf32>
    %542 = arith.addf %476, %509 : vector<2x32xf32>
    %543 = arith.addf %477, %541 : vector<2x32xf32>
    %cst_150 = arith.constant 1.250000e-01 : f32
    %544 = vector.broadcast %cst_150 : f32 to vector<2x32xf32>
    %545 = arith.mulf %542, %544 : vector<2x32xf32>
    %c0_151 = arith.constant 0 : index
    %c0_152 = arith.constant 0 : index
    %546 = vector.load %arg6[%c0_151, %c0_152] : memref<2x64xf32, #tpu.memory_space<vmem>>, vector<2x32xf32>
    tpu.vector_store %arg6[%c0_151, %c0_152], %545 {strides = array<i32>} : memref<2x64xf32, #tpu.memory_space<vmem>>, vector<2x32xf32>,
    %cst_153 = arith.constant 1.250000e-01 : f32
    %547 = vector.broadcast %cst_153 : f32 to vector<2x32xf32>
    %548 = arith.mulf %543, %547 : vector<2x32xf32>
    %c0_154 = arith.constant 0 : index
    %c32 = arith.constant 32 : index
    %549 = vector.load %arg6[%c0_154, %c32] : memref<2x64xf32, #tpu.memory_space<vmem>>, vector<2x32xf32>
    tpu.vector_store %arg6[%c0_154, %c32], %548 {strides = array<i32>} : memref<2x64xf32, #tpu.memory_space<vmem>>, vector<2x32xf32>,
    return
  }
  func.func @transform_0(%arg0: i32) -> (i32, i32, i32) {
    %c0_i32 = arith.constant 0 : i32
    %c0_i32_0 = arith.constant 0 : i32
    %c0_i32_1 = arith.constant 0 : i32
    return %c0_i32, %arg0, %c0_i32_0 : i32, i32, i32
  }
  func.func @transform_1(%arg0: i32) -> (i32, i32) {
    %c0_i32 = arith.constant 0 : i32
    %c0_i32_0 = arith.constant 0 : i32
    %c0_i32_1 = arith.constant 0 : i32
    return %c0_i32, %c0_i32_0 : i32, i32
  }
  func.func @transform_2(%arg0: i32) -> (i32, i32) {
    %c0_i32 = arith.constant 0 : i32
    %c0_i32_0 = arith.constant 0 : i32
    %c0_i32_1 = arith.constant 0 : i32
    return %c0_i32, %c0_i32_0 : i32, i32
  }
  func.func @transform_3(%arg0: i32) -> (i32, i32) {
    %c0_i32 = arith.constant 0 : i32
    %c0_i32_0 = arith.constant 0 : i32
    %c0_i32_1 = arith.constant 0 : i32
    return %c0_i32, %c0_i32_0 : i32, i32
  }
  func.func @transform_4(%arg0: i32) -> (i32, i32) {
    %c0_i32 = arith.constant 0 : i32
    %c0_i32_0 = arith.constant 0 : i32
    %c0_i32_1 = arith.constant 0 : i32
    return %c0_i32, %c0_i32_0 : i32, i32
  }
  func.func @transform_5(%arg0: i32) -> (i32, i32) {
    %c0_i32 = arith.constant 0 : i32
    %c0_i32_0 = arith.constant 0 : i32
    return %arg0, %c0_i32 : i32, i32
  }
}

module attributes {stable_mosaic.version = 11 : i64} {
  func.func @kernel(%arg0: i32, %arg1: memref<8x2x4xbf16, #tpu.memory_space<vmem>>, %arg2: memref<4x256xbf16, #tpu.memory_space<vmem>>, %arg3: memref<1x256xf32, #tpu.memory_space<vmem>>, %arg4: memref<32x128xbf16, #tpu.memory_space<vmem>>, %arg5: memref<32x128xbf16, #tpu.memory_space<vmem>>, %arg6: memref<8x2x64xbf16, #tpu.memory_space<vmem>>, %arg7: memref<8x2x128xbf16, #tpu.memory_space<vmem>>, %arg8: memref<8x2x128xbf16, #tpu.memory_space<vmem>>) attributes {dimension_semantics = [#tpu.dimension_semantics<parallel>], iteration_bounds = array<i64: 1>, scalar_prefetch = 0 : i64, scratch_operands = 2 : i64, tpu.core_type = #tpu.core_type<tc>, window_params = [{transform_indices = @transform_0, window_bounds = array<i64: 8, 2, 4>}, {pipeline_mode = #tpu.pipeline_mode<synchronous>, transform_indices = @transform_1, window_bounds = array<i64: 4, 256>}, {pipeline_mode = #tpu.pipeline_mode<synchronous>, transform_indices = @transform_2, window_bounds = array<i64: 1, 256>}, {pipeline_mode = #tpu.pipeline_mode<synchronous>, transform_indices = @transform_3, window_bounds = array<i64: 32, 128>}, {pipeline_mode = #tpu.pipeline_mode<synchronous>, transform_indices = @transform_4, window_bounds = array<i64: 32, 128>}, {transform_indices = @transform_5, window_bounds = array<i64: 8, 2, 64>}]} {
    %c0 = arith.constant 0 : index
    %c0_0 = arith.constant 0 : index
    %c0_1 = arith.constant 0 : index
    %0 = vector.load %arg1[%c0, %c0_0, %c0_1] : memref<8x2x4xbf16, #tpu.memory_space<vmem>>, vector<8x2x4xbf16>
    %1 = vector.shape_cast %0 : vector<8x2x4xbf16> to vector<16x4xbf16>
    %c0_2 = arith.constant 0 : index
    %c0_3 = arith.constant 0 : index
    %2 = vector.load %arg2[%c0_2, %c0_3] : memref<4x256xbf16, #tpu.memory_space<vmem>>, vector<4x256xbf16>
    %cst = arith.constant dense<0.000000e+00> : vector<16x256xf32>
    %3 = tpu.matmul %1, %2, %cst {dimension_numbers = #tpu.dot_dimension_numbers<[1], [0], [0], [1], [0, 0, 1, 1], [], []>} : vector<16x4xbf16>, vector<4x256xbf16>, vector<16x256xf32> -> vector<16x256xf32>
    %c0_4 = arith.constant 0 : index
    %c0_5 = arith.constant 0 : index
    %4 = vector.load %arg3[%c0_4, %c0_5] : memref<1x256xf32, #tpu.memory_space<vmem>>, vector<1x256xf32>
    %5 = vector.broadcast %4 : vector<1x256xf32> to vector<16x256xf32>
    %6 = arith.addf %3, %5 : vector<16x256xf32>
    %7 = vector.extract_strided_slice %6 {offsets = [0, 0], sizes = [16, 128], strides = [1, 1]} : vector<16x256xf32> to vector<16x128xf32>
    %8 = vector.shape_cast %7 : vector<16x128xf32> to vector<8x2x128xf32>
    %9 = arith.truncf %8 : vector<8x2x128xf32> to vector<8x2x128xbf16>
    %c0_6 = arith.constant 0 : index
    %c0_7 = arith.constant 0 : index
    %c0_8 = arith.constant 0 : index
    %10 = vector.load %arg7[%c0_6, %c0_7, %c0_8] : memref<8x2x128xbf16, #tpu.memory_space<vmem>>, vector<8x2x128xbf16>
    tpu.vector_store %arg7[%c0_6, %c0_7, %c0_8], %9 {strides = array<i32>} : memref<8x2x128xbf16, #tpu.memory_space<vmem>>, vector<8x2x128xbf16>,
    %11 = vector.extract_strided_slice %6 {offsets = [0, 128], sizes = [16, 128], strides = [1, 1]} : vector<16x256xf32> to vector<16x128xf32>
    %12 = vector.shape_cast %11 : vector<16x128xf32> to vector<8x2x128xf32>
    %13 = arith.truncf %12 : vector<8x2x128xf32> to vector<8x2x128xbf16>
    %c0_9 = arith.constant 0 : index
    %c0_10 = arith.constant 0 : index
    %c0_11 = arith.constant 0 : index
    %14 = vector.load %arg8[%c0_9, %c0_10, %c0_11] : memref<8x2x128xbf16, #tpu.memory_space<vmem>>, vector<8x2x128xbf16>
    tpu.vector_store %arg8[%c0_9, %c0_10, %c0_11], %13 {strides = array<i32>} : memref<8x2x128xbf16, #tpu.memory_space<vmem>>, vector<8x2x128xbf16>,
    %cst_12 = arith.constant 0.000000e+00 : f32
    %15 = vector.broadcast %cst_12 : f32 to vector<2x32xf32>
    %c0_13 = arith.constant 0 : index
    %c0_14 = arith.constant 0 : index
    %c0_15 = arith.constant 0 : index
    %16 = vector.load %arg7[%c0_13, %c0_14, %c0_15] : memref<8x2x128xbf16, #tpu.memory_space<vmem>>, vector<1x2x128xbf16>
    %17 = vector.shape_cast %16 : vector<1x2x128xbf16> to vector<2x128xbf16>
    %18 = arith.truncf %15 : vector<2x32xf32> to vector<2x32xbf16>
    %c0_16 = arith.constant 0 : index
    %c0_17 = arith.constant 0 : index
    %19 = vector.load %arg4[%c0_16, %c0_17] : memref<32x128xbf16, #tpu.memory_space<vmem>>, vector<32x128xbf16>
    %cst_18 = arith.constant dense<0.000000e+00> : vector<2x128xf32>
    %20 = tpu.matmul %18, %19, %cst_18 {dimension_numbers = #tpu.dot_dimension_numbers<[1], [0], [0], [1], [0, 0, 1, 1], [], []>} : vector<2x32xbf16>, vector<32x128xbf16>, vector<2x128xf32> -> vector<2x128xf32>
    %21 = arith.extf %17 : vector<2x128xbf16> to vector<2x128xf32>
    %22 = arith.addf %21, %20 : vector<2x128xf32>
    %23 = vector.extract_strided_slice %22 {offsets = [0, 0], sizes = [2, 32], strides = [1, 1]} : vector<2x128xf32> to vector<2x32xf32>
    %24 = arith.negf %23 : vector<2x32xf32>
    %25 = math.exp %24 : vector<2x32xf32>
    %cst_19 = arith.constant 1.000000e+00 : f32
    %26 = vector.broadcast %cst_19 : f32 to vector<2x32xf32>
    %27 = arith.addf %26, %25 : vector<2x32xf32>
    %28 = arith.divf %26, %27 : vector<2x32xf32>
    %29 = vector.extract_strided_slice %22 {offsets = [0, 32], sizes = [2, 32], strides = [1, 1]} : vector<2x128xf32> to vector<2x32xf32>
    %30 = arith.negf %29 : vector<2x32xf32>
    %31 = math.exp %30 : vector<2x32xf32>
    %cst_20 = arith.constant 1.000000e+00 : f32
    %32 = vector.broadcast %cst_20 : f32 to vector<2x32xf32>
    %33 = arith.addf %32, %31 : vector<2x32xf32>
    %34 = arith.divf %32, %33 : vector<2x32xf32>
    %35 = vector.extract_strided_slice %22 {offsets = [0, 64], sizes = [2, 32], strides = [1, 1]} : vector<2x128xf32> to vector<2x32xf32>
    %36 = math.tanh %35 : vector<2x32xf32>
    %37 = vector.extract_strided_slice %22 {offsets = [0, 96], sizes = [2, 32], strides = [1, 1]} : vector<2x128xf32> to vector<2x32xf32>
    %38 = arith.negf %37 : vector<2x32xf32>
    %39 = math.exp %38 : vector<2x32xf32>
    %cst_21 = arith.constant 1.000000e+00 : f32
    %40 = vector.broadcast %cst_21 : f32 to vector<2x32xf32>
    %41 = arith.addf %40, %39 : vector<2x32xf32>
    %42 = arith.divf %40, %41 : vector<2x32xf32>
    %43 = arith.mulf %34, %15 : vector<2x32xf32>
    %44 = arith.mulf %28, %36 : vector<2x32xf32>
    %45 = arith.addf %43, %44 : vector<2x32xf32>
    %46 = math.tanh %45 : vector<2x32xf32>
    %47 = arith.mulf %42, %46 : vector<2x32xf32>
    %c7 = arith.constant 7 : index
    %c0_22 = arith.constant 0 : index
    %c0_23 = arith.constant 0 : index
    %48 = vector.load %arg8[%c7, %c0_22, %c0_23] : memref<8x2x128xbf16, #tpu.memory_space<vmem>>, vector<1x2x128xbf16>
    %49 = vector.shape_cast %48 : vector<1x2x128xbf16> to vector<2x128xbf16>
    %50 = arith.truncf %15 : vector<2x32xf32> to vector<2x32xbf16>
    %c0_24 = arith.constant 0 : index
    %c0_25 = arith.constant 0 : index
    %51 = vector.load %arg5[%c0_24, %c0_25] : memref<32x128xbf16, #tpu.memory_space<vmem>>, vector<32x128xbf16>
    %cst_26 = arith.constant dense<0.000000e+00> : vector<2x128xf32>
    %52 = tpu.matmul %50, %51, %cst_26 {dimension_numbers = #tpu.dot_dimension_numbers<[1], [0], [0], [1], [0, 0, 1, 1], [], []>} : vector<2x32xbf16>, vector<32x128xbf16>, vector<2x128xf32> -> vector<2x128xf32>
    %53 = arith.extf %49 : vector<2x128xbf16> to vector<2x128xf32>
    %54 = arith.addf %53, %52 : vector<2x128xf32>
    %55 = vector.extract_strided_slice %54 {offsets = [0, 0], sizes = [2, 32], strides = [1, 1]} : vector<2x128xf32> to vector<2x32xf32>
    %56 = arith.negf %55 : vector<2x32xf32>
    %57 = math.exp %56 : vector<2x32xf32>
    %cst_27 = arith.constant 1.000000e+00 : f32
    %58 = vector.broadcast %cst_27 : f32 to vector<2x32xf32>
    %59 = arith.addf %58, %57 : vector<2x32xf32>
    %60 = arith.divf %58, %59 : vector<2x32xf32>
    %61 = vector.extract_strided_slice %54 {offsets = [0, 32], sizes = [2, 32], strides = [1, 1]} : vector<2x128xf32> to vector<2x32xf32>
    %62 = arith.negf %61 : vector<2x32xf32>
    %63 = math.exp %62 : vector<2x32xf32>
    %cst_28 = arith.constant 1.000000e+00 : f32
    %64 = vector.broadcast %cst_28 : f32 to vector<2x32xf32>
    %65 = arith.addf %64, %63 : vector<2x32xf32>
    %66 = arith.divf %64, %65 : vector<2x32xf32>
    %67 = vector.extract_strided_slice %54 {offsets = [0, 64], sizes = [2, 32], strides = [1, 1]} : vector<2x128xf32> to vector<2x32xf32>
    %68 = math.tanh %67 : vector<2x32xf32>
    %69 = vector.extract_strided_slice %54 {offsets = [0, 96], sizes = [2, 32], strides = [1, 1]} : vector<2x128xf32> to vector<2x32xf32>
    %70 = arith.negf %69 : vector<2x32xf32>
    %71 = math.exp %70 : vector<2x32xf32>
    %cst_29 = arith.constant 1.000000e+00 : f32
    %72 = vector.broadcast %cst_29 : f32 to vector<2x32xf32>
    %73 = arith.addf %72, %71 : vector<2x32xf32>
    %74 = arith.divf %72, %73 : vector<2x32xf32>
    %75 = arith.mulf %66, %15 : vector<2x32xf32>
    %76 = arith.mulf %60, %68 : vector<2x32xf32>
    %77 = arith.addf %75, %76 : vector<2x32xf32>
    %78 = math.tanh %77 : vector<2x32xf32>
    %79 = arith.mulf %74, %78 : vector<2x32xf32>
    %80 = arith.truncf %47 : vector<2x32xf32> to vector<2x32xbf16>
    %c0_30 = arith.constant 0 : index
    %c0_31 = arith.constant 0 : index
    %c0_32 = arith.constant 0 : index
    %81 = vector.load %arg6[%c0_30, %c0_31, %c0_32] : memref<8x2x64xbf16, #tpu.memory_space<vmem>>, vector<1x2x32xbf16>
    %82 = vector.shape_cast %81 : vector<1x2x32xbf16> to vector<2x32xbf16>
    %83 = vector.shape_cast %80 : vector<2x32xbf16> to vector<1x2x32xbf16>
    tpu.vector_store %arg6[%c0_30, %c0_31, %c0_32], %83 {strides = array<i32>} : memref<8x2x64xbf16, #tpu.memory_space<vmem>>, vector<1x2x32xbf16>,
    %84 = arith.truncf %79 : vector<2x32xf32> to vector<2x32xbf16>
    %c7_33 = arith.constant 7 : index
    %c0_34 = arith.constant 0 : index
    %c32 = arith.constant 32 : index
    %85 = vector.load %arg6[%c7_33, %c0_34, %c32] : memref<8x2x64xbf16, #tpu.memory_space<vmem>>, vector<1x2x32xbf16>
    %86 = vector.shape_cast %85 : vector<1x2x32xbf16> to vector<2x32xbf16>
    %87 = vector.shape_cast %84 : vector<2x32xbf16> to vector<1x2x32xbf16>
    tpu.vector_store %arg6[%c7_33, %c0_34, %c32], %87 {strides = array<i32>} : memref<8x2x64xbf16, #tpu.memory_space<vmem>>, vector<1x2x32xbf16>,
    %c1 = arith.constant 1 : index
    %c0_35 = arith.constant 0 : index
    %c0_36 = arith.constant 0 : index
    %88 = vector.load %arg7[%c1, %c0_35, %c0_36] : memref<8x2x128xbf16, #tpu.memory_space<vmem>>, vector<1x2x128xbf16>
    %89 = vector.shape_cast %88 : vector<1x2x128xbf16> to vector<2x128xbf16>
    %90 = arith.truncf %47 : vector<2x32xf32> to vector<2x32xbf16>
    %c0_37 = arith.constant 0 : index
    %c0_38 = arith.constant 0 : index
    %91 = vector.load %arg4[%c0_37, %c0_38] : memref<32x128xbf16, #tpu.memory_space<vmem>>, vector<32x128xbf16>
    %cst_39 = arith.constant dense<0.000000e+00> : vector<2x128xf32>
    %92 = tpu.matmul %90, %91, %cst_39 {dimension_numbers = #tpu.dot_dimension_numbers<[1], [0], [0], [1], [0, 0, 1, 1], [], []>} : vector<2x32xbf16>, vector<32x128xbf16>, vector<2x128xf32> -> vector<2x128xf32>
    %93 = arith.extf %89 : vector<2x128xbf16> to vector<2x128xf32>
    %94 = arith.addf %93, %92 : vector<2x128xf32>
    %95 = vector.extract_strided_slice %94 {offsets = [0, 0], sizes = [2, 32], strides = [1, 1]} : vector<2x128xf32> to vector<2x32xf32>
    %96 = arith.negf %95 : vector<2x32xf32>
    %97 = math.exp %96 : vector<2x32xf32>
    %cst_40 = arith.constant 1.000000e+00 : f32
    %98 = vector.broadcast %cst_40 : f32 to vector<2x32xf32>
    %99 = arith.addf %98, %97 : vector<2x32xf32>
    %100 = arith.divf %98, %99 : vector<2x32xf32>
    %101 = vector.extract_strided_slice %94 {offsets = [0, 32], sizes = [2, 32], strides = [1, 1]} : vector<2x128xf32> to vector<2x32xf32>
    %102 = arith.negf %101 : vector<2x32xf32>
    %103 = math.exp %102 : vector<2x32xf32>
    %cst_41 = arith.constant 1.000000e+00 : f32
    %104 = vector.broadcast %cst_41 : f32 to vector<2x32xf32>
    %105 = arith.addf %104, %103 : vector<2x32xf32>
    %106 = arith.divf %104, %105 : vector<2x32xf32>
    %107 = vector.extract_strided_slice %94 {offsets = [0, 64], sizes = [2, 32], strides = [1, 1]} : vector<2x128xf32> to vector<2x32xf32>
    %108 = math.tanh %107 : vector<2x32xf32>
    %109 = vector.extract_strided_slice %94 {offsets = [0, 96], sizes = [2, 32], strides = [1, 1]} : vector<2x128xf32> to vector<2x32xf32>
    %110 = arith.negf %109 : vector<2x32xf32>
    %111 = math.exp %110 : vector<2x32xf32>
    %cst_42 = arith.constant 1.000000e+00 : f32
    %112 = vector.broadcast %cst_42 : f32 to vector<2x32xf32>
    %113 = arith.addf %112, %111 : vector<2x32xf32>
    %114 = arith.divf %112, %113 : vector<2x32xf32>
    %115 = arith.mulf %106, %45 : vector<2x32xf32>
    %116 = arith.mulf %100, %108 : vector<2x32xf32>
    %117 = arith.addf %115, %116 : vector<2x32xf32>
    %118 = math.tanh %117 : vector<2x32xf32>
    %119 = arith.mulf %114, %118 : vector<2x32xf32>
    %c6 = arith.constant 6 : index
    %c0_43 = arith.constant 0 : index
    %c0_44 = arith.constant 0 : index
    %120 = vector.load %arg8[%c6, %c0_43, %c0_44] : memref<8x2x128xbf16, #tpu.memory_space<vmem>>, vector<1x2x128xbf16>
    %121 = vector.shape_cast %120 : vector<1x2x128xbf16> to vector<2x128xbf16>
    %122 = arith.truncf %79 : vector<2x32xf32> to vector<2x32xbf16>
    %c0_45 = arith.constant 0 : index
    %c0_46 = arith.constant 0 : index
    %123 = vector.load %arg5[%c0_45, %c0_46] : memref<32x128xbf16, #tpu.memory_space<vmem>>, vector<32x128xbf16>
    %cst_47 = arith.constant dense<0.000000e+00> : vector<2x128xf32>
    %124 = tpu.matmul %122, %123, %cst_47 {dimension_numbers = #tpu.dot_dimension_numbers<[1], [0], [0], [1], [0, 0, 1, 1], [], []>} : vector<2x32xbf16>, vector<32x128xbf16>, vector<2x128xf32> -> vector<2x128xf32>
    %125 = arith.extf %121 : vector<2x128xbf16> to vector<2x128xf32>
    %126 = arith.addf %125, %124 : vector<2x128xf32>
    %127 = vector.extract_strided_slice %126 {offsets = [0, 0], sizes = [2, 32], strides = [1, 1]} : vector<2x128xf32> to vector<2x32xf32>
    %128 = arith.negf %127 : vector<2x32xf32>
    %129 = math.exp %128 : vector<2x32xf32>
    %cst_48 = arith.constant 1.000000e+00 : f32
    %130 = vector.broadcast %cst_48 : f32 to vector<2x32xf32>
    %131 = arith.addf %130, %129 : vector<2x32xf32>
    %132 = arith.divf %130, %131 : vector<2x32xf32>
    %133 = vector.extract_strided_slice %126 {offsets = [0, 32], sizes = [2, 32], strides = [1, 1]} : vector<2x128xf32> to vector<2x32xf32>
    %134 = arith.negf %133 : vector<2x32xf32>
    %135 = math.exp %134 : vector<2x32xf32>
    %cst_49 = arith.constant 1.000000e+00 : f32
    %136 = vector.broadcast %cst_49 : f32 to vector<2x32xf32>
    %137 = arith.addf %136, %135 : vector<2x32xf32>
    %138 = arith.divf %136, %137 : vector<2x32xf32>
    %139 = vector.extract_strided_slice %126 {offsets = [0, 64], sizes = [2, 32], strides = [1, 1]} : vector<2x128xf32> to vector<2x32xf32>
    %140 = math.tanh %139 : vector<2x32xf32>
    %141 = vector.extract_strided_slice %126 {offsets = [0, 96], sizes = [2, 32], strides = [1, 1]} : vector<2x128xf32> to vector<2x32xf32>
    %142 = arith.negf %141 : vector<2x32xf32>
    %143 = math.exp %142 : vector<2x32xf32>
    %cst_50 = arith.constant 1.000000e+00 : f32
    %144 = vector.broadcast %cst_50 : f32 to vector<2x32xf32>
    %145 = arith.addf %144, %143 : vector<2x32xf32>
    %146 = arith.divf %144, %145 : vector<2x32xf32>
    %147 = arith.mulf %138, %77 : vector<2x32xf32>
    %148 = arith.mulf %132, %140 : vector<2x32xf32>
    %149 = arith.addf %147, %148 : vector<2x32xf32>
    %150 = math.tanh %149 : vector<2x32xf32>
    %151 = arith.mulf %146, %150 : vector<2x32xf32>
    %152 = arith.truncf %119 : vector<2x32xf32> to vector<2x32xbf16>
    %c1_51 = arith.constant 1 : index
    %c0_52 = arith.constant 0 : index
    %c0_53 = arith.constant 0 : index
    %153 = vector.load %arg6[%c1_51, %c0_52, %c0_53] : memref<8x2x64xbf16, #tpu.memory_space<vmem>>, vector<1x2x32xbf16>
    %154 = vector.shape_cast %153 : vector<1x2x32xbf16> to vector<2x32xbf16>
    %155 = vector.shape_cast %152 : vector<2x32xbf16> to vector<1x2x32xbf16>
    tpu.vector_store %arg6[%c1_51, %c0_52, %c0_53], %155 {strides = array<i32>} : memref<8x2x64xbf16, #tpu.memory_space<vmem>>, vector<1x2x32xbf16>,
    %156 = arith.truncf %151 : vector<2x32xf32> to vector<2x32xbf16>
    %c6_54 = arith.constant 6 : index
    %c0_55 = arith.constant 0 : index
    %c32_56 = arith.constant 32 : index
    %157 = vector.load %arg6[%c6_54, %c0_55, %c32_56] : memref<8x2x64xbf16, #tpu.memory_space<vmem>>, vector<1x2x32xbf16>
    %158 = vector.shape_cast %157 : vector<1x2x32xbf16> to vector<2x32xbf16>
    %159 = vector.shape_cast %156 : vector<2x32xbf16> to vector<1x2x32xbf16>
    tpu.vector_store %arg6[%c6_54, %c0_55, %c32_56], %159 {strides = array<i32>} : memref<8x2x64xbf16, #tpu.memory_space<vmem>>, vector<1x2x32xbf16>,
    %c2 = arith.constant 2 : index
    %c0_57 = arith.constant 0 : index
    %c0_58 = arith.constant 0 : index
    %160 = vector.load %arg7[%c2, %c0_57, %c0_58] : memref<8x2x128xbf16, #tpu.memory_space<vmem>>, vector<1x2x128xbf16>
    %161 = vector.shape_cast %160 : vector<1x2x128xbf16> to vector<2x128xbf16>
    %162 = arith.truncf %119 : vector<2x32xf32> to vector<2x32xbf16>
    %c0_59 = arith.constant 0 : index
    %c0_60 = arith.constant 0 : index
    %163 = vector.load %arg4[%c0_59, %c0_60] : memref<32x128xbf16, #tpu.memory_space<vmem>>, vector<32x128xbf16>
    %cst_61 = arith.constant dense<0.000000e+00> : vector<2x128xf32>
    %164 = tpu.matmul %162, %163, %cst_61 {dimension_numbers = #tpu.dot_dimension_numbers<[1], [0], [0], [1], [0, 0, 1, 1], [], []>} : vector<2x32xbf16>, vector<32x128xbf16>, vector<2x128xf32> -> vector<2x128xf32>
    %165 = arith.extf %161 : vector<2x128xbf16> to vector<2x128xf32>
    %166 = arith.addf %165, %164 : vector<2x128xf32>
    %167 = vector.extract_strided_slice %166 {offsets = [0, 0], sizes = [2, 32], strides = [1, 1]} : vector<2x128xf32> to vector<2x32xf32>
    %168 = arith.negf %167 : vector<2x32xf32>
    %169 = math.exp %168 : vector<2x32xf32>
    %cst_62 = arith.constant 1.000000e+00 : f32
    %170 = vector.broadcast %cst_62 : f32 to vector<2x32xf32>
    %171 = arith.addf %170, %169 : vector<2x32xf32>
    %172 = arith.divf %170, %171 : vector<2x32xf32>
    %173 = vector.extract_strided_slice %166 {offsets = [0, 32], sizes = [2, 32], strides = [1, 1]} : vector<2x128xf32> to vector<2x32xf32>
    %174 = arith.negf %173 : vector<2x32xf32>
    %175 = math.exp %174 : vector<2x32xf32>
    %cst_63 = arith.constant 1.000000e+00 : f32
    %176 = vector.broadcast %cst_63 : f32 to vector<2x32xf32>
    %177 = arith.addf %176, %175 : vector<2x32xf32>
    %178 = arith.divf %176, %177 : vector<2x32xf32>
    %179 = vector.extract_strided_slice %166 {offsets = [0, 64], sizes = [2, 32], strides = [1, 1]} : vector<2x128xf32> to vector<2x32xf32>
    %180 = math.tanh %179 : vector<2x32xf32>
    %181 = vector.extract_strided_slice %166 {offsets = [0, 96], sizes = [2, 32], strides = [1, 1]} : vector<2x128xf32> to vector<2x32xf32>
    %182 = arith.negf %181 : vector<2x32xf32>
    %183 = math.exp %182 : vector<2x32xf32>
    %cst_64 = arith.constant 1.000000e+00 : f32
    %184 = vector.broadcast %cst_64 : f32 to vector<2x32xf32>
    %185 = arith.addf %184, %183 : vector<2x32xf32>
    %186 = arith.divf %184, %185 : vector<2x32xf32>
    %187 = arith.mulf %178, %117 : vector<2x32xf32>
    %188 = arith.mulf %172, %180 : vector<2x32xf32>
    %189 = arith.addf %187, %188 : vector<2x32xf32>
    %190 = math.tanh %189 : vector<2x32xf32>
    %191 = arith.mulf %186, %190 : vector<2x32xf32>
    %c5 = arith.constant 5 : index
    %c0_65 = arith.constant 0 : index
    %c0_66 = arith.constant 0 : index
    %192 = vector.load %arg8[%c5, %c0_65, %c0_66] : memref<8x2x128xbf16, #tpu.memory_space<vmem>>, vector<1x2x128xbf16>
    %193 = vector.shape_cast %192 : vector<1x2x128xbf16> to vector<2x128xbf16>
    %194 = arith.truncf %151 : vector<2x32xf32> to vector<2x32xbf16>
    %c0_67 = arith.constant 0 : index
    %c0_68 = arith.constant 0 : index
    %195 = vector.load %arg5[%c0_67, %c0_68] : memref<32x128xbf16, #tpu.memory_space<vmem>>, vector<32x128xbf16>
    %cst_69 = arith.constant dense<0.000000e+00> : vector<2x128xf32>
    %196 = tpu.matmul %194, %195, %cst_69 {dimension_numbers = #tpu.dot_dimension_numbers<[1], [0], [0], [1], [0, 0, 1, 1], [], []>} : vector<2x32xbf16>, vector<32x128xbf16>, vector<2x128xf32> -> vector<2x128xf32>
    %197 = arith.extf %193 : vector<2x128xbf16> to vector<2x128xf32>
    %198 = arith.addf %197, %196 : vector<2x128xf32>
    %199 = vector.extract_strided_slice %198 {offsets = [0, 0], sizes = [2, 32], strides = [1, 1]} : vector<2x128xf32> to vector<2x32xf32>
    %200 = arith.negf %199 : vector<2x32xf32>
    %201 = math.exp %200 : vector<2x32xf32>
    %cst_70 = arith.constant 1.000000e+00 : f32
    %202 = vector.broadcast %cst_70 : f32 to vector<2x32xf32>
    %203 = arith.addf %202, %201 : vector<2x32xf32>
    %204 = arith.divf %202, %203 : vector<2x32xf32>
    %205 = vector.extract_strided_slice %198 {offsets = [0, 32], sizes = [2, 32], strides = [1, 1]} : vector<2x128xf32> to vector<2x32xf32>
    %206 = arith.negf %205 : vector<2x32xf32>
    %207 = math.exp %206 : vector<2x32xf32>
    %cst_71 = arith.constant 1.000000e+00 : f32
    %208 = vector.broadcast %cst_71 : f32 to vector<2x32xf32>
    %209 = arith.addf %208, %207 : vector<2x32xf32>
    %210 = arith.divf %208, %209 : vector<2x32xf32>
    %211 = vector.extract_strided_slice %198 {offsets = [0, 64], sizes = [2, 32], strides = [1, 1]} : vector<2x128xf32> to vector<2x32xf32>
    %212 = math.tanh %211 : vector<2x32xf32>
    %213 = vector.extract_strided_slice %198 {offsets = [0, 96], sizes = [2, 32], strides = [1, 1]} : vector<2x128xf32> to vector<2x32xf32>
    %214 = arith.negf %213 : vector<2x32xf32>
    %215 = math.exp %214 : vector<2x32xf32>
    %cst_72 = arith.constant 1.000000e+00 : f32
    %216 = vector.broadcast %cst_72 : f32 to vector<2x32xf32>
    %217 = arith.addf %216, %215 : vector<2x32xf32>
    %218 = arith.divf %216, %217 : vector<2x32xf32>
    %219 = arith.mulf %210, %149 : vector<2x32xf32>
    %220 = arith.mulf %204, %212 : vector<2x32xf32>
    %221 = arith.addf %219, %220 : vector<2x32xf32>
    %222 = math.tanh %221 : vector<2x32xf32>
    %223 = arith.mulf %218, %222 : vector<2x32xf32>
    %224 = arith.truncf %191 : vector<2x32xf32> to vector<2x32xbf16>
    %c2_73 = arith.constant 2 : index
    %c0_74 = arith.constant 0 : index
    %c0_75 = arith.constant 0 : index
    %225 = vector.load %arg6[%c2_73, %c0_74, %c0_75] : memref<8x2x64xbf16, #tpu.memory_space<vmem>>, vector<1x2x32xbf16>
    %226 = vector.shape_cast %225 : vector<1x2x32xbf16> to vector<2x32xbf16>
    %227 = vector.shape_cast %224 : vector<2x32xbf16> to vector<1x2x32xbf16>
    tpu.vector_store %arg6[%c2_73, %c0_74, %c0_75], %227 {strides = array<i32>} : memref<8x2x64xbf16, #tpu.memory_space<vmem>>, vector<1x2x32xbf16>,
    %228 = arith.truncf %223 : vector<2x32xf32> to vector<2x32xbf16>
    %c5_76 = arith.constant 5 : index
    %c0_77 = arith.constant 0 : index
    %c32_78 = arith.constant 32 : index
    %229 = vector.load %arg6[%c5_76, %c0_77, %c32_78] : memref<8x2x64xbf16, #tpu.memory_space<vmem>>, vector<1x2x32xbf16>
    %230 = vector.shape_cast %229 : vector<1x2x32xbf16> to vector<2x32xbf16>
    %231 = vector.shape_cast %228 : vector<2x32xbf16> to vector<1x2x32xbf16>
    tpu.vector_store %arg6[%c5_76, %c0_77, %c32_78], %231 {strides = array<i32>} : memref<8x2x64xbf16, #tpu.memory_space<vmem>>, vector<1x2x32xbf16>,
    %c3 = arith.constant 3 : index
    %c0_79 = arith.constant 0 : index
    %c0_80 = arith.constant 0 : index
    %232 = vector.load %arg7[%c3, %c0_79, %c0_80] : memref<8x2x128xbf16, #tpu.memory_space<vmem>>, vector<1x2x128xbf16>
    %233 = vector.shape_cast %232 : vector<1x2x128xbf16> to vector<2x128xbf16>
    %234 = arith.truncf %191 : vector<2x32xf32> to vector<2x32xbf16>
    %c0_81 = arith.constant 0 : index
    %c0_82 = arith.constant 0 : index
    %235 = vector.load %arg4[%c0_81, %c0_82] : memref<32x128xbf16, #tpu.memory_space<vmem>>, vector<32x128xbf16>
    %cst_83 = arith.constant dense<0.000000e+00> : vector<2x128xf32>
    %236 = tpu.matmul %234, %235, %cst_83 {dimension_numbers = #tpu.dot_dimension_numbers<[1], [0], [0], [1], [0, 0, 1, 1], [], []>} : vector<2x32xbf16>, vector<32x128xbf16>, vector<2x128xf32> -> vector<2x128xf32>
    %237 = arith.extf %233 : vector<2x128xbf16> to vector<2x128xf32>
    %238 = arith.addf %237, %236 : vector<2x128xf32>
    %239 = vector.extract_strided_slice %238 {offsets = [0, 0], sizes = [2, 32], strides = [1, 1]} : vector<2x128xf32> to vector<2x32xf32>
    %240 = arith.negf %239 : vector<2x32xf32>
    %241 = math.exp %240 : vector<2x32xf32>
    %cst_84 = arith.constant 1.000000e+00 : f32
    %242 = vector.broadcast %cst_84 : f32 to vector<2x32xf32>
    %243 = arith.addf %242, %241 : vector<2x32xf32>
    %244 = arith.divf %242, %243 : vector<2x32xf32>
    %245 = vector.extract_strided_slice %238 {offsets = [0, 32], sizes = [2, 32], strides = [1, 1]} : vector<2x128xf32> to vector<2x32xf32>
    %246 = arith.negf %245 : vector<2x32xf32>
    %247 = math.exp %246 : vector<2x32xf32>
    %cst_85 = arith.constant 1.000000e+00 : f32
    %248 = vector.broadcast %cst_85 : f32 to vector<2x32xf32>
    %249 = arith.addf %248, %247 : vector<2x32xf32>
    %250 = arith.divf %248, %249 : vector<2x32xf32>
    %251 = vector.extract_strided_slice %238 {offsets = [0, 64], sizes = [2, 32], strides = [1, 1]} : vector<2x128xf32> to vector<2x32xf32>
    %252 = math.tanh %251 : vector<2x32xf32>
    %253 = vector.extract_strided_slice %238 {offsets = [0, 96], sizes = [2, 32], strides = [1, 1]} : vector<2x128xf32> to vector<2x32xf32>
    %254 = arith.negf %253 : vector<2x32xf32>
    %255 = math.exp %254 : vector<2x32xf32>
    %cst_86 = arith.constant 1.000000e+00 : f32
    %256 = vector.broadcast %cst_86 : f32 to vector<2x32xf32>
    %257 = arith.addf %256, %255 : vector<2x32xf32>
    %258 = arith.divf %256, %257 : vector<2x32xf32>
    %259 = arith.mulf %250, %189 : vector<2x32xf32>
    %260 = arith.mulf %244, %252 : vector<2x32xf32>
    %261 = arith.addf %259, %260 : vector<2x32xf32>
    %262 = math.tanh %261 : vector<2x32xf32>
    %263 = arith.mulf %258, %262 : vector<2x32xf32>
    %c4 = arith.constant 4 : index
    %c0_87 = arith.constant 0 : index
    %c0_88 = arith.constant 0 : index
    %264 = vector.load %arg8[%c4, %c0_87, %c0_88] : memref<8x2x128xbf16, #tpu.memory_space<vmem>>, vector<1x2x128xbf16>
    %265 = vector.shape_cast %264 : vector<1x2x128xbf16> to vector<2x128xbf16>
    %266 = arith.truncf %223 : vector<2x32xf32> to vector<2x32xbf16>
    %c0_89 = arith.constant 0 : index
    %c0_90 = arith.constant 0 : index
    %267 = vector.load %arg5[%c0_89, %c0_90] : memref<32x128xbf16, #tpu.memory_space<vmem>>, vector<32x128xbf16>
    %cst_91 = arith.constant dense<0.000000e+00> : vector<2x128xf32>
    %268 = tpu.matmul %266, %267, %cst_91 {dimension_numbers = #tpu.dot_dimension_numbers<[1], [0], [0], [1], [0, 0, 1, 1], [], []>} : vector<2x32xbf16>, vector<32x128xbf16>, vector<2x128xf32> -> vector<2x128xf32>
    %269 = arith.extf %265 : vector<2x128xbf16> to vector<2x128xf32>
    %270 = arith.addf %269, %268 : vector<2x128xf32>
    %271 = vector.extract_strided_slice %270 {offsets = [0, 0], sizes = [2, 32], strides = [1, 1]} : vector<2x128xf32> to vector<2x32xf32>
    %272 = arith.negf %271 : vector<2x32xf32>
    %273 = math.exp %272 : vector<2x32xf32>
    %cst_92 = arith.constant 1.000000e+00 : f32
    %274 = vector.broadcast %cst_92 : f32 to vector<2x32xf32>
    %275 = arith.addf %274, %273 : vector<2x32xf32>
    %276 = arith.divf %274, %275 : vector<2x32xf32>
    %277 = vector.extract_strided_slice %270 {offsets = [0, 32], sizes = [2, 32], strides = [1, 1]} : vector<2x128xf32> to vector<2x32xf32>
    %278 = arith.negf %277 : vector<2x32xf32>
    %279 = math.exp %278 : vector<2x32xf32>
    %cst_93 = arith.constant 1.000000e+00 : f32
    %280 = vector.broadcast %cst_93 : f32 to vector<2x32xf32>
    %281 = arith.addf %280, %279 : vector<2x32xf32>
    %282 = arith.divf %280, %281 : vector<2x32xf32>
    %283 = vector.extract_strided_slice %270 {offsets = [0, 64], sizes = [2, 32], strides = [1, 1]} : vector<2x128xf32> to vector<2x32xf32>
    %284 = math.tanh %283 : vector<2x32xf32>
    %285 = vector.extract_strided_slice %270 {offsets = [0, 96], sizes = [2, 32], strides = [1, 1]} : vector<2x128xf32> to vector<2x32xf32>
    %286 = arith.negf %285 : vector<2x32xf32>
    %287 = math.exp %286 : vector<2x32xf32>
    %cst_94 = arith.constant 1.000000e+00 : f32
    %288 = vector.broadcast %cst_94 : f32 to vector<2x32xf32>
    %289 = arith.addf %288, %287 : vector<2x32xf32>
    %290 = arith.divf %288, %289 : vector<2x32xf32>
    %291 = arith.mulf %282, %221 : vector<2x32xf32>
    %292 = arith.mulf %276, %284 : vector<2x32xf32>
    %293 = arith.addf %291, %292 : vector<2x32xf32>
    %294 = math.tanh %293 : vector<2x32xf32>
    %295 = arith.mulf %290, %294 : vector<2x32xf32>
    %296 = arith.truncf %263 : vector<2x32xf32> to vector<2x32xbf16>
    %c3_95 = arith.constant 3 : index
    %c0_96 = arith.constant 0 : index
    %c0_97 = arith.constant 0 : index
    %297 = vector.load %arg6[%c3_95, %c0_96, %c0_97] : memref<8x2x64xbf16, #tpu.memory_space<vmem>>, vector<1x2x32xbf16>
    %298 = vector.shape_cast %297 : vector<1x2x32xbf16> to vector<2x32xbf16>
    %299 = vector.shape_cast %296 : vector<2x32xbf16> to vector<1x2x32xbf16>
    tpu.vector_store %arg6[%c3_95, %c0_96, %c0_97], %299 {strides = array<i32>} : memref<8x2x64xbf16, #tpu.memory_space<vmem>>, vector<1x2x32xbf16>,
    %300 = arith.truncf %295 : vector<2x32xf32> to vector<2x32xbf16>
    %c4_98 = arith.constant 4 : index
    %c0_99 = arith.constant 0 : index
    %c32_100 = arith.constant 32 : index
    %301 = vector.load %arg6[%c4_98, %c0_99, %c32_100] : memref<8x2x64xbf16, #tpu.memory_space<vmem>>, vector<1x2x32xbf16>
    %302 = vector.shape_cast %301 : vector<1x2x32xbf16> to vector<2x32xbf16>
    %303 = vector.shape_cast %300 : vector<2x32xbf16> to vector<1x2x32xbf16>
    tpu.vector_store %arg6[%c4_98, %c0_99, %c32_100], %303 {strides = array<i32>} : memref<8x2x64xbf16, #tpu.memory_space<vmem>>, vector<1x2x32xbf16>,
    %c4_101 = arith.constant 4 : index
    %c0_102 = arith.constant 0 : index
    %c0_103 = arith.constant 0 : index
    %304 = vector.load %arg7[%c4_101, %c0_102, %c0_103] : memref<8x2x128xbf16, #tpu.memory_space<vmem>>, vector<1x2x128xbf16>
    %305 = vector.shape_cast %304 : vector<1x2x128xbf16> to vector<2x128xbf16>
    %306 = arith.truncf %263 : vector<2x32xf32> to vector<2x32xbf16>
    %c0_104 = arith.constant 0 : index
    %c0_105 = arith.constant 0 : index
    %307 = vector.load %arg4[%c0_104, %c0_105] : memref<32x128xbf16, #tpu.memory_space<vmem>>, vector<32x128xbf16>
    %cst_106 = arith.constant dense<0.000000e+00> : vector<2x128xf32>
    %308 = tpu.matmul %306, %307, %cst_106 {dimension_numbers = #tpu.dot_dimension_numbers<[1], [0], [0], [1], [0, 0, 1, 1], [], []>} : vector<2x32xbf16>, vector<32x128xbf16>, vector<2x128xf32> -> vector<2x128xf32>
    %309 = arith.extf %305 : vector<2x128xbf16> to vector<2x128xf32>
    %310 = arith.addf %309, %308 : vector<2x128xf32>
    %311 = vector.extract_strided_slice %310 {offsets = [0, 0], sizes = [2, 32], strides = [1, 1]} : vector<2x128xf32> to vector<2x32xf32>
    %312 = arith.negf %311 : vector<2x32xf32>
    %313 = math.exp %312 : vector<2x32xf32>
    %cst_107 = arith.constant 1.000000e+00 : f32
    %314 = vector.broadcast %cst_107 : f32 to vector<2x32xf32>
    %315 = arith.addf %314, %313 : vector<2x32xf32>
    %316 = arith.divf %314, %315 : vector<2x32xf32>
    %317 = vector.extract_strided_slice %310 {offsets = [0, 32], sizes = [2, 32], strides = [1, 1]} : vector<2x128xf32> to vector<2x32xf32>
    %318 = arith.negf %317 : vector<2x32xf32>
    %319 = math.exp %318 : vector<2x32xf32>
    %cst_108 = arith.constant 1.000000e+00 : f32
    %320 = vector.broadcast %cst_108 : f32 to vector<2x32xf32>
    %321 = arith.addf %320, %319 : vector<2x32xf32>
    %322 = arith.divf %320, %321 : vector<2x32xf32>
    %323 = vector.extract_strided_slice %310 {offsets = [0, 64], sizes = [2, 32], strides = [1, 1]} : vector<2x128xf32> to vector<2x32xf32>
    %324 = math.tanh %323 : vector<2x32xf32>
    %325 = vector.extract_strided_slice %310 {offsets = [0, 96], sizes = [2, 32], strides = [1, 1]} : vector<2x128xf32> to vector<2x32xf32>
    %326 = arith.negf %325 : vector<2x32xf32>
    %327 = math.exp %326 : vector<2x32xf32>
    %cst_109 = arith.constant 1.000000e+00 : f32
    %328 = vector.broadcast %cst_109 : f32 to vector<2x32xf32>
    %329 = arith.addf %328, %327 : vector<2x32xf32>
    %330 = arith.divf %328, %329 : vector<2x32xf32>
    %331 = arith.mulf %322, %261 : vector<2x32xf32>
    %332 = arith.mulf %316, %324 : vector<2x32xf32>
    %333 = arith.addf %331, %332 : vector<2x32xf32>
    %334 = math.tanh %333 : vector<2x32xf32>
    %335 = arith.mulf %330, %334 : vector<2x32xf32>
    %c3_110 = arith.constant 3 : index
    %c0_111 = arith.constant 0 : index
    %c0_112 = arith.constant 0 : index
    %336 = vector.load %arg8[%c3_110, %c0_111, %c0_112] : memref<8x2x128xbf16, #tpu.memory_space<vmem>>, vector<1x2x128xbf16>
    %337 = vector.shape_cast %336 : vector<1x2x128xbf16> to vector<2x128xbf16>
    %338 = arith.truncf %295 : vector<2x32xf32> to vector<2x32xbf16>
    %c0_113 = arith.constant 0 : index
    %c0_114 = arith.constant 0 : index
    %339 = vector.load %arg5[%c0_113, %c0_114] : memref<32x128xbf16, #tpu.memory_space<vmem>>, vector<32x128xbf16>
    %cst_115 = arith.constant dense<0.000000e+00> : vector<2x128xf32>
    %340 = tpu.matmul %338, %339, %cst_115 {dimension_numbers = #tpu.dot_dimension_numbers<[1], [0], [0], [1], [0, 0, 1, 1], [], []>} : vector<2x32xbf16>, vector<32x128xbf16>, vector<2x128xf32> -> vector<2x128xf32>
    %341 = arith.extf %337 : vector<2x128xbf16> to vector<2x128xf32>
    %342 = arith.addf %341, %340 : vector<2x128xf32>
    %343 = vector.extract_strided_slice %342 {offsets = [0, 0], sizes = [2, 32], strides = [1, 1]} : vector<2x128xf32> to vector<2x32xf32>
    %344 = arith.negf %343 : vector<2x32xf32>
    %345 = math.exp %344 : vector<2x32xf32>
    %cst_116 = arith.constant 1.000000e+00 : f32
    %346 = vector.broadcast %cst_116 : f32 to vector<2x32xf32>
    %347 = arith.addf %346, %345 : vector<2x32xf32>
    %348 = arith.divf %346, %347 : vector<2x32xf32>
    %349 = vector.extract_strided_slice %342 {offsets = [0, 32], sizes = [2, 32], strides = [1, 1]} : vector<2x128xf32> to vector<2x32xf32>
    %350 = arith.negf %349 : vector<2x32xf32>
    %351 = math.exp %350 : vector<2x32xf32>
    %cst_117 = arith.constant 1.000000e+00 : f32
    %352 = vector.broadcast %cst_117 : f32 to vector<2x32xf32>
    %353 = arith.addf %352, %351 : vector<2x32xf32>
    %354 = arith.divf %352, %353 : vector<2x32xf32>
    %355 = vector.extract_strided_slice %342 {offsets = [0, 64], sizes = [2, 32], strides = [1, 1]} : vector<2x128xf32> to vector<2x32xf32>
    %356 = math.tanh %355 : vector<2x32xf32>
    %357 = vector.extract_strided_slice %342 {offsets = [0, 96], sizes = [2, 32], strides = [1, 1]} : vector<2x128xf32> to vector<2x32xf32>
    %358 = arith.negf %357 : vector<2x32xf32>
    %359 = math.exp %358 : vector<2x32xf32>
    %cst_118 = arith.constant 1.000000e+00 : f32
    %360 = vector.broadcast %cst_118 : f32 to vector<2x32xf32>
    %361 = arith.addf %360, %359 : vector<2x32xf32>
    %362 = arith.divf %360, %361 : vector<2x32xf32>
    %363 = arith.mulf %354, %293 : vector<2x32xf32>
    %364 = arith.mulf %348, %356 : vector<2x32xf32>
    %365 = arith.addf %363, %364 : vector<2x32xf32>
    %366 = math.tanh %365 : vector<2x32xf32>
    %367 = arith.mulf %362, %366 : vector<2x32xf32>
    %368 = arith.truncf %335 : vector<2x32xf32> to vector<2x32xbf16>
    %c4_119 = arith.constant 4 : index
    %c0_120 = arith.constant 0 : index
    %c0_121 = arith.constant 0 : index
    %369 = vector.load %arg6[%c4_119, %c0_120, %c0_121] : memref<8x2x64xbf16, #tpu.memory_space<vmem>>, vector<1x2x32xbf16>
    %370 = vector.shape_cast %369 : vector<1x2x32xbf16> to vector<2x32xbf16>
    %371 = vector.shape_cast %368 : vector<2x32xbf16> to vector<1x2x32xbf16>
    tpu.vector_store %arg6[%c4_119, %c0_120, %c0_121], %371 {strides = array<i32>} : memref<8x2x64xbf16, #tpu.memory_space<vmem>>, vector<1x2x32xbf16>,
    %372 = arith.truncf %367 : vector<2x32xf32> to vector<2x32xbf16>
    %c3_122 = arith.constant 3 : index
    %c0_123 = arith.constant 0 : index
    %c32_124 = arith.constant 32 : index
    %373 = vector.load %arg6[%c3_122, %c0_123, %c32_124] : memref<8x2x64xbf16, #tpu.memory_space<vmem>>, vector<1x2x32xbf16>
    %374 = vector.shape_cast %373 : vector<1x2x32xbf16> to vector<2x32xbf16>
    %375 = vector.shape_cast %372 : vector<2x32xbf16> to vector<1x2x32xbf16>
    tpu.vector_store %arg6[%c3_122, %c0_123, %c32_124], %375 {strides = array<i32>} : memref<8x2x64xbf16, #tpu.memory_space<vmem>>, vector<1x2x32xbf16>,
    %c5_125 = arith.constant 5 : index
    %c0_126 = arith.constant 0 : index
    %c0_127 = arith.constant 0 : index
    %376 = vector.load %arg7[%c5_125, %c0_126, %c0_127] : memref<8x2x128xbf16, #tpu.memory_space<vmem>>, vector<1x2x128xbf16>
    %377 = vector.shape_cast %376 : vector<1x2x128xbf16> to vector<2x128xbf16>
    %378 = arith.truncf %335 : vector<2x32xf32> to vector<2x32xbf16>
    %c0_128 = arith.constant 0 : index
    %c0_129 = arith.constant 0 : index
    %379 = vector.load %arg4[%c0_128, %c0_129] : memref<32x128xbf16, #tpu.memory_space<vmem>>, vector<32x128xbf16>
    %cst_130 = arith.constant dense<0.000000e+00> : vector<2x128xf32>
    %380 = tpu.matmul %378, %379, %cst_130 {dimension_numbers = #tpu.dot_dimension_numbers<[1], [0], [0], [1], [0, 0, 1, 1], [], []>} : vector<2x32xbf16>, vector<32x128xbf16>, vector<2x128xf32> -> vector<2x128xf32>
    %381 = arith.extf %377 : vector<2x128xbf16> to vector<2x128xf32>
    %382 = arith.addf %381, %380 : vector<2x128xf32>
    %383 = vector.extract_strided_slice %382 {offsets = [0, 0], sizes = [2, 32], strides = [1, 1]} : vector<2x128xf32> to vector<2x32xf32>
    %384 = arith.negf %383 : vector<2x32xf32>
    %385 = math.exp %384 : vector<2x32xf32>
    %cst_131 = arith.constant 1.000000e+00 : f32
    %386 = vector.broadcast %cst_131 : f32 to vector<2x32xf32>
    %387 = arith.addf %386, %385 : vector<2x32xf32>
    %388 = arith.divf %386, %387 : vector<2x32xf32>
    %389 = vector.extract_strided_slice %382 {offsets = [0, 32], sizes = [2, 32], strides = [1, 1]} : vector<2x128xf32> to vector<2x32xf32>
    %390 = arith.negf %389 : vector<2x32xf32>
    %391 = math.exp %390 : vector<2x32xf32>
    %cst_132 = arith.constant 1.000000e+00 : f32
    %392 = vector.broadcast %cst_132 : f32 to vector<2x32xf32>
    %393 = arith.addf %392, %391 : vector<2x32xf32>
    %394 = arith.divf %392, %393 : vector<2x32xf32>
    %395 = vector.extract_strided_slice %382 {offsets = [0, 64], sizes = [2, 32], strides = [1, 1]} : vector<2x128xf32> to vector<2x32xf32>
    %396 = math.tanh %395 : vector<2x32xf32>
    %397 = vector.extract_strided_slice %382 {offsets = [0, 96], sizes = [2, 32], strides = [1, 1]} : vector<2x128xf32> to vector<2x32xf32>
    %398 = arith.negf %397 : vector<2x32xf32>
    %399 = math.exp %398 : vector<2x32xf32>
    %cst_133 = arith.constant 1.000000e+00 : f32
    %400 = vector.broadcast %cst_133 : f32 to vector<2x32xf32>
    %401 = arith.addf %400, %399 : vector<2x32xf32>
    %402 = arith.divf %400, %401 : vector<2x32xf32>
    %403 = arith.mulf %394, %333 : vector<2x32xf32>
    %404 = arith.mulf %388, %396 : vector<2x32xf32>
    %405 = arith.addf %403, %404 : vector<2x32xf32>
    %406 = math.tanh %405 : vector<2x32xf32>
    %407 = arith.mulf %402, %406 : vector<2x32xf32>
    %c2_134 = arith.constant 2 : index
    %c0_135 = arith.constant 0 : index
    %c0_136 = arith.constant 0 : index
    %408 = vector.load %arg8[%c2_134, %c0_135, %c0_136] : memref<8x2x128xbf16, #tpu.memory_space<vmem>>, vector<1x2x128xbf16>
    %409 = vector.shape_cast %408 : vector<1x2x128xbf16> to vector<2x128xbf16>
    %410 = arith.truncf %367 : vector<2x32xf32> to vector<2x32xbf16>
    %c0_137 = arith.constant 0 : index
    %c0_138 = arith.constant 0 : index
    %411 = vector.load %arg5[%c0_137, %c0_138] : memref<32x128xbf16, #tpu.memory_space<vmem>>, vector<32x128xbf16>
    %cst_139 = arith.constant dense<0.000000e+00> : vector<2x128xf32>
    %412 = tpu.matmul %410, %411, %cst_139 {dimension_numbers = #tpu.dot_dimension_numbers<[1], [0], [0], [1], [0, 0, 1, 1], [], []>} : vector<2x32xbf16>, vector<32x128xbf16>, vector<2x128xf32> -> vector<2x128xf32>
    %413 = arith.extf %409 : vector<2x128xbf16> to vector<2x128xf32>
    %414 = arith.addf %413, %412 : vector<2x128xf32>
    %415 = vector.extract_strided_slice %414 {offsets = [0, 0], sizes = [2, 32], strides = [1, 1]} : vector<2x128xf32> to vector<2x32xf32>
    %416 = arith.negf %415 : vector<2x32xf32>
    %417 = math.exp %416 : vector<2x32xf32>
    %cst_140 = arith.constant 1.000000e+00 : f32
    %418 = vector.broadcast %cst_140 : f32 to vector<2x32xf32>
    %419 = arith.addf %418, %417 : vector<2x32xf32>
    %420 = arith.divf %418, %419 : vector<2x32xf32>
    %421 = vector.extract_strided_slice %414 {offsets = [0, 32], sizes = [2, 32], strides = [1, 1]} : vector<2x128xf32> to vector<2x32xf32>
    %422 = arith.negf %421 : vector<2x32xf32>
    %423 = math.exp %422 : vector<2x32xf32>
    %cst_141 = arith.constant 1.000000e+00 : f32
    %424 = vector.broadcast %cst_141 : f32 to vector<2x32xf32>
    %425 = arith.addf %424, %423 : vector<2x32xf32>
    %426 = arith.divf %424, %425 : vector<2x32xf32>
    %427 = vector.extract_strided_slice %414 {offsets = [0, 64], sizes = [2, 32], strides = [1, 1]} : vector<2x128xf32> to vector<2x32xf32>
    %428 = math.tanh %427 : vector<2x32xf32>
    %429 = vector.extract_strided_slice %414 {offsets = [0, 96], sizes = [2, 32], strides = [1, 1]} : vector<2x128xf32> to vector<2x32xf32>
    %430 = arith.negf %429 : vector<2x32xf32>
    %431 = math.exp %430 : vector<2x32xf32>
    %cst_142 = arith.constant 1.000000e+00 : f32
    %432 = vector.broadcast %cst_142 : f32 to vector<2x32xf32>
    %433 = arith.addf %432, %431 : vector<2x32xf32>
    %434 = arith.divf %432, %433 : vector<2x32xf32>
    %435 = arith.mulf %426, %365 : vector<2x32xf32>
    %436 = arith.mulf %420, %428 : vector<2x32xf32>
    %437 = arith.addf %435, %436 : vector<2x32xf32>
    %438 = math.tanh %437 : vector<2x32xf32>
    %439 = arith.mulf %434, %438 : vector<2x32xf32>
    %440 = arith.truncf %407 : vector<2x32xf32> to vector<2x32xbf16>
    %c5_143 = arith.constant 5 : index
    %c0_144 = arith.constant 0 : index
    %c0_145 = arith.constant 0 : index
    %441 = vector.load %arg6[%c5_143, %c0_144, %c0_145] : memref<8x2x64xbf16, #tpu.memory_space<vmem>>, vector<1x2x32xbf16>
    %442 = vector.shape_cast %441 : vector<1x2x32xbf16> to vector<2x32xbf16>
    %443 = vector.shape_cast %440 : vector<2x32xbf16> to vector<1x2x32xbf16>
    tpu.vector_store %arg6[%c5_143, %c0_144, %c0_145], %443 {strides = array<i32>} : memref<8x2x64xbf16, #tpu.memory_space<vmem>>, vector<1x2x32xbf16>,
    %444 = arith.truncf %439 : vector<2x32xf32> to vector<2x32xbf16>
    %c2_146 = arith.constant 2 : index
    %c0_147 = arith.constant 0 : index
    %c32_148 = arith.constant 32 : index
    %445 = vector.load %arg6[%c2_146, %c0_147, %c32_148] : memref<8x2x64xbf16, #tpu.memory_space<vmem>>, vector<1x2x32xbf16>
    %446 = vector.shape_cast %445 : vector<1x2x32xbf16> to vector<2x32xbf16>
    %447 = vector.shape_cast %444 : vector<2x32xbf16> to vector<1x2x32xbf16>
    tpu.vector_store %arg6[%c2_146, %c0_147, %c32_148], %447 {strides = array<i32>} : memref<8x2x64xbf16, #tpu.memory_space<vmem>>, vector<1x2x32xbf16>,
    %c6_149 = arith.constant 6 : index
    %c0_150 = arith.constant 0 : index
    %c0_151 = arith.constant 0 : index
    %448 = vector.load %arg7[%c6_149, %c0_150, %c0_151] : memref<8x2x128xbf16, #tpu.memory_space<vmem>>, vector<1x2x128xbf16>
    %449 = vector.shape_cast %448 : vector<1x2x128xbf16> to vector<2x128xbf16>
    %450 = arith.truncf %407 : vector<2x32xf32> to vector<2x32xbf16>
    %c0_152 = arith.constant 0 : index
    %c0_153 = arith.constant 0 : index
    %451 = vector.load %arg4[%c0_152, %c0_153] : memref<32x128xbf16, #tpu.memory_space<vmem>>, vector<32x128xbf16>
    %cst_154 = arith.constant dense<0.000000e+00> : vector<2x128xf32>
    %452 = tpu.matmul %450, %451, %cst_154 {dimension_numbers = #tpu.dot_dimension_numbers<[1], [0], [0], [1], [0, 0, 1, 1], [], []>} : vector<2x32xbf16>, vector<32x128xbf16>, vector<2x128xf32> -> vector<2x128xf32>
    %453 = arith.extf %449 : vector<2x128xbf16> to vector<2x128xf32>
    %454 = arith.addf %453, %452 : vector<2x128xf32>
    %455 = vector.extract_strided_slice %454 {offsets = [0, 0], sizes = [2, 32], strides = [1, 1]} : vector<2x128xf32> to vector<2x32xf32>
    %456 = arith.negf %455 : vector<2x32xf32>
    %457 = math.exp %456 : vector<2x32xf32>
    %cst_155 = arith.constant 1.000000e+00 : f32
    %458 = vector.broadcast %cst_155 : f32 to vector<2x32xf32>
    %459 = arith.addf %458, %457 : vector<2x32xf32>
    %460 = arith.divf %458, %459 : vector<2x32xf32>
    %461 = vector.extract_strided_slice %454 {offsets = [0, 32], sizes = [2, 32], strides = [1, 1]} : vector<2x128xf32> to vector<2x32xf32>
    %462 = arith.negf %461 : vector<2x32xf32>
    %463 = math.exp %462 : vector<2x32xf32>
    %cst_156 = arith.constant 1.000000e+00 : f32
    %464 = vector.broadcast %cst_156 : f32 to vector<2x32xf32>
    %465 = arith.addf %464, %463 : vector<2x32xf32>
    %466 = arith.divf %464, %465 : vector<2x32xf32>
    %467 = vector.extract_strided_slice %454 {offsets = [0, 64], sizes = [2, 32], strides = [1, 1]} : vector<2x128xf32> to vector<2x32xf32>
    %468 = math.tanh %467 : vector<2x32xf32>
    %469 = vector.extract_strided_slice %454 {offsets = [0, 96], sizes = [2, 32], strides = [1, 1]} : vector<2x128xf32> to vector<2x32xf32>
    %470 = arith.negf %469 : vector<2x32xf32>
    %471 = math.exp %470 : vector<2x32xf32>
    %cst_157 = arith.constant 1.000000e+00 : f32
    %472 = vector.broadcast %cst_157 : f32 to vector<2x32xf32>
    %473 = arith.addf %472, %471 : vector<2x32xf32>
    %474 = arith.divf %472, %473 : vector<2x32xf32>
    %475 = arith.mulf %466, %405 : vector<2x32xf32>
    %476 = arith.mulf %460, %468 : vector<2x32xf32>
    %477 = arith.addf %475, %476 : vector<2x32xf32>
    %478 = math.tanh %477 : vector<2x32xf32>
    %479 = arith.mulf %474, %478 : vector<2x32xf32>
    %c1_158 = arith.constant 1 : index
    %c0_159 = arith.constant 0 : index
    %c0_160 = arith.constant 0 : index
    %480 = vector.load %arg8[%c1_158, %c0_159, %c0_160] : memref<8x2x128xbf16, #tpu.memory_space<vmem>>, vector<1x2x128xbf16>
    %481 = vector.shape_cast %480 : vector<1x2x128xbf16> to vector<2x128xbf16>
    %482 = arith.truncf %439 : vector<2x32xf32> to vector<2x32xbf16>
    %c0_161 = arith.constant 0 : index
    %c0_162 = arith.constant 0 : index
    %483 = vector.load %arg5[%c0_161, %c0_162] : memref<32x128xbf16, #tpu.memory_space<vmem>>, vector<32x128xbf16>
    %cst_163 = arith.constant dense<0.000000e+00> : vector<2x128xf32>
    %484 = tpu.matmul %482, %483, %cst_163 {dimension_numbers = #tpu.dot_dimension_numbers<[1], [0], [0], [1], [0, 0, 1, 1], [], []>} : vector<2x32xbf16>, vector<32x128xbf16>, vector<2x128xf32> -> vector<2x128xf32>
    %485 = arith.extf %481 : vector<2x128xbf16> to vector<2x128xf32>
    %486 = arith.addf %485, %484 : vector<2x128xf32>
    %487 = vector.extract_strided_slice %486 {offsets = [0, 0], sizes = [2, 32], strides = [1, 1]} : vector<2x128xf32> to vector<2x32xf32>
    %488 = arith.negf %487 : vector<2x32xf32>
    %489 = math.exp %488 : vector<2x32xf32>
    %cst_164 = arith.constant 1.000000e+00 : f32
    %490 = vector.broadcast %cst_164 : f32 to vector<2x32xf32>
    %491 = arith.addf %490, %489 : vector<2x32xf32>
    %492 = arith.divf %490, %491 : vector<2x32xf32>
    %493 = vector.extract_strided_slice %486 {offsets = [0, 32], sizes = [2, 32], strides = [1, 1]} : vector<2x128xf32> to vector<2x32xf32>
    %494 = arith.negf %493 : vector<2x32xf32>
    %495 = math.exp %494 : vector<2x32xf32>
    %cst_165 = arith.constant 1.000000e+00 : f32
    %496 = vector.broadcast %cst_165 : f32 to vector<2x32xf32>
    %497 = arith.addf %496, %495 : vector<2x32xf32>
    %498 = arith.divf %496, %497 : vector<2x32xf32>
    %499 = vector.extract_strided_slice %486 {offsets = [0, 64], sizes = [2, 32], strides = [1, 1]} : vector<2x128xf32> to vector<2x32xf32>
    %500 = math.tanh %499 : vector<2x32xf32>
    %501 = vector.extract_strided_slice %486 {offsets = [0, 96], sizes = [2, 32], strides = [1, 1]} : vector<2x128xf32> to vector<2x32xf32>
    %502 = arith.negf %501 : vector<2x32xf32>
    %503 = math.exp %502 : vector<2x32xf32>
    %cst_166 = arith.constant 1.000000e+00 : f32
    %504 = vector.broadcast %cst_166 : f32 to vector<2x32xf32>
    %505 = arith.addf %504, %503 : vector<2x32xf32>
    %506 = arith.divf %504, %505 : vector<2x32xf32>
    %507 = arith.mulf %498, %437 : vector<2x32xf32>
    %508 = arith.mulf %492, %500 : vector<2x32xf32>
    %509 = arith.addf %507, %508 : vector<2x32xf32>
    %510 = math.tanh %509 : vector<2x32xf32>
    %511 = arith.mulf %506, %510 : vector<2x32xf32>
    %512 = arith.truncf %479 : vector<2x32xf32> to vector<2x32xbf16>
    %c6_167 = arith.constant 6 : index
    %c0_168 = arith.constant 0 : index
    %c0_169 = arith.constant 0 : index
    %513 = vector.load %arg6[%c6_167, %c0_168, %c0_169] : memref<8x2x64xbf16, #tpu.memory_space<vmem>>, vector<1x2x32xbf16>
    %514 = vector.shape_cast %513 : vector<1x2x32xbf16> to vector<2x32xbf16>
    %515 = vector.shape_cast %512 : vector<2x32xbf16> to vector<1x2x32xbf16>
    tpu.vector_store %arg6[%c6_167, %c0_168, %c0_169], %515 {strides = array<i32>} : memref<8x2x64xbf16, #tpu.memory_space<vmem>>, vector<1x2x32xbf16>,
    %516 = arith.truncf %511 : vector<2x32xf32> to vector<2x32xbf16>
    %c1_170 = arith.constant 1 : index
    %c0_171 = arith.constant 0 : index
    %c32_172 = arith.constant 32 : index
    %517 = vector.load %arg6[%c1_170, %c0_171, %c32_172] : memref<8x2x64xbf16, #tpu.memory_space<vmem>>, vector<1x2x32xbf16>
    %518 = vector.shape_cast %517 : vector<1x2x32xbf16> to vector<2x32xbf16>
    %519 = vector.shape_cast %516 : vector<2x32xbf16> to vector<1x2x32xbf16>
    tpu.vector_store %arg6[%c1_170, %c0_171, %c32_172], %519 {strides = array<i32>} : memref<8x2x64xbf16, #tpu.memory_space<vmem>>, vector<1x2x32xbf16>,
    %c7_173 = arith.constant 7 : index
    %c0_174 = arith.constant 0 : index
    %c0_175 = arith.constant 0 : index
    %520 = vector.load %arg7[%c7_173, %c0_174, %c0_175] : memref<8x2x128xbf16, #tpu.memory_space<vmem>>, vector<1x2x128xbf16>
    %521 = vector.shape_cast %520 : vector<1x2x128xbf16> to vector<2x128xbf16>
    %522 = arith.truncf %479 : vector<2x32xf32> to vector<2x32xbf16>
    %c0_176 = arith.constant 0 : index
    %c0_177 = arith.constant 0 : index
    %523 = vector.load %arg4[%c0_176, %c0_177] : memref<32x128xbf16, #tpu.memory_space<vmem>>, vector<32x128xbf16>
    %cst_178 = arith.constant dense<0.000000e+00> : vector<2x128xf32>
    %524 = tpu.matmul %522, %523, %cst_178 {dimension_numbers = #tpu.dot_dimension_numbers<[1], [0], [0], [1], [0, 0, 1, 1], [], []>} : vector<2x32xbf16>, vector<32x128xbf16>, vector<2x128xf32> -> vector<2x128xf32>
    %525 = arith.extf %521 : vector<2x128xbf16> to vector<2x128xf32>
    %526 = arith.addf %525, %524 : vector<2x128xf32>
    %527 = vector.extract_strided_slice %526 {offsets = [0, 0], sizes = [2, 32], strides = [1, 1]} : vector<2x128xf32> to vector<2x32xf32>
    %528 = arith.negf %527 : vector<2x32xf32>
    %529 = math.exp %528 : vector<2x32xf32>
    %cst_179 = arith.constant 1.000000e+00 : f32
    %530 = vector.broadcast %cst_179 : f32 to vector<2x32xf32>
    %531 = arith.addf %530, %529 : vector<2x32xf32>
    %532 = arith.divf %530, %531 : vector<2x32xf32>
    %533 = vector.extract_strided_slice %526 {offsets = [0, 32], sizes = [2, 32], strides = [1, 1]} : vector<2x128xf32> to vector<2x32xf32>
    %534 = arith.negf %533 : vector<2x32xf32>
    %535 = math.exp %534 : vector<2x32xf32>
    %cst_180 = arith.constant 1.000000e+00 : f32
    %536 = vector.broadcast %cst_180 : f32 to vector<2x32xf32>
    %537 = arith.addf %536, %535 : vector<2x32xf32>
    %538 = arith.divf %536, %537 : vector<2x32xf32>
    %539 = vector.extract_strided_slice %526 {offsets = [0, 64], sizes = [2, 32], strides = [1, 1]} : vector<2x128xf32> to vector<2x32xf32>
    %540 = math.tanh %539 : vector<2x32xf32>
    %541 = vector.extract_strided_slice %526 {offsets = [0, 96], sizes = [2, 32], strides = [1, 1]} : vector<2x128xf32> to vector<2x32xf32>
    %542 = arith.negf %541 : vector<2x32xf32>
    %543 = math.exp %542 : vector<2x32xf32>
    %cst_181 = arith.constant 1.000000e+00 : f32
    %544 = vector.broadcast %cst_181 : f32 to vector<2x32xf32>
    %545 = arith.addf %544, %543 : vector<2x32xf32>
    %546 = arith.divf %544, %545 : vector<2x32xf32>
    %547 = arith.mulf %538, %477 : vector<2x32xf32>
    %548 = arith.mulf %532, %540 : vector<2x32xf32>
    %549 = arith.addf %547, %548 : vector<2x32xf32>
    %550 = math.tanh %549 : vector<2x32xf32>
    %551 = arith.mulf %546, %550 : vector<2x32xf32>
    %c0_182 = arith.constant 0 : index
    %c0_183 = arith.constant 0 : index
    %c0_184 = arith.constant 0 : index
    %552 = vector.load %arg8[%c0_182, %c0_183, %c0_184] : memref<8x2x128xbf16, #tpu.memory_space<vmem>>, vector<1x2x128xbf16>
    %553 = vector.shape_cast %552 : vector<1x2x128xbf16> to vector<2x128xbf16>
    %554 = arith.truncf %511 : vector<2x32xf32> to vector<2x32xbf16>
    %c0_185 = arith.constant 0 : index
    %c0_186 = arith.constant 0 : index
    %555 = vector.load %arg5[%c0_185, %c0_186] : memref<32x128xbf16, #tpu.memory_space<vmem>>, vector<32x128xbf16>
    %cst_187 = arith.constant dense<0.000000e+00> : vector<2x128xf32>
    %556 = tpu.matmul %554, %555, %cst_187 {dimension_numbers = #tpu.dot_dimension_numbers<[1], [0], [0], [1], [0, 0, 1, 1], [], []>} : vector<2x32xbf16>, vector<32x128xbf16>, vector<2x128xf32> -> vector<2x128xf32>
    %557 = arith.extf %553 : vector<2x128xbf16> to vector<2x128xf32>
    %558 = arith.addf %557, %556 : vector<2x128xf32>
    %559 = vector.extract_strided_slice %558 {offsets = [0, 0], sizes = [2, 32], strides = [1, 1]} : vector<2x128xf32> to vector<2x32xf32>
    %560 = arith.negf %559 : vector<2x32xf32>
    %561 = math.exp %560 : vector<2x32xf32>
    %cst_188 = arith.constant 1.000000e+00 : f32
    %562 = vector.broadcast %cst_188 : f32 to vector<2x32xf32>
    %563 = arith.addf %562, %561 : vector<2x32xf32>
    %564 = arith.divf %562, %563 : vector<2x32xf32>
    %565 = vector.extract_strided_slice %558 {offsets = [0, 32], sizes = [2, 32], strides = [1, 1]} : vector<2x128xf32> to vector<2x32xf32>
    %566 = arith.negf %565 : vector<2x32xf32>
    %567 = math.exp %566 : vector<2x32xf32>
    %cst_189 = arith.constant 1.000000e+00 : f32
    %568 = vector.broadcast %cst_189 : f32 to vector<2x32xf32>
    %569 = arith.addf %568, %567 : vector<2x32xf32>
    %570 = arith.divf %568, %569 : vector<2x32xf32>
    %571 = vector.extract_strided_slice %558 {offsets = [0, 64], sizes = [2, 32], strides = [1, 1]} : vector<2x128xf32> to vector<2x32xf32>
    %572 = math.tanh %571 : vector<2x32xf32>
    %573 = vector.extract_strided_slice %558 {offsets = [0, 96], sizes = [2, 32], strides = [1, 1]} : vector<2x128xf32> to vector<2x32xf32>
    %574 = arith.negf %573 : vector<2x32xf32>
    %575 = math.exp %574 : vector<2x32xf32>
    %cst_190 = arith.constant 1.000000e+00 : f32
    %576 = vector.broadcast %cst_190 : f32 to vector<2x32xf32>
    %577 = arith.addf %576, %575 : vector<2x32xf32>
    %578 = arith.divf %576, %577 : vector<2x32xf32>
    %579 = arith.mulf %570, %509 : vector<2x32xf32>
    %580 = arith.mulf %564, %572 : vector<2x32xf32>
    %581 = arith.addf %579, %580 : vector<2x32xf32>
    %582 = math.tanh %581 : vector<2x32xf32>
    %583 = arith.mulf %578, %582 : vector<2x32xf32>
    %584 = arith.truncf %551 : vector<2x32xf32> to vector<2x32xbf16>
    %c7_191 = arith.constant 7 : index
    %c0_192 = arith.constant 0 : index
    %c0_193 = arith.constant 0 : index
    %585 = vector.load %arg6[%c7_191, %c0_192, %c0_193] : memref<8x2x64xbf16, #tpu.memory_space<vmem>>, vector<1x2x32xbf16>
    %586 = vector.shape_cast %585 : vector<1x2x32xbf16> to vector<2x32xbf16>
    %587 = vector.shape_cast %584 : vector<2x32xbf16> to vector<1x2x32xbf16>
    tpu.vector_store %arg6[%c7_191, %c0_192, %c0_193], %587 {strides = array<i32>} : memref<8x2x64xbf16, #tpu.memory_space<vmem>>, vector<1x2x32xbf16>,
    %588 = arith.truncf %583 : vector<2x32xf32> to vector<2x32xbf16>
    %c0_194 = arith.constant 0 : index
    %c0_195 = arith.constant 0 : index
    %c32_196 = arith.constant 32 : index
    %589 = vector.load %arg6[%c0_194, %c0_195, %c32_196] : memref<8x2x64xbf16, #tpu.memory_space<vmem>>, vector<1x2x32xbf16>
    %590 = vector.shape_cast %589 : vector<1x2x32xbf16> to vector<2x32xbf16>
    %591 = vector.shape_cast %588 : vector<2x32xbf16> to vector<1x2x32xbf16>
    tpu.vector_store %arg6[%c0_194, %c0_195, %c32_196], %591 {strides = array<i32>} : memref<8x2x64xbf16, #tpu.memory_space<vmem>>, vector<1x2x32xbf16>,
    return
  }
  func.func @transform_0(%arg0: i32) -> (i32, i32, i32) {
    %c0_i32 = arith.constant 0 : i32
    %c0_i32_0 = arith.constant 0 : i32
    %c0_i32_1 = arith.constant 0 : i32
    return %c0_i32, %arg0, %c0_i32_0 : i32, i32, i32
  }
  func.func @transform_1(%arg0: i32) -> (i32, i32) {
    %c0_i32 = arith.constant 0 : i32
    %c0_i32_0 = arith.constant 0 : i32
    %c0_i32_1 = arith.constant 0 : i32
    return %c0_i32, %c0_i32_0 : i32, i32
  }
  func.func @transform_2(%arg0: i32) -> (i32, i32) {
    %c0_i32 = arith.constant 0 : i32
    %c0_i32_0 = arith.constant 0 : i32
    %c0_i32_1 = arith.constant 0 : i32
    return %c0_i32, %c0_i32_0 : i32, i32
  }
  func.func @transform_3(%arg0: i32) -> (i32, i32) {
    %c0_i32 = arith.constant 0 : i32
    %c0_i32_0 = arith.constant 0 : i32
    %c0_i32_1 = arith.constant 0 : i32
    return %c0_i32, %c0_i32_0 : i32, i32
  }
  func.func @transform_4(%arg0: i32) -> (i32, i32) {
    %c0_i32 = arith.constant 0 : i32
    %c0_i32_0 = arith.constant 0 : i32
    %c0_i32_1 = arith.constant 0 : i32
    return %c0_i32, %c0_i32_0 : i32, i32
  }
  func.func @transform_5(%arg0: i32) -> (i32, i32, i32) {
    %c0_i32 = arith.constant 0 : i32
    %c0_i32_0 = arith.constant 0 : i32
    %c0_i32_1 = arith.constant 0 : i32
    return %c0_i32, %arg0, %c0_i32_0 : i32, i32, i32
  }
}

</mosaic_0001>

<llo_original>
// kernel: deepsignal_rnn_forward.3
$region0: #{deepsignal_rnn_forward.3}
  #allocation0 [shape = 'u32[]', space=smem, size = 0x4, offset = 0x4, fixed_abs, tag = 'smem constant byte address 0x4 - core index']
  #allocation1 [shape = 'u32[72,128]{1,0:T(1,128)}', space=vmem, size = 0x9000, scoped, tag = 'internal scratch']
  #allocation2 [shape = 'bf16[8,2,128]{2,1,0:T(2,128)(2,1)}', space=vmem, size = 0x1000, scoped, tag = 'scratch operand']
  #allocation3 [shape = 'bf16[8,2,128]{2,1,0:T(2,128)(2,1)}', space=vmem, size = 0x1000, scoped, tag = 'scratch operand']
  %s0 = inlined_call_operand.vmem [shape: bf16[8,2,64], index: 0, kind: input, shape index: {}]
  %s1 = inlined_call_operand.vmem [shape: bf16[64,256], index: 1, kind: input, shape index: {}]
  %s2 = inlined_call_operand.vmem [shape: f32[1,256], index: 2, kind: input, shape index: {}]
  %s3 = inlined_call_operand.vmem [shape: bf16[32,128], index: 3, kind: input, shape index: {}]
  %s4 = inlined_call_operand.vmem [shape: bf16[32,128], index: 4, kind: input, shape index: {}]
  %s5 = inlined_call_operand.hbm [shape: f32[2,64], index: 5, kind: output, shape index: {}]
  %s6 = sld [smem:[#allocation0]]
  $region30: #{deepsignal_rnn_forward.3} parent=0
    _
  %s8 = ssub.s32 1, %s6
  %s9 = scalar_select 0, %s8, %s6
  $region1: #{deepsignal_rnn_forward.3} parent=0
    #allocation4 [shape = 'u8[1024]{0}', space=vmem, size = 0x400, scoped, tag = 'output window, operand 0, single buffered']
    #allocation5 [shape = 's32[1]{0}', space=sflag, size = 0x4, scoped, tag = 'scoped memory for deepsignal_rnn_forward.3']
    %10 = vsyncpa [#allocation5], 0
    // Predicated region
    $region2: #{deepsignal_rnn_forward.3} parent=1 // pred_check
      _
    $region3: #{deepsignal_rnn_forward.3} parent=1 // pred_check_branch
      %12 = sbr.rel (0) target = $region5
    $region4: #{deepsignal_rnn_forward.3} parent=1 // pred_region
      _
    $region5: #{deepsignal_rnn_forward.3} parent=1 // pred_fallthru
      _
    // Predicated region
    $region6: #{deepsignal_rnn_forward.3} parent=1 // pred_check
      _
    $region7: #{deepsignal_rnn_forward.3} parent=1 // pred_check_branch
      %14 = sbr.rel (0) target = $region9
    $region8: #{deepsignal_rnn_forward.3} parent=1 // pred_region
      _
    $region9: #{deepsignal_rnn_forward.3} parent=1 // pred_fallthru
      _
    // Predicated region
    $region10: #{deepsignal_rnn_forward.3} parent=1 // pred_check
      _
    $region11: #{deepsignal_rnn_forward.3} parent=1 // pred_check_branch
      %16 = sbr.rel (0) target = $region13
    $region12: #{deepsignal_rnn_forward.3} parent=1 // pred_region
      _
    $region13: #{deepsignal_rnn_forward.3} parent=1 // pred_fallthru
      _
    // Predicated region
    $region14: #{deepsignal_rnn_forward.3} parent=1 // pred_check
      _
    $region15: #{deepsignal_rnn_forward.3} parent=1 // pred_check_branch
      %18 = sbr.rel (0) target = $region17
    $region16: #{deepsignal_rnn_forward.3} parent=1 // pred_region
      _
    $region17: #{deepsignal_rnn_forward.3} parent=1 // pred_fallthru
      _
    // Predicated region
    $region18: #{deepsignal_rnn_forward.3} parent=1 // pred_check
      _
    $region19: #{deepsignal_rnn_forward.3} parent=1 // pred_check_branch
      %20 = sbr.rel (0) target = $region21
    $region20: #{deepsignal_rnn_forward.3} parent=1 // pred_region
      _
    $region21: #{deepsignal_rnn_forward.3} parent=1 // pred_fallthru
      _
    %v22 = vld [vmem:[%s0] sm:$0x1]
    %v23 = vld [vmem:[%s0 + $0x1] sm:$0x1]
    %v24 = vld [vmem:[%s0 + $0x2] sm:$0x1]
    %v25 = vld [vmem:[%s0 + $0x3] sm:$0x1]
    %v26 = vld [vmem:[%s0 + $0x4] sm:$0x1]
    %v27 = vld [vmem:[%s0 + $0x5] sm:$0x1]
    %v28 = vld [vmem:[%s0 + $0x6] sm:$0x1]
    %v29 = vld [vmem:[%s0 + $0x7] sm:$0x1]
    %v30 = vld [vmem:[%s1] sm:$0xff]
    %v31 = vld [vmem:[%s1 + $0x8] sm:$0xff]
    %v32 = vld [vmem:[%s1 + $0x10] sm:$0xff]
    %v33 = vld [vmem:[%s1 + $0x18] sm:$0xff]
    %v34 = vld [vmem:[%s1 + $0x20] sm:$0xff]
    %v35 = vld [vmem:[%s1 + $0x28] sm:$0xff]
    %v36 = vld [vmem:[%s1 + $0x30] sm:$0xff]
    %v37 = vld [vmem:[%s1 + $0x38] sm:$0xff]
    %v38 = vld [vmem:[%s2] sm:$0x3]
    %v40 = vperm.slane %v38, 0
    %v41 = vperm.slane %v38, 1
    %45 = vst [vmem:[#allocation1] ss:$9 sm:$0xff] %v22
    %s47 = scalar_lea.vmem [#allocation1], 1
    %48 = vst [vmem:[%s47] ss:$9 sm:$0xff] %v23
    %s50 = scalar_lea.vmem [#allocation1], 2
    %51 = vst [vmem:[%s50] ss:$9 sm:$0xff] %v24
    %s53 = scalar_lea.vmem [#allocation1], 3
    %54 = vst [vmem:[%s53] ss:$9 sm:$0xff] %v25
    %s56 = scalar_lea.vmem [#allocation1], 4
    %57 = vst [vmem:[%s56] ss:$9 sm:$0xff] %v26
    %s59 = scalar_lea.vmem [#allocation1], 5
    %60 = vst [vmem:[%s59] ss:$9 sm:$0xff] %v27
    %s62 = scalar_lea.vmem [#allocation1], 6
    %63 = vst [vmem:[%s62] ss:$9 sm:$0xff] %v28
    %s65 = scalar_lea.vmem [#allocation1], 7
    %66 = vst [vmem:[%s65] ss:$9 sm:$0xff] %v29
    %v67 = vld [vmem:[#allocation1] sm:$0xff]
    %v76 = vunpack.c.l.b16 %v30
    %v77 = vunpack.c.h.b16 %v30
    %v78 = vunpack.c.l.b16 %v31
    %v79 = vunpack.c.h.b16 %v31
    %v80 = vunpack.c.l.b16 %v32
    %v81 = vunpack.c.h.b16 %v32
    %v82 = vunpack.c.l.b16 %v33
    %v83 = vunpack.c.h.b16 %v33
    %v84 = vunpack.c.l.b16 %v34
    %v85 = vunpack.c.h.b16 %v34
    %v86 = vunpack.c.l.b16 %v35
    %v87 = vunpack.c.h.b16 %v35
    %v88 = vunpack.c.l.b16 %v36
    %v89 = vunpack.c.h.b16 %v36
    %v90 = vunpack.c.l.b16 %v37
    %v91 = vunpack.c.h.b16 %v37
    %v92 = vpack.c.b16 %v78, %v76
    %v93 = vpack.c.b16 %v79, %v77
    %v94 = vpack.c.b16 %v82, %v80
    %v95 = vpack.c.b16 %v83, %v81
    %v96 = vpack.c.b16 %v86, %v84
    %v97 = vpack.c.b16 %v87, %v85
    %v98 = vpack.c.b16 %v90, %v88
    %v99 = vpack.c.b16 %v91, %v89
    %vm108 = vcmask 523264
    %v109 = vsel %vm108, %v67, 0
    %111 = vmatpush.bf16.msra.mxu0 0
    %112 = vmatpush.bf16.msra.mxu0 0
    %113 = vmatpush.bf16.msra.mxu0 0
    %114 = vmatpush.bf16.msra.mxu0 0
    %115 = vmatpush.bf16.msra.mxu0 %v98
    %116 = vmatpush.bf16.msra.mxu0 %v96
    %117 = vmatpush.bf16.msra.mxu0 %v94
    %118 = vmatpush.bf16.msra.mxu0 %v92
    %119 = vmatmul.bf16.gmra.mxu0 %v109
    %v120 = vpop.f32.mrf.mxu0
    %v121 = vadd.f32 %v40, %v120
    %v122 = vpop.f32.mrf.mxu0
    %v123 = vadd.f32 %v40, %v122
    %124 = vdwg.mxu0
    %125 = vmatpush.bf16.msra.mxu0 0
    %126 = vmatpush.bf16.msra.mxu0 0
    %127 = vmatpush.bf16.msra.mxu0 0
    %128 = vmatpush.bf16.msra.mxu0 0
    %129 = vmatpush.bf16.msra.mxu0 %v99
    %130 = vmatpush.bf16.msra.mxu0 %v97
    %131 = vmatpush.bf16.msra.mxu0 %v95
    %132 = vmatpush.bf16.msra.mxu0 %v93
    %133 = vmatmul.bf16.gmra.mxu0 %v109
    %v134 = vpop.f32.mrf.mxu0
    %v135 = vadd.f32 %v41, %v134
    %v136 = vpop.f32.mrf.mxu0
    %v137 = vadd.f32 %v41, %v136
    %138 = vdwg.mxu0
    %v141 = vrot.slane %v121, 2
    %v142 = vrot.slane %v121, 4
    %v143 = vrot.slane %v121, 6
    %v144 = vrot.slane %v123, 2
    %v145 = vrot.slane %v123, 4
    %v146 = vrot.slane %v123, 6
    %v153 = vpack.c.bf16 %v121, %v121
    %v154 = vpack.c.bf16 %v141, %v141
    %v155 = vpack.c.bf16 %v142, %v142
    %v156 = vpack.c.bf16 %v143, %v143
    %v157 = vpack.c.bf16 %v123, %v123
    %v158 = vpack.c.bf16 %v144, %v144
    %v159 = vpack.c.bf16 %v145, %v145
    %v160 = vpack.c.bf16 %v146, %v146
    %161 = vst [vmem:[#allocation2] sm:$0x1] %v153
    %162 = vst [vmem:[#allocation2 + $0x1] sm:$0x1] %v154
    %163 = vst [vmem:[#allocation2 + $0x2] sm:$0x1] %v155
    %164 = vst [vmem:[#allocation2 + $0x3] sm:$0x1] %v156
    %165 = vst [vmem:[#allocation2 + $0x4] sm:$0x1] %v157
    %166 = vst [vmem:[#allocation2 + $0x5] sm:$0x1] %v158
    %167 = vst [vmem:[#allocation2 + $0x6] sm:$0x1] %v159
    %168 = vst [vmem:[#allocation2 + $0x7] sm:$0x1] %v160
    %v171 = vrot.slane %v135, 2
    %v172 = vrot.slane %v135, 4
    %v173 = vrot.slane %v135, 6
    %v174 = vrot.slane %v137, 2
    %v175 = vrot.slane %v137, 4
    %v176 = vrot.slane %v137, 6
    %v183 = vpack.c.bf16 %v135, %v135
    %v184 = vpack.c.bf16 %v171, %v171
    %v185 = vpack.c.bf16 %v172, %v172
    %v186 = vpack.c.bf16 %v173, %v173
    %v187 = vpack.c.bf16 %v137, %v137
    %v188 = vpack.c.bf16 %v174, %v174
    %v189 = vpack.c.bf16 %v175, %v175
    %v190 = vpack.c.bf16 %v176, %v176
    %191 = vst [vmem:[#allocation3] sm:$0x1] %v183
    %192 = vst [vmem:[#allocation3 + $0x1] sm:$0x1] %v184
    %193 = vst [vmem:[#allocation3 + $0x2] sm:$0x1] %v185
    %194 = vst [vmem:[#allocation3 + $0x3] sm:$0x1] %v186
    %195 = vst [vmem:[#allocation3 + $0x4] sm:$0x1] %v187
    %196 = vst [vmem:[#allocation3 + $0x5] sm:$0x1] %v188
    %197 = vst [vmem:[#allocation3 + $0x6] sm:$0x1] %v189
    %198 = vst [vmem:[#allocation3 + $0x7] sm:$0x1] %v190
    %v199 = vld [vmem:[#allocation2] sm:$0x1]
    %v200 = vld [vmem:[%s3] sm:$0xf]
    %v201 = vld [vmem:[%s3 + $0x4] sm:$0xf]
    %v202 = vld [vmem:[%s3 + $0x8] sm:$0xf]
    %v203 = vld [vmem:[%s3 + $0xc] sm:$0xf]
    %v208 = vunpack.c.l.b16 %v200
    %v209 = vunpack.c.l.b16 %v201
    %v210 = vunpack.c.l.b16 %v202
    %v211 = vunpack.c.l.b16 %v203
    %v212 = vpack.c.b16 %v209, %v208
    %v213 = vpack.c.b16 %v211, %v210
    %vm216 = vcmask 261120
    %v218 = vsel %vm216, 0, 0
    %220 = vmatpush.bf16.msra.mxu0 0
    %221 = vmatpush.bf16.msra.mxu0 0
    %222 = vmatpush.bf16.msra.mxu0 0
    %223 = vmatpush.bf16.msra.mxu0 0
    %224 = vmatpush.bf16.msra.mxu0 0
    %225 = vmatpush.bf16.msra.mxu0 0
    %226 = vmatpush.bf16.msra.mxu0 %v213
    %227 = vmatpush.bf16.msra.mxu0 %v212
    %228 = vmatmul.bf16.gmra.mxu0 %v218
    %v229 = vpop.f32.mrf.mxu0
    %v230 = vadd.f32 0.0, %v229
    %v231 = vpop.f32.mrf.mxu0
    %232 = vdwg.mxu0
    %v233 = vunpack.c.l.bf16 %v199
    %v234 = vadd.f32 %v233, %v230
    %v235 = vxor.u32 %v234, 2147483648
    %v236 = vmul.f32 %v235, 1.442695
    %v237 = vpow.pop %v236
    %v238 = vadd.f32 %v237, 1.0
    %v239 = vrcp.pop %v238
    %v240 = vmul.f32 %v238, %v239
    %v241 = vsub.f32 1.0, %v240
    %v242 = vmul.f32 %v239, %v241
    %v243 = vadd.f32 %v239, %v242
    %vm244 = vweird.f32 %v238
    %vm245 = vweird.f32 %v239
    %vm246 = vmor %vm244, %vm245
    %v247 = vsel %vm246, %v239, %v243
    %v248 = vand.u32 2147483647, %v238
    %vm249 = vcmp.eq.f32.partialorder %v248, 8.507059e+37
    %v250 = vand.u32 %v238, 2147483648
    %v251 = vor.u32 1.1754944e-38, %v250
    %v252 = vsel %vm249, %v251, %v247
    %v253 = vmul.f32 1.0, %v252
    %v254 = vtanh.pop %v234
    %v255 = vmul.f32 %v253, 0.0
    %257 = vrot.lane.b32.xlu0 %v254, 64
    %v258 = vpop.permute.xlu0 %257
    %v260 = vmul.f32 %v253, %v258
    %262 = vrot.lane.b32.xlu0 %v260, 32
    %v263 = vpop.permute.xlu0 %262
    %v265 = vadd.f32 %v255, %v263
    %v266 = vtanh.pop %v265
    %268 = vrot.lane.b32.xlu0 %v266, 64
    %v269 = vpop.permute.xlu0 %268
    %v271 = vmul.f32 %v253, %v269
    %s272 = scalar_lea.vmem [#allocation3], 7
    %v273 = vld [vmem:[%s272] sm:$0x1]
    %v274 = vld [vmem:[%s4] sm:$0xf]
    %v275 = vld [vmem:[%s4 + $0x4] sm:$0xf]
    %v276 = vld [vmem:[%s4 + $0x8] sm:$0xf]
    %v277 = vld [vmem:[%s4 + $0xc] sm:$0xf]
    %v282 = vunpack.c.l.b16 %v274
    %v283 = vunpack.c.l.b16 %v275
    %v284 = vunpack.c.l.b16 %v276
    %v285 = vunpack.c.l.b16 %v277
    %v286 = vpack.c.b16 %v283, %v282
    %v287 = vpack.c.b16 %v285, %v284
    %290 = vmatpush.bf16.msra.mxu0 0
    %291 = vmatpush.bf16.msra.mxu0 0
    %292 = vmatpush.bf16.msra.mxu0 0
    %293 = vmatpush.bf16.msra.mxu0 0
    %294 = vmatpush.bf16.msra.mxu0 0
    %295 = vmatpush.bf16.msra.mxu0 0
    %296 = vmatpush.bf16.msra.mxu0 %v287
    %297 = vmatpush.bf16.msra.mxu0 %v286
    %298 = vmatmul.bf16.gmra.mxu0 %v218
    %v299 = vpop.f32.mrf.mxu0
    %v300 = vadd.f32 0.0, %v299
    %v301 = vpop.f32.mrf.mxu0
    %302 = vdwg.mxu0
    %v303 = vunpack.c.l.bf16 %v273
    %v304 = vadd.f32 %v303, %v300
    %v305 = vxor.u32 %v304, 2147483648
    %v306 = vmul.f32 %v305, 1.442695
    %v307 = vpow.pop %v306
    %v308 = vadd.f32 %v307, 1.0
    %v309 = vrcp.pop %v308
    %v310 = vmul.f32 %v308, %v309
    %v311 = vsub.f32 1.0, %v310
    %v312 = vmul.f32 %v309, %v311
    %v313 = vadd.f32 %v309, %v312
    %vm314 = vweird.f32 %v308
    %vm315 = vweird.f32 %v309
    %vm316 = vmor %vm314, %vm315
    %v317 = vsel %vm316, %v309, %v313
    %v318 = vand.u32 2147483647, %v308
    %vm319 = vcmp.eq.f32.partialorder %v318, 8.507059e+37
    %v320 = vand.u32 %v308, 2147483648
    %v321 = vor.u32 1.1754944e-38, %v320
    %v322 = vsel %vm319, %v321, %v317
    %v323 = vmul.f32 1.0, %v322
    %v324 = vtanh.pop %v304
    %v325 = vmul.f32 %v323, 0.0
    %327 = vrot.lane.b32.xlu0 %v324, 64
    %v328 = vpop.permute.xlu0 %327
    %v330 = vmul.f32 %v323, %v328
    %332 = vrot.lane.b32.xlu0 %v330, 32
    %v333 = vpop.permute.xlu0 %332
    %v335 = vadd.f32 %v325, %v333
    %v336 = vtanh.pop %v335
    %338 = vrot.lane.b32.xlu0 %v336, 64
    %v339 = vpop.permute.xlu0 %338
    %v341 = vmul.f32 %v323, %v339
    %v342 = vadd.f32 %v271, 0.0
    %v343 = vadd.f32 %v341, 0.0
    %s344 = scalar_lea.vmem [#allocation2], 1
    %v345 = vld [vmem:[%s344] sm:$0x1]
    %v346 = vpack.c.bf16 %v271, %v271
    %348 = vrot.lane.b32.xlu0 %v346, 32
    %v349 = vpop.permute.xlu0 %348
    %v351 = vsel %vm216, %v349, 0
    %353 = vmatpush.bf16.msra.mxu0 0
    %354 = vmatpush.bf16.msra.mxu0 0
    %355 = vmatpush.bf16.msra.mxu0 0
    %356 = vmatpush.bf16.msra.mxu0 0
    %357 = vmatpush.bf16.msra.mxu0 0
    %358 = vmatpush.bf16.msra.mxu0 0
    %359 = vmatpush.bf16.msra.mxu0 %v213
    %360 = vmatpush.bf16.msra.mxu0 %v212
    %361 = vmatmul.bf16.gmra.mxu0 %v351
    %v362 = vpop.f32.mrf.mxu0
    %v363 = vadd.f32 0.0, %v362
    %v364 = vpop.f32.mrf.mxu0
    %365 = vdwg.mxu0
    %v366 = vunpack.c.l.bf16 %v345
    %v367 = vadd.f32 %v366, %v363
    %v368 = vxor.u32 %v367, 2147483648
    %v369 = vmul.f32 %v368, 1.442695
    %v370 = vpow.pop %v369
    %v371 = vadd.f32 %v370, 1.0
    %v372 = vrcp.pop %v371
    %v373 = vmul.f32 %v371, %v372
    %v374 = vsub.f32 1.0, %v373
    %v375 = vmul.f32 %v372, %v374
    %v376 = vadd.f32 %v372, %v375
    %vm377 = vweird.f32 %v371
    %vm378 = vweird.f32 %v372
    %vm379 = vmor %vm377, %vm378
    %v380 = vsel %vm379, %v372, %v376
    %v381 = vand.u32 2147483647, %v371
    %vm382 = vcmp.eq.f32.partialorder %v381, 8.507059e+37
    %v383 = vand.u32 %v371, 2147483648
    %v384 = vor.u32 1.1754944e-38, %v383
    %v385 = vsel %vm382, %v384, %v380
    %v386 = vmul.f32 1.0, %v385
    %v387 = vtanh.pop %v367
    %v388 = vmul.f32 %v386, %v265
    %390 = vrot.lane.b32.xlu0 %v387, 64
    %v391 = vpop.permute.xlu0 %390
    %v393 = vmul.f32 %v386, %v391
    %395 = vrot.lane.b32.xlu0 %v393, 32
    %v396 = vpop.permute.xlu0 %395
    %v398 = vadd.f32 %v388, %v396
    %v399 = vtanh.pop %v398
    %401 = vrot.lane.b32.xlu0 %v399, 64
    %v402 = vpop.permute.xlu0 %401
    %v404 = vmul.f32 %v386, %v402
    %s405 = scalar_lea.vmem [#allocation3], 6
    %v406 = vld [vmem:[%s405] sm:$0x1]
    %v407 = vpack.c.bf16 %v341, %v341
    %409 = vrot.lane.b32.xlu0 %v407, 32
    %v410 = vpop.permute.xlu0 %409
    %v412 = vsel %vm216, %v410, 0
    %414 = vmatpush.bf16.msra.mxu0 0
    %415 = vmatpush.bf16.msra.mxu0 0
    %416 = vmatpush.bf16.msra.mxu0 0
    %417 = vmatpush.bf16.msra.mxu0 0
    %418 = vmatpush.bf16.msra.mxu0 0
    %419 = vmatpush.bf16.msra.mxu0 0
    %420 = vmatpush.bf16.msra.mxu0 %v287
    %421 = vmatpush.bf16.msra.mxu0 %v286
    %422 = vmatmul.bf16.gmra.mxu0 %v412
    %v423 = vpop.f32.mrf.mxu0
    %v424 = vadd.f32 0.0, %v423
    %v425 = vpop.f32.mrf.mxu0
    %426 = vdwg.mxu0
    %v427 = vunpack.c.l.bf16 %v406
    %v428 = vadd.f32 %v427, %v424
    %v429 = vxor.u32 %v428, 2147483648
    %v430 = vmul.f32 %v429, 1.442695
    %v431 = vpow.pop %v430
    %v432 = vadd.f32 %v431, 1.0
    %v433 = vrcp.pop %v432
    %v434 = vmul.f32 %v432, %v433
    %v435 = vsub.f32 1.0, %v434
    %v436 = vmul.f32 %v433, %v435
    %v437 = vadd.f32 %v433, %v436
    %vm438 = vweird.f32 %v432
    %vm439 = vweird.f32 %v433
    %vm440 = vmor %vm438, %vm439
    %v441 = vsel %vm440, %v433, %v437
    %v442 = vand.u32 2147483647, %v432
    %vm443 = vcmp.eq.f32.partialorder %v442, 8.507059e+37
    %v444 = vand.u32 %v432, 2147483648
    %v445 = vor.u32 1.1754944e-38, %v444
    %v446 = vsel %vm443, %v445, %v441
    %v447 = vmul.f32 1.0, %v446
    %v448 = vtanh.pop %v428
    %v449 = vmul.f32 %v447, %v335
    %451 = vrot.lane.b32.xlu0 %v448, 64
    %v452 = vpop.permute.xlu0 %451
    %v454 = vmul.f32 %v447, %v452
    %456 = vrot.lane.b32.xlu0 %v454, 32
    %v457 = vpop.permute.xlu0 %456
    %v459 = vadd.f32 %v449, %v457
    %v460 = vtanh.pop %v459
    %462 = vrot.lane.b32.xlu0 %v460, 64
    %v463 = vpop.permute.xlu0 %462
    %v465 = vmul.f32 %v447, %v463
    %v466 = vadd.f32 %v342, %v404
    %v467 = vadd.f32 %v343, %v465
    %s468 = scalar_lea.vmem [#allocation2], 2
    %v469 = vld [vmem:[%s468] sm:$0x1]
    %v470 = vpack.c.bf16 %v404, %v404
    %472 = vrot.lane.b32.xlu0 %v470, 32
    %v473 = vpop.permute.xlu0 %472
    %v475 = vsel %vm216, %v473, 0
    %477 = vmatpush.bf16.msra.mxu0 0
    %478 = vmatpush.bf16.msra.mxu0 0
    %479 = vmatpush.bf16.msra.mxu0 0
    %480 = vmatpush.bf16.msra.mxu0 0
    %481 = vmatpush.bf16.msra.mxu0 0
    %482 = vmatpush.bf16.msra.mxu0 0
    %483 = vmatpush.bf16.msra.mxu0 %v213
    %484 = vmatpush.bf16.msra.mxu0 %v212
    %485 = vmatmul.bf16.gmra.mxu0 %v475
    %v486 = vpop.f32.mrf.mxu0
    %v487 = vadd.f32 0.0, %v486
    %v488 = vpop.f32.mrf.mxu0
    %489 = vdwg.mxu0
    %v490 = vunpack.c.l.bf16 %v469
    %v491 = vadd.f32 %v490, %v487
    %v492 = vxor.u32 %v491, 2147483648
    %v493 = vmul.f32 %v492, 1.442695
    %v494 = vpow.pop %v493
    %v495 = vadd.f32 %v494, 1.0
    %v496 = vrcp.pop %v495
    %v497 = vmul.f32 %v495, %v496
    %v498 = vsub.f32 1.0, %v497
    %v499 = vmul.f32 %v496, %v498
    %v500 = vadd.f32 %v496, %v499
    %vm501 = vweird.f32 %v495
    %vm502 = vweird.f32 %v496
    %vm503 = vmor %vm501, %vm502
    %v504 = vsel %vm503, %v496, %v500
    %v505 = vand.u32 2147483647, %v495
    %vm506 = vcmp.eq.f32.partialorder %v505, 8.507059e+37
    %v507 = vand.u32 %v495, 2147483648
    %v508 = vor.u32 1.1754944e-38, %v507
    %v509 = vsel %vm506, %v508, %v504
    %v510 = vmul.f32 1.0, %v509
    %v511 = vtanh.pop %v491
    %v512 = vmul.f32 %v510, %v398
    %514 = vrot.lane.b32.xlu0 %v511, 64
    %v515 = vpop.permute.xlu0 %514
    %v517 = vmul.f32 %v510, %v515
    %519 = vrot.lane.b32.xlu0 %v517, 32
    %v520 = vpop.permute.xlu0 %519
    %v522 = vadd.f32 %v512, %v520
    %v523 = vtanh.pop %v522
    %525 = vrot.lane.b32.xlu0 %v523, 64
    %v526 = vpop.permute.xlu0 %525
    %v528 = vmul.f32 %v510, %v526
    %s529 = scalar_lea.vmem [#allocation3], 5
    %v530 = vld [vmem:[%s529] sm:$0x1]
    %v531 = vpack.c.bf16 %v465, %v465
    %533 = vrot.lane.b32.xlu0 %v531, 32
    %v534 = vpop.permute.xlu0 %533
    %v536 = vsel %vm216, %v534, 0
    %538 = vmatpush.bf16.msra.mxu0 0
    %539 = vmatpush.bf16.msra.mxu0 0
    %540 = vmatpush.bf16.msra.mxu0 0
    %541 = vmatpush.bf16.msra.mxu0 0
    %542 = vmatpush.bf16.msra.mxu0 0
    %543 = vmatpush.bf16.msra.mxu0 0
    %544 = vmatpush.bf16.msra.mxu0 %v287
    %545 = vmatpush.bf16.msra.mxu0 %v286
    %546 = vmatmul.bf16.gmra.mxu0 %v536
    %v547 = vpop.f32.mrf.mxu0
    %v548 = vadd.f32 0.0, %v547
    %v549 = vpop.f32.mrf.mxu0
    %550 = vdwg.mxu0
    %v551 = vunpack.c.l.bf16 %v530
    %v552 = vadd.f32 %v551, %v548
    %v553 = vxor.u32 %v552, 2147483648
    %v554 = vmul.f32 %v553, 1.442695
    %v555 = vpow.pop %v554
    %v556 = vadd.f32 %v555, 1.0
    %v557 = vrcp.pop %v556
    %v558 = vmul.f32 %v556, %v557
    %v559 = vsub.f32 1.0, %v558
    %v560 = vmul.f32 %v557, %v559
    %v561 = vadd.f32 %v557, %v560
    %vm562 = vweird.f32 %v556
    %vm563 = vweird.f32 %v557
    %vm564 = vmor %vm562, %vm563
    %v565 = vsel %vm564, %v557, %v561
    %v566 = vand.u32 2147483647, %v556
    %vm567 = vcmp.eq.f32.partialorder %v566, 8.507059e+37
    %v568 = vand.u32 %v556, 2147483648
    %v569 = vor.u32 1.1754944e-38, %v568
    %v570 = vsel %vm567, %v569, %v565
    %v571 = vmul.f32 1.0, %v570
    %v572 = vtanh.pop %v552
    %v573 = vmul.f32 %v571, %v459
    %575 = vrot.lane.b32.xlu0 %v572, 64
    %v576 = vpop.permute.xlu0 %575
    %v578 = vmul.f32 %v571, %v576
    %580 = vrot.lane.b32.xlu0 %v578, 32
    %v581 = vpop.permute.xlu0 %580
    %v583 = vadd.f32 %v573, %v581
    %v584 = vtanh.pop %v583
    %586 = vrot.lane.b32.xlu0 %v584, 64
    %v587 = vpop.permute.xlu0 %586
    %v589 = vmul.f32 %v571, %v587
    %v590 = vadd.f32 %v466, %v528
    %v591 = vadd.f32 %v467, %v589
    %s592 = scalar_lea.vmem [#allocation2], 3
    %v593 = vld [vmem:[%s592] sm:$0x1]
    %v594 = vpack.c.bf16 %v528, %v528
    %596 = vrot.lane.b32.xlu0 %v594, 32
    %v597 = vpop.permute.xlu0 %596
    %v599 = vsel %vm216, %v597, 0
    %601 = vmatpush.bf16.msra.mxu0 0
    %602 = vmatpush.bf16.msra.mxu0 0
    %603 = vmatpush.bf16.msra.mxu0 0
    %604 = vmatpush.bf16.msra.mxu0 0
    %605 = vmatpush.bf16.msra.mxu0 0
    %606 = vmatpush.bf16.msra.mxu0 0
    %607 = vmatpush.bf16.msra.mxu0 %v213
    %608 = vmatpush.bf16.msra.mxu0 %v212
    %609 = vmatmul.bf16.gmra.mxu0 %v599
    %v610 = vpop.f32.mrf.mxu0
    %v611 = vadd.f32 0.0, %v610
    %v612 = vpop.f32.mrf.mxu0
    %613 = vdwg.mxu0
    %v614 = vunpack.c.l.bf16 %v593
    %v615 = vadd.f32 %v614, %v611
    %v616 = vxor.u32 %v615, 2147483648
    %v617 = vmul.f32 %v616, 1.442695
    %v618 = vpow.pop %v617
    %v619 = vadd.f32 %v618, 1.0
    %v620 = vrcp.pop %v619
    %v621 = vmul.f32 %v619, %v620
    %v622 = vsub.f32 1.0, %v621
    %v623 = vmul.f32 %v620, %v622
    %v624 = vadd.f32 %v620, %v623
    %vm625 = vweird.f32 %v619
    %vm626 = vweird.f32 %v620
    %vm627 = vmor %vm625, %vm626
    %v628 = vsel %vm627, %v620, %v624
    %v629 = vand.u32 2147483647, %v619
    %vm630 = vcmp.eq.f32.partialorder %v629, 8.507059e+37
    %v631 = vand.u32 %v619, 2147483648
    %v632 = vor.u32 1.1754944e-38, %v631
    %v633 = vsel %vm630, %v632, %v628
    %v634 = vmul.f32 1.0, %v633
    %v635 = vtanh.pop %v615
    %v636 = vmul.f32 %v634, %v522
    %638 = vrot.lane.b32.xlu0 %v635, 64
    %v639 = vpop.permute.xlu0 %638
    %v641 = vmul.f32 %v634, %v639
    %643 = vrot.lane.b32.xlu0 %v641, 32
    %v644 = vpop.permute.xlu0 %643
    %v646 = vadd.f32 %v636, %v644
    %v647 = vtanh.pop %v646
    %649 = vrot.lane.b32.xlu0 %v647, 64
    %v650 = vpop.permute.xlu0 %649
    %v652 = vmul.f32 %v634, %v650
    %s653 = scalar_lea.vmem [#allocation3], 4
    %v654 = vld [vmem:[%s653] sm:$0x1]
    %v655 = vpack.c.bf16 %v589, %v589
    %657 = vrot.lane.b32.xlu0 %v655, 32
    %v658 = vpop.permute.xlu0 %657
    %v660 = vsel %vm216, %v658, 0
    %662 = vmatpush.bf16.msra.mxu0 0
    %663 = vmatpush.bf16.msra.mxu0 0
    %664 = vmatpush.bf16.msra.mxu0 0
    %665 = vmatpush.bf16.msra.mxu0 0
    %666 = vmatpush.bf16.msra.mxu0 0
    %667 = vmatpush.bf16.msra.mxu0 0
    %668 = vmatpush.bf16.msra.mxu0 %v287
    %669 = vmatpush.bf16.msra.mxu0 %v286
    %670 = vmatmul.bf16.gmra.mxu0 %v660
    %v671 = vpop.f32.mrf.mxu0
    %v672 = vadd.f32 0.0, %v671
    %v673 = vpop.f32.mrf.mxu0
    %674 = vdwg.mxu0
    %v675 = vunpack.c.l.bf16 %v654
    %v676 = vadd.f32 %v675, %v672
    %v677 = vxor.u32 %v676, 2147483648
    %v678 = vmul.f32 %v677, 1.442695
    %v679 = vpow.pop %v678
    %v680 = vadd.f32 %v679, 1.0
    %v681 = vrcp.pop %v680
    %v682 = vmul.f32 %v680, %v681
    %v683 = vsub.f32 1.0, %v682
    %v684 = vmul.f32 %v681, %v683
    %v685 = vadd.f32 %v681, %v684
    %vm686 = vweird.f32 %v680
    %vm687 = vweird.f32 %v681
    %vm688 = vmor %vm686, %vm687
    %v689 = vsel %vm688, %v681, %v685
    %v690 = vand.u32 2147483647, %v680
    %vm691 = vcmp.eq.f32.partialorder %v690, 8.507059e+37
    %v692 = vand.u32 %v680, 2147483648
    %v693 = vor.u32 1.1754944e-38, %v692
    %v694 = vsel %vm691, %v693, %v689
    %v695 = vmul.f32 1.0, %v694
    %v696 = vtanh.pop %v676
    %v697 = vmul.f32 %v695, %v583
    %699 = vrot.lane.b32.xlu0 %v696, 64
    %v700 = vpop.permute.xlu0 %699
    %v702 = vmul.f32 %v695, %v700
    %704 = vrot.lane.b32.xlu0 %v702, 32
    %v705 = vpop.permute.xlu0 %704
    %v707 = vadd.f32 %v697, %v705
    %v708 = vtanh.pop %v707
    %710 = vrot.lane.b32.xlu0 %v708, 64
    %v711 = vpop.permute.xlu0 %710
    %v713 = vmul.f32 %v695, %v711
    %v714 = vadd.f32 %v590, %v652
    %v715 = vadd.f32 %v591, %v713
    %s716 = scalar_lea.vmem [#allocation2], 4
    %v717 = vld [vmem:[%s716] sm:$0x1]
    %v718 = vpack.c.bf16 %v652, %v652
    %720 = vrot.lane.b32.xlu0 %v718, 32
    %v721 = vpop.permute.xlu0 %720
    %v723 = vsel %vm216, %v721, 0
    %725 = vmatpush.bf16.msra.mxu0 0
    %726 = vmatpush.bf16.msra.mxu0 0
    %727 = vmatpush.bf16.msra.mxu0 0
    %728 = vmatpush.bf16.msra.mxu0 0
    %729 = vmatpush.bf16.msra.mxu0 0
    %730 = vmatpush.bf16.msra.mxu0 0
    %731 = vmatpush.bf16.msra.mxu0 %v213
    %732 = vmatpush.bf16.msra.mxu0 %v212
    %733 = vmatmul.bf16.gmra.mxu0 %v723
    %v734 = vpop.f32.mrf.mxu0
    %v735 = vadd.f32 0.0, %v734
    %v736 = vpop.f32.mrf.mxu0
    %737 = vdwg.mxu0
    %v738 = vunpack.c.l.bf16 %v717
    %v739 = vadd.f32 %v738, %v735
    %v740 = vxor.u32 %v739, 2147483648
    %v741 = vmul.f32 %v740, 1.442695
    %v742 = vpow.pop %v741
    %v743 = vadd.f32 %v742, 1.0
    %v744 = vrcp.pop %v743
    %v745 = vmul.f32 %v743, %v744
    %v746 = vsub.f32 1.0, %v745
    %v747 = vmul.f32 %v744, %v746
    %v748 = vadd.f32 %v744, %v747
    %vm749 = vweird.f32 %v743
    %vm750 = vweird.f32 %v744
    %vm751 = vmor %vm749, %vm750
    %v752 = vsel %vm751, %v744, %v748
    %v753 = vand.u32 2147483647, %v743
    %vm754 = vcmp.eq.f32.partialorder %v753, 8.507059e+37
    %v755 = vand.u32 %v743, 2147483648
    %v756 = vor.u32 1.1754944e-38, %v755
    %v757 = vsel %vm754, %v756, %v752
    %v758 = vmul.f32 1.0, %v757
    %v759 = vtanh.pop %v739
    %v760 = vmul.f32 %v758, %v646
    %762 = vrot.lane.b32.xlu0 %v759, 64
    %v763 = vpop.permute.xlu0 %762
    %v765 = vmul.f32 %v758, %v763
    %767 = vrot.lane.b32.xlu0 %v765, 32
    %v768 = vpop.permute.xlu0 %767
    %v770 = vadd.f32 %v760, %v768
    %v771 = vtanh.pop %v770
    %773 = vrot.lane.b32.xlu0 %v771, 64
    %v774 = vpop.permute.xlu0 %773
    %v776 = vmul.f32 %v758, %v774
    %s777 = scalar_lea.vmem [#allocation3], 3
    %v778 = vld [vmem:[%s777] sm:$0x1]
    %v779 = vpack.c.bf16 %v713, %v713
    %781 = vrot.lane.b32.xlu0 %v779, 32
    %v782 = vpop.permute.xlu0 %781
    %v784 = vsel %vm216, %v782, 0
    %786 = vmatpush.bf16.msra.mxu0 0
    %787 = vmatpush.bf16.msra.mxu0 0
    %788 = vmatpush.bf16.msra.mxu0 0
    %789 = vmatpush.bf16.msra.mxu0 0
    %790 = vmatpush.bf16.msra.mxu0 0
    %791 = vmatpush.bf16.msra.mxu0 0
    %792 = vmatpush.bf16.msra.mxu0 %v287
    %793 = vmatpush.bf16.msra.mxu0 %v286
    %794 = vmatmul.bf16.gmra.mxu0 %v784
    %v795 = vpop.f32.mrf.mxu0
    %v796 = vadd.f32 0.0, %v795
    %v797 = vpop.f32.mrf.mxu0
    %798 = vdwg.mxu0
    %v799 = vunpack.c.l.bf16 %v778
    %v800 = vadd.f32 %v799, %v796
    %v801 = vxor.u32 %v800, 2147483648
    %v802 = vmul.f32 %v801, 1.442695
    %v803 = vpow.pop %v802
    %v804 = vadd.f32 %v803, 1.0
    %v805 = vrcp.pop %v804
    %v806 = vmul.f32 %v804, %v805
    %v807 = vsub.f32 1.0, %v806
    %v808 = vmul.f32 %v805, %v807
    %v809 = vadd.f32 %v805, %v808
    %vm810 = vweird.f32 %v804
    %vm811 = vweird.f32 %v805
    %vm812 = vmor %vm810, %vm811
    %v813 = vsel %vm812, %v805, %v809
    %v814 = vand.u32 2147483647, %v804
    %vm815 = vcmp.eq.f32.partialorder %v814, 8.507059e+37
    %v816 = vand.u32 %v804, 2147483648
    %v817 = vor.u32 1.1754944e-38, %v816
    %v818 = vsel %vm815, %v817, %v813
    %v819 = vmul.f32 1.0, %v818
    %v820 = vtanh.pop %v800
    %v821 = vmul.f32 %v819, %v707
    %823 = vrot.lane.b32.xlu0 %v820, 64
    %v824 = vpop.permute.xlu0 %823
    %v826 = vmul.f32 %v819, %v824
    %828 = vrot.lane.b32.xlu0 %v826, 32
    %v829 = vpop.permute.xlu0 %828
    %v831 = vadd.f32 %v821, %v829
    %v832 = vtanh.pop %v831
    %834 = vrot.lane.b32.xlu0 %v832, 64
    %v835 = vpop.permute.xlu0 %834
    %v837 = vmul.f32 %v819, %v835
    %v838 = vadd.f32 %v714, %v776
    %v839 = vadd.f32 %v715, %v837
    %s840 = scalar_lea.vmem [#allocation2], 5
    %v841 = vld [vmem:[%s840] sm:$0x1]
    %v842 = vpack.c.bf16 %v776, %v776
    %844 = vrot.lane.b32.xlu0 %v842, 32
    %v845 = vpop.permute.xlu0 %844
    %v847 = vsel %vm216, %v845, 0
    %849 = vmatpush.bf16.msra.mxu0 0
    %850 = vmatpush.bf16.msra.mxu0 0
    %851 = vmatpush.bf16.msra.mxu0 0
    %852 = vmatpush.bf16.msra.mxu0 0
    %853 = vmatpush.bf16.msra.mxu0 0
    %854 = vmatpush.bf16.msra.mxu0 0
    %855 = vmatpush.bf16.msra.mxu0 %v213
    %856 = vmatpush.bf16.msra.mxu0 %v212
    %857 = vmatmul.bf16.gmra.mxu0 %v847
    %v858 = vpop.f32.mrf.mxu0
    %v859 = vadd.f32 0.0, %v858
    %v860 = vpop.f32.mrf.mxu0
    %861 = vdwg.mxu0
    %v862 = vunpack.c.l.bf16 %v841
    %v863 = vadd.f32 %v862, %v859
    %v864 = vxor.u32 %v863, 2147483648
    %v865 = vmul.f32 %v864, 1.442695
    %v866 = vpow.pop %v865
    %v867 = vadd.f32 %v866, 1.0
    %v868 = vrcp.pop %v867
    %v869 = vmul.f32 %v867, %v868
    %v870 = vsub.f32 1.0, %v869
    %v871 = vmul.f32 %v868, %v870
    %v872 = vadd.f32 %v868, %v871
    %vm873 = vweird.f32 %v867
    %vm874 = vweird.f32 %v868
    %vm875 = vmor %vm873, %vm874
    %v876 = vsel %vm875, %v868, %v872
    %v877 = vand.u32 2147483647, %v867
    %vm878 = vcmp.eq.f32.partialorder %v877, 8.507059e+37
    %v879 = vand.u32 %v867, 2147483648
    %v880 = vor.u32 1.1754944e-38, %v879
    %v881 = vsel %vm878, %v880, %v876
    %v882 = vmul.f32 1.0, %v881
    %v883 = vtanh.pop %v863
    %v884 = vmul.f32 %v882, %v770
    %886 = vrot.lane.b32.xlu0 %v883, 64
    %v887 = vpop.permute.xlu0 %886
    %v889 = vmul.f32 %v882, %v887
    %891 = vrot.lane.b32.xlu0 %v889, 32
    %v892 = vpop.permute.xlu0 %891
    %v894 = vadd.f32 %v884, %v892
    %v895 = vtanh.pop %v894
    %897 = vrot.lane.b32.xlu0 %v895, 64
    %v898 = vpop.permute.xlu0 %897
    %v900 = vmul.f32 %v882, %v898
    %s901 = scalar_lea.vmem [#allocation3], 2
    %v902 = vld [vmem:[%s901] sm:$0x1]
    %v903 = vpack.c.bf16 %v837, %v837
    %905 = vrot.lane.b32.xlu0 %v903, 32
    %v906 = vpop.permute.xlu0 %905
    %v908 = vsel %vm216, %v906, 0
    %910 = vmatpush.bf16.msra.mxu0 0
    %911 = vmatpush.bf16.msra.mxu0 0
    %912 = vmatpush.bf16.msra.mxu0 0
    %913 = vmatpush.bf16.msra.mxu0 0
    %914 = vmatpush.bf16.msra.mxu0 0
    %915 = vmatpush.bf16.msra.mxu0 0
    %916 = vmatpush.bf16.msra.mxu0 %v287
    %917 = vmatpush.bf16.msra.mxu0 %v286
    %918 = vmatmul.bf16.gmra.mxu0 %v908
    %v919 = vpop.f32.mrf.mxu0
    %v920 = vadd.f32 0.0, %v919
    %v921 = vpop.f32.mrf.mxu0
    %922 = vdwg.mxu0
    %v923 = vunpack.c.l.bf16 %v902
    %v924 = vadd.f32 %v923, %v920
    %v925 = vxor.u32 %v924, 2147483648
    %v926 = vmul.f32 %v925, 1.442695
    %v927 = vpow.pop %v926
    %v928 = vadd.f32 %v927, 1.0
    %v929 = vrcp.pop %v928
    %v930 = vmul.f32 %v928, %v929
    %v931 = vsub.f32 1.0, %v930
    %v932 = vmul.f32 %v929, %v931
    %v933 = vadd.f32 %v929, %v932
    %vm934 = vweird.f32 %v928
    %vm935 = vweird.f32 %v929
    %vm936 = vmor %vm934, %vm935
    %v937 = vsel %vm936, %v929, %v933
    %v938 = vand.u32 2147483647, %v928
    %vm939 = vcmp.eq.f32.partialorder %v938, 8.507059e+37
    %v940 = vand.u32 %v928, 2147483648
    %v941 = vor.u32 1.1754944e-38, %v940
    %v942 = vsel %vm939, %v941, %v937
    %v943 = vmul.f32 1.0, %v942
    %v944 = vtanh.pop %v924
    %v945 = vmul.f32 %v943, %v831
    %947 = vrot.lane.b32.xlu0 %v944, 64
    %v948 = vpop.permute.xlu0 %947
    %v950 = vmul.f32 %v943, %v948
    %952 = vrot.lane.b32.xlu0 %v950, 32
    %v953 = vpop.permute.xlu0 %952
    %v955 = vadd.f32 %v945, %v953
    %v956 = vtanh.pop %v955
    %958 = vrot.lane.b32.xlu0 %v956, 64
    %v959 = vpop.permute.xlu0 %958
    %v961 = vmul.f32 %v943, %v959
    %v962 = vadd.f32 %v838, %v900
    %v963 = vadd.f32 %v839, %v961
    %s964 = scalar_lea.vmem [#allocation2], 6
    %v965 = vld [vmem:[%s964] sm:$0x1]
    %v966 = vpack.c.bf16 %v900, %v900
    %968 = vrot.lane.b32.xlu0 %v966, 32
    %v969 = vpop.permute.xlu0 %968
    %v971 = vsel %vm216, %v969, 0
    %973 = vmatpush.bf16.msra.mxu0 0
    %974 = vmatpush.bf16.msra.mxu0 0
    %975 = vmatpush.bf16.msra.mxu0 0
    %976 = vmatpush.bf16.msra.mxu0 0
    %977 = vmatpush.bf16.msra.mxu0 0
    %978 = vmatpush.bf16.msra.mxu0 0
    %979 = vmatpush.bf16.msra.mxu0 %v213
    %980 = vmatpush.bf16.msra.mxu0 %v212
    %981 = vmatmul.bf16.gmra.mxu0 %v971
    %v982 = vpop.f32.mrf.mxu0
    %v983 = vadd.f32 0.0, %v982
    %v984 = vpop.f32.mrf.mxu0
    %985 = vdwg.mxu0
    %v986 = vunpack.c.l.bf16 %v965
    %v987 = vadd.f32 %v986, %v983
    %v988 = vxor.u32 %v987, 2147483648
    %v989 = vmul.f32 %v988, 1.442695
    %v990 = vpow.pop %v989
    %v991 = vadd.f32 %v990, 1.0
    %v992 = vrcp.pop %v991
    %v993 = vmul.f32 %v991, %v992
    %v994 = vsub.f32 1.0, %v993
    %v995 = vmul.f32 %v992, %v994
    %v996 = vadd.f32 %v992, %v995
    %vm997 = vweird.f32 %v991
    %vm998 = vweird.f32 %v992
    %vm999 = vmor %vm997, %vm998
    %v1000 = vsel %vm999, %v992, %v996
    %v1001 = vand.u32 2147483647, %v991
    %vm1002 = vcmp.eq.f32.partialorder %v1001, 8.507059e+37
    %v1003 = vand.u32 %v991, 2147483648
    %v1004 = vor.u32 1.1754944e-38, %v1003
    %v1005 = vsel %vm1002, %v1004, %v1000
    %v1006 = vmul.f32 1.0, %v1005
    %v1007 = vtanh.pop %v987
    %v1008 = vmul.f32 %v1006, %v894
    %1010 = vrot.lane.b32.xlu0 %v1007, 64
    %v1011 = vpop.permute.xlu0 %1010
    %v1013 = vmul.f32 %v1006, %v1011
    %1015 = vrot.lane.b32.xlu0 %v1013, 32
    %v1016 = vpop.permute.xlu0 %1015
    %v1018 = vadd.f32 %v1008, %v1016
    %v1019 = vtanh.pop %v1018
    %1021 = vrot.lane.b32.xlu0 %v1019, 64
    %v1022 = vpop.permute.xlu0 %1021
    %v1024 = vmul.f32 %v1006, %v1022
    %s1025 = scalar_lea.vmem [#allocation3], 1
    %v1026 = vld [vmem:[%s1025] sm:$0x1]
    %v1027 = vpack.c.bf16 %v961, %v961
    %1029 = vrot.lane.b32.xlu0 %v1027, 32
    %v1030 = vpop.permute.xlu0 %1029
    %v1032 = vsel %vm216, %v1030, 0
    %1034 = vmatpush.bf16.msra.mxu0 0
    %1035 = vmatpush.bf16.msra.mxu0 0
    %1036 = vmatpush.bf16.msra.mxu0 0
    %1037 = vmatpush.bf16.msra.mxu0 0
    %1038 = vmatpush.bf16.msra.mxu0 0
    %1039 = vmatpush.bf16.msra.mxu0 0
    %1040 = vmatpush.bf16.msra.mxu0 %v287
    %1041 = vmatpush.bf16.msra.mxu0 %v286
    %1042 = vmatmul.bf16.gmra.mxu0 %v1032
    %v1043 = vpop.f32.mrf.mxu0
    %v1044 = vadd.f32 0.0, %v1043
    %v1045 = vpop.f32.mrf.mxu0
    %1046 = vdwg.mxu0
    %v1047 = vunpack.c.l.bf16 %v1026
    %v1048 = vadd.f32 %v1047, %v1044
    %v1049 = vxor.u32 %v1048, 2147483648
    %v1050 = vmul.f32 %v1049, 1.442695
    %v1051 = vpow.pop %v1050
    %v1052 = vadd.f32 %v1051, 1.0
    %v1053 = vrcp.pop %v1052
    %v1054 = vmul.f32 %v1052, %v1053
    %v1055 = vsub.f32 1.0, %v1054
    %v1056 = vmul.f32 %v1053, %v1055
    %v1057 = vadd.f32 %v1053, %v1056
    %vm1058 = vweird.f32 %v1052
    %vm1059 = vweird.f32 %v1053
    %vm1060 = vmor %vm1058, %vm1059
    %v1061 = vsel %vm1060, %v1053, %v1057
    %v1062 = vand.u32 2147483647, %v1052
    %vm1063 = vcmp.eq.f32.partialorder %v1062, 8.507059e+37
    %v1064 = vand.u32 %v1052, 2147483648
    %v1065 = vor.u32 1.1754944e-38, %v1064
    %v1066 = vsel %vm1063, %v1065, %v1061
    %v1067 = vmul.f32 1.0, %v1066
    %v1068 = vtanh.pop %v1048
    %v1069 = vmul.f32 %v1067, %v955
    %1071 = vrot.lane.b32.xlu0 %v1068, 64
    %v1072 = vpop.permute.xlu0 %1071
    %v1074 = vmul.f32 %v1067, %v1072
    %1076 = vrot.lane.b32.xlu0 %v1074, 32
    %v1077 = vpop.permute.xlu0 %1076
    %v1079 = vadd.f32 %v1069, %v1077
    %v1080 = vtanh.pop %v1079
    %1082 = vrot.lane.b32.xlu0 %v1080, 64
    %v1083 = vpop.permute.xlu0 %1082
    %v1085 = vmul.f32 %v1067, %v1083
    %v1086 = vadd.f32 %v962, %v1024
    %v1087 = vadd.f32 %v963, %v1085
    %s1088 = scalar_lea.vmem [#allocation2], 7
    %v1089 = vld [vmem:[%s1088] sm:$0x1]
    %v1090 = vpack.c.bf16 %v1024, %v1024
    %1092 = vrot.lane.b32.xlu0 %v1090, 32
    %v1093 = vpop.permute.xlu0 %1092
    %v1095 = vsel %vm216, %v1093, 0
    %1097 = vmatpush.bf16.msra.mxu0 0
    %1098 = vmatpush.bf16.msra.mxu0 0
    %1099 = vmatpush.bf16.msra.mxu0 0
    %1100 = vmatpush.bf16.msra.mxu0 0
    %1101 = vmatpush.bf16.msra.mxu0 0
    %1102 = vmatpush.bf16.msra.mxu0 0
    %1103 = vmatpush.bf16.msra.mxu0 %v213
    %1104 = vmatpush.bf16.msra.mxu0 %v212
    %1105 = vmatmul.bf16.gmra.mxu0 %v1095
    %v1106 = vpop.f32.mrf.mxu0
    %v1107 = vadd.f32 0.0, %v1106
    %v1108 = vpop.f32.mrf.mxu0
    %1109 = vdwg.mxu0
    %v1110 = vunpack.c.l.bf16 %v1089
    %v1111 = vadd.f32 %v1110, %v1107
    %v1112 = vxor.u32 %v1111, 2147483648
    %v1113 = vmul.f32 %v1112, 1.442695
    %v1114 = vpow.pop %v1113
    %v1115 = vadd.f32 %v1114, 1.0
    %v1116 = vrcp.pop %v1115
    %v1117 = vmul.f32 %v1115, %v1116
    %v1118 = vsub.f32 1.0, %v1117
    %v1119 = vmul.f32 %v1116, %v1118
    %v1120 = vadd.f32 %v1116, %v1119
    %vm1121 = vweird.f32 %v1115
    %vm1122 = vweird.f32 %v1116
    %vm1123 = vmor %vm1121, %vm1122
    %v1124 = vsel %vm1123, %v1116, %v1120
    %v1125 = vand.u32 2147483647, %v1115
    %vm1126 = vcmp.eq.f32.partialorder %v1125, 8.507059e+37
    %v1127 = vand.u32 %v1115, 2147483648
    %v1128 = vor.u32 1.1754944e-38, %v1127
    %v1129 = vsel %vm1126, %v1128, %v1124
    %v1130 = vmul.f32 1.0, %v1129
    %v1131 = vtanh.pop %v1111
    %v1132 = vmul.f32 %v1130, %v1018
    %1134 = vrot.lane.b32.xlu0 %v1131, 64
    %v1135 = vpop.permute.xlu0 %1134
    %v1137 = vmul.f32 %v1130, %v1135
    %1139 = vrot.lane.b32.xlu0 %v1137, 32
    %v1140 = vpop.permute.xlu0 %1139
    %v1142 = vadd.f32 %v1132, %v1140
    %v1143 = vtanh.pop %v1142
    %1145 = vrot.lane.b32.xlu0 %v1143, 64
    %v1146 = vpop.permute.xlu0 %1145
    %v1148 = vmul.f32 %v1130, %v1146
    %v1149 = vld [vmem:[#allocation3] sm:$0x1]
    %v1150 = vpack.c.bf16 %v1085, %v1085
    %1152 = vrot.lane.b32.xlu0 %v1150, 32
    %v1153 = vpop.permute.xlu0 %1152
    %v1155 = vsel %vm216, %v1153, 0
    %1157 = vmatpush.bf16.msra.mxu0 0
    %1158 = vmatpush.bf16.msra.mxu0 0
    %1159 = vmatpush.bf16.msra.mxu0 0
    %1160 = vmatpush.bf16.msra.mxu0 0
    %1161 = vmatpush.bf16.msra.mxu0 0
    %1162 = vmatpush.bf16.msra.mxu0 0
    %1163 = vmatpush.bf16.msra.mxu0 %v287
    %1164 = vmatpush.bf16.msra.mxu0 %v286
    %1165 = vmatmul.bf16.gmra.mxu0 %v1155
    %v1166 = vpop.f32.mrf.mxu0
    %v1167 = vadd.f32 0.0, %v1166
    %v1168 = vpop.f32.mrf.mxu0
    %1169 = vdwg.mxu0
    %v1170 = vunpack.c.l.bf16 %v1149
    %v1171 = vadd.f32 %v1170, %v1167
    %v1172 = vxor.u32 %v1171, 2147483648
    %v1173 = vmul.f32 %v1172, 1.442695
    %v1174 = vpow.pop %v1173
    %v1175 = vadd.f32 %v1174, 1.0
    %v1176 = vrcp.pop %v1175
    %v1177 = vmul.f32 %v1175, %v1176
    %v1178 = vsub.f32 1.0, %v1177
    %v1179 = vmul.f32 %v1176, %v1178
    %v1180 = vadd.f32 %v1176, %v1179
    %vm1181 = vweird.f32 %v1175
    %vm1182 = vweird.f32 %v1176
    %vm1183 = vmor %vm1181, %vm1182
    %v1184 = vsel %vm1183, %v1176, %v1180
    %v1185 = vand.u32 2147483647, %v1175
    %vm1186 = vcmp.eq.f32.partialorder %v1185, 8.507059e+37
    %v1187 = vand.u32 %v1175, 2147483648
    %v1188 = vor.u32 1.1754944e-38, %v1187
    %v1189 = vsel %vm1186, %v1188, %v1184
    %v1190 = vmul.f32 1.0, %v1189
    %v1191 = vtanh.pop %v1171
    %v1192 = vmul.f32 %v1190, %v1079
    %1194 = vrot.lane.b32.xlu0 %v1191, 64
    %v1195 = vpop.permute.xlu0 %1194
    %v1197 = vmul.f32 %v1190, %v1195
    %1199 = vrot.lane.b32.xlu0 %v1197, 32
    %v1200 = vpop.permute.xlu0 %1199
    %v1202 = vadd.f32 %v1192, %v1200
    %v1203 = vtanh.pop %v1202
    %1205 = vrot.lane.b32.xlu0 %v1203, 64
    %v1206 = vpop.permute.xlu0 %1205
    %v1208 = vmul.f32 %v1190, %v1206
    %v1209 = vadd.f32 %v1086, %v1148
    %v1210 = vadd.f32 %v1087, %v1208
    %v1211 = vmul.f32 %v1209, 0.125
    %1213 = vst [vmem:[#allocation1] ss:$4 sm:$0xff] %v1211
    %v1214 = vld.sshfl [vmem:[#allocation1] sm:$0xff pattern:$0x73625140]
    %1215 = vrot.lane.b32.xlu0 %v1214, 32
    %v1216 = vpop.permute.xlu0 %1215
    %vm1218 = vcmask 254976
    %1219 = vst.msk [vmem:[#allocation4] sm:$0x3] %vm1218, %v1216
    %v1220 = vmul.f32 %v1210, 0.125
    %1222 = vst [vmem:[#allocation1] ss:$4 sm:$0xff] %v1220
    %v1223 = vld.sshfl [vmem:[#allocation1] sm:$0xff pattern:$0x73625140]
    %1224 = vrot.lane.b32.xlu0 %v1223, 64
    %v1225 = vpop.permute.xlu0 %1224
    %vm1227 = vcmask 517376
    %1228 = vst.msk [vmem:[#allocation4] sm:$0x3] %vm1227, %v1225
    // Predicated region
    $region22: #{deepsignal_rnn_forward.3} parent=1 // pred_check
      _
    $region23: #{deepsignal_rnn_forward.3} parent=1 // pred_check_branch
      %1230 = sbr.rel (0) target = $region25
    $region24: #{deepsignal_rnn_forward.3} parent=1 // pred_region
      %1232 = vsyncadd [#allocation5], 0
      %s1234 = sshll.u32 [#allocation4], 4
      %s1235 = int_to_ptr.vmem [resolvable:$true] %s1234
      %s1236 = sshll.u32 %s5, 4
      %s1237 = int_to_ptr.hbm [resolvable:$true] %s1236
      %1239 = dma.vmem_to_hbm [thread:$0]  %s1235, 32, %s1237, [#allocation5]
    $region25: #{deepsignal_rnn_forward.3} parent=1 // pred_fallthru
      _
    // Predicated region
    $region26: #{deepsignal_rnn_forward.3} parent=1 // pred_check
      _
    $region27: #{deepsignal_rnn_forward.3} parent=1 // pred_check_branch
      %1241 = sbr.rel (0) target = $region29
    $region28: #{deepsignal_rnn_forward.3} parent=1 // pred_region
      %1243 = dma.done [#allocation5], 32
    $region29: #{deepsignal_rnn_forward.3} parent=1 // pred_fallthru
      _
    %1244 = vsyncpa [#allocation5], 1

// kernel: deepsignal_rnn_forward.2
$region0: #{deepsignal_rnn_forward.2}
  #allocation0 [shape = 'u32[]', space=smem, size = 0x4, offset = 0x4, fixed_abs, tag = 'smem constant byte address 0x4 - core index']
  #allocation1 [shape = 'u32[72,128]{1,0:T(1,128)}', space=vmem, size = 0x9000, scoped, tag = 'internal scratch']
  #allocation2 [shape = 'bf16[8,2,128]{2,1,0:T(2,128)(2,1)}', space=vmem, size = 0x1000, scoped, tag = 'scratch operand']
  #allocation3 [shape = 'bf16[8,2,128]{2,1,0:T(2,128)(2,1)}', space=vmem, size = 0x1000, scoped, tag = 'scratch operand']
  %s0 = inlined_call_operand.vmem [shape: bf16[8,2,4], index: 0, kind: input, shape index: {}]
  %s1 = inlined_call_operand.vmem [shape: bf16[4,256], index: 1, kind: input, shape index: {}]
  %s2 = inlined_call_operand.vmem [shape: f32[1,256], index: 2, kind: input, shape index: {}]
  %s3 = inlined_call_operand.vmem [shape: bf16[32,128], index: 3, kind: input, shape index: {}]
  %s4 = inlined_call_operand.vmem [shape: bf16[32,128], index: 4, kind: input, shape index: {}]
  %s5 = inlined_call_operand.vmem [shape: bf16[8,2,64], index: 5, kind: output, shape index: {}]
  %s6 = sld [smem:[#allocation0]]
  $region30: #{deepsignal_rnn_forward.2} parent=0
    _
  %s8 = ssub.s32 1, %s6
  %s9 = scalar_select 0, %s8, %s6
  // Predicated region
  $region2: #{deepsignal_rnn_forward.2} parent=0 // pred_check
    _
  $region3: #{deepsignal_rnn_forward.2} parent=0 // pred_check_branch
    %11 = sbr.rel (0) target = $region5
  $region4: #{deepsignal_rnn_forward.2} parent=0 // pred_region
    _
  $region5: #{deepsignal_rnn_forward.2} parent=0 // pred_fallthru
    _
  // Predicated region
  $region6: #{deepsignal_rnn_forward.2} parent=0 // pred_check
    _
  $region7: #{deepsignal_rnn_forward.2} parent=0 // pred_check_branch
    %13 = sbr.rel (0) target = $region9
  $region8: #{deepsignal_rnn_forward.2} parent=0 // pred_region
    _
  $region9: #{deepsignal_rnn_forward.2} parent=0 // pred_fallthru
    _
  // Predicated region
  $region10: #{deepsignal_rnn_forward.2} parent=0 // pred_check
    _
  $region11: #{deepsignal_rnn_forward.2} parent=0 // pred_check_branch
    %15 = sbr.rel (0) target = $region13
  $region12: #{deepsignal_rnn_forward.2} parent=0 // pred_region
    _
  $region13: #{deepsignal_rnn_forward.2} parent=0 // pred_fallthru
    _
  // Predicated region
  $region14: #{deepsignal_rnn_forward.2} parent=0 // pred_check
    _
  $region15: #{deepsignal_rnn_forward.2} parent=0 // pred_check_branch
    %17 = sbr.rel (0) target = $region17
  $region16: #{deepsignal_rnn_forward.2} parent=0 // pred_region
    _
  $region17: #{deepsignal_rnn_forward.2} parent=0 // pred_fallthru
    _
  // Predicated region
  $region18: #{deepsignal_rnn_forward.2} parent=0 // pred_check
    _
  $region19: #{deepsignal_rnn_forward.2} parent=0 // pred_check_branch
    %19 = sbr.rel (0) target = $region21
  $region20: #{deepsignal_rnn_forward.2} parent=0 // pred_region
    _
  $region21: #{deepsignal_rnn_forward.2} parent=0 // pred_fallthru
    _
  %v21 = vld [vmem:[%s0] sm:$0x1]
  %v22 = vld [vmem:[%s0 + $0x1] sm:$0x1]
  %v23 = vld [vmem:[%s0 + $0x2] sm:$0x1]
  %v24 = vld [vmem:[%s0 + $0x3] sm:$0x1]
  %v25 = vld [vmem:[%s0 + $0x4] sm:$0x1]
  %v26 = vld [vmem:[%s0 + $0x5] sm:$0x1]
  %v27 = vld [vmem:[%s0 + $0x6] sm:$0x1]
  %v28 = vld [vmem:[%s0 + $0x7] sm:$0x1]
  %v29 = vld [vmem:[%s1] sm:$0xf]
  %v30 = vld [vmem:[%s2] sm:$0x3]
  %v32 = vperm.slane %v30, 0
  %v33 = vperm.slane %v30, 1
  %37 = vst [vmem:[#allocation1] ss:$9 sm:$0xff] %v21
  %s39 = scalar_lea.vmem [#allocation1], 1
  %40 = vst [vmem:[%s39] ss:$9 sm:$0xff] %v22
  %s42 = scalar_lea.vmem [#allocation1], 2
  %43 = vst [vmem:[%s42] ss:$9 sm:$0xff] %v23
  %s45 = scalar_lea.vmem [#allocation1], 3
  %46 = vst [vmem:[%s45] ss:$9 sm:$0xff] %v24
  %s48 = scalar_lea.vmem [#allocation1], 4
  %49 = vst [vmem:[%s48] ss:$9 sm:$0xff] %v25
  %s51 = scalar_lea.vmem [#allocation1], 5
  %52 = vst [vmem:[%s51] ss:$9 sm:$0xff] %v26
  %s54 = scalar_lea.vmem [#allocation1], 6
  %55 = vst [vmem:[%s54] ss:$9 sm:$0xff] %v27
  %s57 = scalar_lea.vmem [#allocation1], 7
  %58 = vst [vmem:[%s57] ss:$9 sm:$0xff] %v28
  %v59 = vld [vmem:[#allocation1] sm:$0xff]
  %61 = vst [vmem:[#allocation1] ss:$4 sm:$0xff] %v29
  %v62 = vld.sshfl [vmem:[#allocation1] sm:$0xff pattern:$0x73625140]
  %v63 = vld.sshfl [vmem:[#allocation1 + $0x8] sm:$0xff pattern:$0x73625140]
  %vm64 = vcmask 31744
  %v65 = vsel %vm64, %v59, 0
  %vm67 = vcmask 1041408
  %v68 = vsel %vm67, %v62, 0
  %v70 = vsel %vm67, %v63, 0
  %72 = vmatpush.bf16.msra.mxu0 0
  %73 = vmatpush.bf16.msra.mxu0 0
  %74 = vmatpush.bf16.msra.mxu0 0
  %75 = vmatpush.bf16.msra.mxu0 0
  %76 = vmatpush.bf16.msra.mxu0 0
  %77 = vmatpush.bf16.msra.mxu0 0
  %78 = vmatpush.bf16.msra.mxu0 0
  %79 = vmatpush.bf16.msra.mxu0 %v68
  %80 = vmatmul.bf16.gmra.mxu0 %v65
  %v81 = vpop.f32.mrf.mxu0
  %v82 = vadd.f32 %v32, %v81
  %v83 = vpop.f32.mrf.mxu0
  %v84 = vadd.f32 %v32, %v83
  %85 = vdwg.mxu0
  %86 = vmatpush.bf16.msra.mxu0 0
  %87 = vmatpush.bf16.msra.mxu0 0
  %88 = vmatpush.bf16.msra.mxu0 0
  %89 = vmatpush.bf16.msra.mxu0 0
  %90 = vmatpush.bf16.msra.mxu0 0
  %91 = vmatpush.bf16.msra.mxu0 0
  %92 = vmatpush.bf16.msra.mxu0 0
  %93 = vmatpush.bf16.msra.mxu0 %v70
  %94 = vmatmul.bf16.gmra.mxu0 %v65
  %v95 = vpop.f32.mrf.mxu0
  %v96 = vadd.f32 %v33, %v95
  %v97 = vpop.f32.mrf.mxu0
  %v98 = vadd.f32 %v33, %v97
  %99 = vdwg.mxu0
  %v102 = vrot.slane %v82, 2
  %v103 = vrot.slane %v82, 4
  %v104 = vrot.slane %v82, 6
  %v105 = vrot.slane %v84, 2
  %v106 = vrot.slane %v84, 4
  %v107 = vrot.slane %v84, 6
  %v114 = vpack.c.bf16 %v82, %v82
  %v115 = vpack.c.bf16 %v102, %v102
  %v116 = vpack.c.bf16 %v103, %v103
  %v117 = vpack.c.bf16 %v104, %v104
  %v118 = vpack.c.bf16 %v84, %v84
  %v119 = vpack.c.bf16 %v105, %v105
  %v120 = vpack.c.bf16 %v106, %v106
  %v121 = vpack.c.bf16 %v107, %v107
  %122 = vst [vmem:[#allocation2] sm:$0x1] %v114
  %123 = vst [vmem:[#allocation2 + $0x1] sm:$0x1] %v115
  %124 = vst [vmem:[#allocation2 + $0x2] sm:$0x1] %v116
  %125 = vst [vmem:[#allocation2 + $0x3] sm:$0x1] %v117
  %126 = vst [vmem:[#allocation2 + $0x4] sm:$0x1] %v118
  %127 = vst [vmem:[#allocation2 + $0x5] sm:$0x1] %v119
  %128 = vst [vmem:[#allocation2 + $0x6] sm:$0x1] %v120
  %129 = vst [vmem:[#allocation2 + $0x7] sm:$0x1] %v121
  %v132 = vrot.slane %v96, 2
  %v133 = vrot.slane %v96, 4
  %v134 = vrot.slane %v96, 6
  %v135 = vrot.slane %v98, 2
  %v136 = vrot.slane %v98, 4
  %v137 = vrot.slane %v98, 6
  %v144 = vpack.c.bf16 %v96, %v96
  %v145 = vpack.c.bf16 %v132, %v132
  %v146 = vpack.c.bf16 %v133, %v133
  %v147 = vpack.c.bf16 %v134, %v134
  %v148 = vpack.c.bf16 %v98, %v98
  %v149 = vpack.c.bf16 %v135, %v135
  %v150 = vpack.c.bf16 %v136, %v136
  %v151 = vpack.c.bf16 %v137, %v137
  %152 = vst [vmem:[#allocation3] sm:$0x1] %v144
  %153 = vst [vmem:[#allocation3 + $0x1] sm:$0x1] %v145
  %154 = vst [vmem:[#allocation3 + $0x2] sm:$0x1] %v146
  %155 = vst [vmem:[#allocation3 + $0x3] sm:$0x1] %v147
  %156 = vst [vmem:[#allocation3 + $0x4] sm:$0x1] %v148
  %157 = vst [vmem:[#allocation3 + $0x5] sm:$0x1] %v149
  %158 = vst [vmem:[#allocation3 + $0x6] sm:$0x1] %v150
  %159 = vst [vmem:[#allocation3 + $0x7] sm:$0x1] %v151
  %v160 = vld [vmem:[#allocation2] sm:$0x1]
  %v161 = vld [vmem:[%s3] sm:$0xf]
  %v162 = vld [vmem:[%s3 + $0x4] sm:$0xf]
  %v163 = vld [vmem:[%s3 + $0x8] sm:$0xf]
  %v164 = vld [vmem:[%s3 + $0xc] sm:$0xf]
  %v169 = vunpack.c.l.b16 %v161
  %v170 = vunpack.c.l.b16 %v162
  %v171 = vunpack.c.l.b16 %v163
  %v172 = vunpack.c.l.b16 %v164
  %v173 = vpack.c.b16 %v170, %v169
  %v174 = vpack.c.b16 %v172, %v171
  %vm177 = vcmask 261120
  %v179 = vsel %vm177, 0, 0
  %181 = vmatpush.bf16.msra.mxu0 0
  %182 = vmatpush.bf16.msra.mxu0 0
  %183 = vmatpush.bf16.msra.mxu0 0
  %184 = vmatpush.bf16.msra.mxu0 0
  %185 = vmatpush.bf16.msra.mxu0 0
  %186 = vmatpush.bf16.msra.mxu0 0
  %187 = vmatpush.bf16.msra.mxu0 %v174
  %188 = vmatpush.bf16.msra.mxu0 %v173
  %189 = vmatmul.bf16.gmra.mxu0 %v179
  %v190 = vpop.f32.mrf.mxu0
  %v191 = vadd.f32 0.0, %v190
  %v192 = vpop.f32.mrf.mxu0
  %193 = vdwg.mxu0
  %v194 = vunpack.c.l.bf16 %v160
  %v195 = vadd.f32 %v194, %v191
  %v196 = vxor.u32 %v195, 2147483648
  %v197 = vmul.f32 %v196, 1.442695
  %v198 = vpow.pop %v197
  %v199 = vadd.f32 %v198, 1.0
  %v200 = vrcp.pop %v199
  %v201 = vmul.f32 %v199, %v200
  %v202 = vsub.f32 1.0, %v201
  %v203 = vmul.f32 %v200, %v202
  %v204 = vadd.f32 %v200, %v203
  %vm205 = vweird.f32 %v199
  %vm206 = vweird.f32 %v200
  %vm207 = vmor %vm205, %vm206
  %v208 = vsel %vm207, %v200, %v204
  %v209 = vand.u32 2147483647, %v199
  %vm210 = vcmp.eq.f32.partialorder %v209, 8.507059e+37
  %v211 = vand.u32 %v199, 2147483648
  %v212 = vor.u32 1.1754944e-38, %v211
  %v213 = vsel %vm210, %v212, %v208
  %v214 = vmul.f32 1.0, %v213
  %v215 = vtanh.pop %v195
  %v216 = vmul.f32 %v214, 0.0
  %218 = vrot.lane.b32.xlu0 %v215, 64
  %v219 = vpop.permute.xlu0 %218
  %v221 = vmul.f32 %v214, %v219
  %223 = vrot.lane.b32.xlu0 %v221, 32
  %v224 = vpop.permute.xlu0 %223
  %v226 = vadd.f32 %v216, %v224
  %v227 = vtanh.pop %v226
  %229 = vrot.lane.b32.xlu0 %v227, 64
  %v230 = vpop.permute.xlu0 %229
  %v232 = vmul.f32 %v214, %v230
  %s233 = scalar_lea.vmem [#allocation3], 7
  %v234 = vld [vmem:[%s233] sm:$0x1]
  %v235 = vld [vmem:[%s4] sm:$0xf]
  %v236 = vld [vmem:[%s4 + $0x4] sm:$0xf]
  %v237 = vld [vmem:[%s4 + $0x8] sm:$0xf]
  %v238 = vld [vmem:[%s4 + $0xc] sm:$0xf]
  %v243 = vunpack.c.l.b16 %v235
  %v244 = vunpack.c.l.b16 %v236
  %v245 = vunpack.c.l.b16 %v237
  %v246 = vunpack.c.l.b16 %v238
  %v247 = vpack.c.b16 %v244, %v243
  %v248 = vpack.c.b16 %v246, %v245
  %251 = vmatpush.bf16.msra.mxu0 0
  %252 = vmatpush.bf16.msra.mxu0 0
  %253 = vmatpush.bf16.msra.mxu0 0
  %254 = vmatpush.bf16.msra.mxu0 0
  %255 = vmatpush.bf16.msra.mxu0 0
  %256 = vmatpush.bf16.msra.mxu0 0
  %257 = vmatpush.bf16.msra.mxu0 %v248
  %258 = vmatpush.bf16.msra.mxu0 %v247
  %259 = vmatmul.bf16.gmra.mxu0 %v179
  %v260 = vpop.f32.mrf.mxu0
  %v261 = vadd.f32 0.0, %v260
  %v262 = vpop.f32.mrf.mxu0
  %263 = vdwg.mxu0
  %v264 = vunpack.c.l.bf16 %v234
  %v265 = vadd.f32 %v264, %v261
  %v266 = vxor.u32 %v265, 2147483648
  %v267 = vmul.f32 %v266, 1.442695
  %v268 = vpow.pop %v267
  %v269 = vadd.f32 %v268, 1.0
  %v270 = vrcp.pop %v269
  %v271 = vmul.f32 %v269, %v270
  %v272 = vsub.f32 1.0, %v271
  %v273 = vmul.f32 %v270, %v272
  %v274 = vadd.f32 %v270, %v273
  %vm275 = vweird.f32 %v269
  %vm276 = vweird.f32 %v270
  %vm277 = vmor %vm275, %vm276
  %v278 = vsel %vm277, %v270, %v274
  %v279 = vand.u32 2147483647, %v269
  %vm280 = vcmp.eq.f32.partialorder %v279, 8.507059e+37
  %v281 = vand.u32 %v269, 2147483648
  %v282 = vor.u32 1.1754944e-38, %v281
  %v283 = vsel %vm280, %v282, %v278
  %v284 = vmul.f32 1.0, %v283
  %v285 = vtanh.pop %v265
  %v286 = vmul.f32 %v284, 0.0
  %288 = vrot.lane.b32.xlu0 %v285, 64
  %v289 = vpop.permute.xlu0 %288
  %v291 = vmul.f32 %v284, %v289
  %293 = vrot.lane.b32.xlu0 %v291, 32
  %v294 = vpop.permute.xlu0 %293
  %v296 = vadd.f32 %v286, %v294
  %v297 = vtanh.pop %v296
  %299 = vrot.lane.b32.xlu0 %v297, 64
  %v300 = vpop.permute.xlu0 %299
  %v302 = vmul.f32 %v284, %v300
  %v303 = vpack.c.bf16 %v232, %v232
  %v305 = vrot.slane %v303, 3
  %vm306 = vcmask 1040384
  %v309 = vsel %vm306, %v303, %v305
  %311 = vrot.lane.b32.xlu0 %v309, 32
  %v312 = vpop.permute.xlu0 %311
  %vm314 = vcmask 253952
  %315 = vst.msk [vmem:[%s5] sm:$0x1] %vm314, %v312
  %v316 = vpack.c.bf16 %v302, %v302
  %v318 = vrot.slane %v316, 3
  %v321 = vsel %vm306, %v316, %v318
  %323 = vrot.lane.b32.xlu0 %v321, 64
  %v324 = vpop.permute.xlu0 %323
  %s326 = scalar_lea.vmem %s5, 7
  %vm327 = vcmask 516352
  %328 = vst.msk [vmem:[%s326] sm:$0x1] %vm327, %v324
  %s329 = scalar_lea.vmem [#allocation2], 1
  %v330 = vld [vmem:[%s329] sm:$0x1]
  %v331 = vld [vmem:[%s3] sm:$0xf]
  %v332 = vld [vmem:[%s3 + $0x4] sm:$0xf]
  %v333 = vld [vmem:[%s3 + $0x8] sm:$0xf]
  %v334 = vld [vmem:[%s3 + $0xc] sm:$0xf]
  %v335 = vunpack.c.l.b16 %v303
  %v336 = vpack.c.b16 %v335, %v335
  %337 = vrot.lane.b32.xlu0 %v336, 32
  %v338 = vpop.permute.xlu0 %337
  %v343 = vunpack.c.l.b16 %v331
  %v344 = vunpack.c.l.b16 %v332
  %v345 = vunpack.c.l.b16 %v333
  %v346 = vunpack.c.l.b16 %v334
  %v347 = vpack.c.b16 %v344, %v343
  %v348 = vpack.c.b16 %v346, %v345
  %v352 = vsel %vm177, %v338, 0
  %354 = vmatpush.bf16.msra.mxu0 0
  %355 = vmatpush.bf16.msra.mxu0 0
  %356 = vmatpush.bf16.msra.mxu0 0
  %357 = vmatpush.bf16.msra.mxu0 0
  %358 = vmatpush.bf16.msra.mxu0 0
  %359 = vmatpush.bf16.msra.mxu0 0
  %360 = vmatpush.bf16.msra.mxu0 %v348
  %361 = vmatpush.bf16.msra.mxu0 %v347
  %362 = vmatmul.bf16.gmra.mxu0 %v352
  %v363 = vpop.f32.mrf.mxu0
  %v364 = vadd.f32 0.0, %v363
  %v365 = vpop.f32.mrf.mxu0
  %366 = vdwg.mxu0
  %v367 = vunpack.c.l.bf16 %v330
  %v368 = vadd.f32 %v367, %v364
  %v369 = vxor.u32 %v368, 2147483648
  %v370 = vmul.f32 %v369, 1.442695
  %v371 = vpow.pop %v370
  %v372 = vadd.f32 %v371, 1.0
  %v373 = vrcp.pop %v372
  %v374 = vmul.f32 %v372, %v373
  %v375 = vsub.f32 1.0, %v374
  %v376 = vmul.f32 %v373, %v375
  %v377 = vadd.f32 %v373, %v376
  %vm378 = vweird.f32 %v372
  %vm379 = vweird.f32 %v373
  %vm380 = vmor %vm378, %vm379
  %v381 = vsel %vm380, %v373, %v377
  %v382 = vand.u32 2147483647, %v372
  %vm383 = vcmp.eq.f32.partialorder %v382, 8.507059e+37
  %v384 = vand.u32 %v372, 2147483648
  %v385 = vor.u32 1.1754944e-38, %v384
  %v386 = vsel %vm383, %v385, %v381
  %v387 = vmul.f32 1.0, %v386
  %v388 = vtanh.pop %v368
  %v389 = vmul.f32 %v387, %v226
  %391 = vrot.lane.b32.xlu0 %v388, 64
  %v392 = vpop.permute.xlu0 %391
  %v394 = vmul.f32 %v387, %v392
  %396 = vrot.lane.b32.xlu0 %v394, 32
  %v397 = vpop.permute.xlu0 %396
  %v399 = vadd.f32 %v389, %v397
  %v400 = vtanh.pop %v399
  %402 = vrot.lane.b32.xlu0 %v400, 64
  %v403 = vpop.permute.xlu0 %402
  %v405 = vmul.f32 %v387, %v403
  %s406 = scalar_lea.vmem [#allocation3], 6
  %v407 = vld [vmem:[%s406] sm:$0x1]
  %v408 = vld [vmem:[%s4] sm:$0xf]
  %v409 = vld [vmem:[%s4 + $0x4] sm:$0xf]
  %v410 = vld [vmem:[%s4 + $0x8] sm:$0xf]
  %v411 = vld [vmem:[%s4 + $0xc] sm:$0xf]
  %v412 = vunpack.c.l.b16 %v316
  %v413 = vpack.c.b16 %v412, %v412
  %414 = vrot.lane.b32.xlu0 %v413, 32
  %v415 = vpop.permute.xlu0 %414
  %v420 = vunpack.c.l.b16 %v408
  %v421 = vunpack.c.l.b16 %v409
  %v422 = vunpack.c.l.b16 %v410
  %v423 = vunpack.c.l.b16 %v411
  %v424 = vpack.c.b16 %v421, %v420
  %v425 = vpack.c.b16 %v423, %v422
  %v429 = vsel %vm177, %v415, 0
  %431 = vmatpush.bf16.msra.mxu0 0
  %432 = vmatpush.bf16.msra.mxu0 0
  %433 = vmatpush.bf16.msra.mxu0 0
  %434 = vmatpush.bf16.msra.mxu0 0
  %435 = vmatpush.bf16.msra.mxu0 0
  %436 = vmatpush.bf16.msra.mxu0 0
  %437 = vmatpush.bf16.msra.mxu0 %v425
  %438 = vmatpush.bf16.msra.mxu0 %v424
  %439 = vmatmul.bf16.gmra.mxu0 %v429
  %v440 = vpop.f32.mrf.mxu0
  %v441 = vadd.f32 0.0, %v440
  %v442 = vpop.f32.mrf.mxu0
  %443 = vdwg.mxu0
  %v444 = vunpack.c.l.bf16 %v407
  %v445 = vadd.f32 %v444, %v441
  %v446 = vxor.u32 %v445, 2147483648
  %v447 = vmul.f32 %v446, 1.442695
  %v448 = vpow.pop %v447
  %v449 = vadd.f32 %v448, 1.0
  %v450 = vrcp.pop %v449
  %v451 = vmul.f32 %v449, %v450
  %v452 = vsub.f32 1.0, %v451
  %v453 = vmul.f32 %v450, %v452
  %v454 = vadd.f32 %v450, %v453
  %vm455 = vweird.f32 %v449
  %vm456 = vweird.f32 %v450
  %vm457 = vmor %vm455, %vm456
  %v458 = vsel %vm457, %v450, %v454
  %v459 = vand.u32 2147483647, %v449
  %vm460 = vcmp.eq.f32.partialorder %v459, 8.507059e+37
  %v461 = vand.u32 %v449, 2147483648
  %v462 = vor.u32 1.1754944e-38, %v461
  %v463 = vsel %vm460, %v462, %v458
  %v464 = vmul.f32 1.0, %v463
  %v465 = vtanh.pop %v445
  %v466 = vmul.f32 %v464, %v296
  %468 = vrot.lane.b32.xlu0 %v465, 64
  %v469 = vpop.permute.xlu0 %468
  %v471 = vmul.f32 %v464, %v469
  %473 = vrot.lane.b32.xlu0 %v471, 32
  %v474 = vpop.permute.xlu0 %473
  %v476 = vadd.f32 %v466, %v474
  %v477 = vtanh.pop %v476
  %479 = vrot.lane.b32.xlu0 %v477, 64
  %v480 = vpop.permute.xlu0 %479
  %v482 = vmul.f32 %v464, %v480
  %v483 = vpack.c.bf16 %v405, %v405
  %v485 = vrot.slane %v483, 3
  %v488 = vsel %vm306, %v483, %v485
  %490 = vrot.lane.b32.xlu0 %v488, 32
  %v491 = vpop.permute.xlu0 %490
  %s493 = scalar_lea.vmem %s5, 1
  %494 = vst.msk [vmem:[%s493] sm:$0x1] %vm314, %v491
  %v495 = vpack.c.bf16 %v482, %v482
  %v497 = vrot.slane %v495, 3
  %v500 = vsel %vm306, %v495, %v497
  %502 = vrot.lane.b32.xlu0 %v500, 64
  %v503 = vpop.permute.xlu0 %502
  %s505 = scalar_lea.vmem %s5, 6
  %506 = vst.msk [vmem:[%s505] sm:$0x1] %vm327, %v503
  %s507 = scalar_lea.vmem [#allocation2], 2
  %v508 = vld [vmem:[%s507] sm:$0x1]
  %v509 = vld [vmem:[%s3] sm:$0xf]
  %v510 = vld [vmem:[%s3 + $0x4] sm:$0xf]
  %v511 = vld [vmem:[%s3 + $0x8] sm:$0xf]
  %v512 = vld [vmem:[%s3 + $0xc] sm:$0xf]
  %v513 = vunpack.c.l.b16 %v483
  %v514 = vpack.c.b16 %v513, %v513
  %515 = vrot.lane.b32.xlu0 %v514, 32
  %v516 = vpop.permute.xlu0 %515
  %v521 = vunpack.c.l.b16 %v509
  %v522 = vunpack.c.l.b16 %v510
  %v523 = vunpack.c.l.b16 %v511
  %v524 = vunpack.c.l.b16 %v512
  %v525 = vpack.c.b16 %v522, %v521
  %v526 = vpack.c.b16 %v524, %v523
  %v530 = vsel %vm177, %v516, 0
  %532 = vmatpush.bf16.msra.mxu0 0
  %533 = vmatpush.bf16.msra.mxu0 0
  %534 = vmatpush.bf16.msra.mxu0 0
  %535 = vmatpush.bf16.msra.mxu0 0
  %536 = vmatpush.bf16.msra.mxu0 0
  %537 = vmatpush.bf16.msra.mxu0 0
  %538 = vmatpush.bf16.msra.mxu0 %v526
  %539 = vmatpush.bf16.msra.mxu0 %v525
  %540 = vmatmul.bf16.gmra.mxu0 %v530
  %v541 = vpop.f32.mrf.mxu0
  %v542 = vadd.f32 0.0, %v541
  %v543 = vpop.f32.mrf.mxu0
  %544 = vdwg.mxu0
  %v545 = vunpack.c.l.bf16 %v508
  %v546 = vadd.f32 %v545, %v542
  %v547 = vxor.u32 %v546, 2147483648
  %v548 = vmul.f32 %v547, 1.442695
  %v549 = vpow.pop %v548
  %v550 = vadd.f32 %v549, 1.0
  %v551 = vrcp.pop %v550
  %v552 = vmul.f32 %v550, %v551
  %v553 = vsub.f32 1.0, %v552
  %v554 = vmul.f32 %v551, %v553
  %v555 = vadd.f32 %v551, %v554
  %vm556 = vweird.f32 %v550
  %vm557 = vweird.f32 %v551
  %vm558 = vmor %vm556, %vm557
  %v559 = vsel %vm558, %v551, %v555
  %v560 = vand.u32 2147483647, %v550
  %vm561 = vcmp.eq.f32.partialorder %v560, 8.507059e+37
  %v562 = vand.u32 %v550, 2147483648
  %v563 = vor.u32 1.1754944e-38, %v562
  %v564 = vsel %vm561, %v563, %v559
  %v565 = vmul.f32 1.0, %v564
  %v566 = vtanh.pop %v546
  %v567 = vmul.f32 %v565, %v399
  %569 = vrot.lane.b32.xlu0 %v566, 64
  %v570 = vpop.permute.xlu0 %569
  %v572 = vmul.f32 %v565, %v570
  %574 = vrot.lane.b32.xlu0 %v572, 32
  %v575 = vpop.permute.xlu0 %574
  %v577 = vadd.f32 %v567, %v575
  %v578 = vtanh.pop %v577
  %580 = vrot.lane.b32.xlu0 %v578, 64
  %v581 = vpop.permute.xlu0 %580
  %v583 = vmul.f32 %v565, %v581
  %s584 = scalar_lea.vmem [#allocation3], 5
  %v585 = vld [vmem:[%s584] sm:$0x1]
  %v586 = vld [vmem:[%s4] sm:$0xf]
  %v587 = vld [vmem:[%s4 + $0x4] sm:$0xf]
  %v588 = vld [vmem:[%s4 + $0x8] sm:$0xf]
  %v589 = vld [vmem:[%s4 + $0xc] sm:$0xf]
  %v590 = vunpack.c.l.b16 %v495
  %v591 = vpack.c.b16 %v590, %v590
  %592 = vrot.lane.b32.xlu0 %v591, 32
  %v593 = vpop.permute.xlu0 %592
  %v598 = vunpack.c.l.b16 %v586
  %v599 = vunpack.c.l.b16 %v587
  %v600 = vunpack.c.l.b16 %v588
  %v601 = vunpack.c.l.b16 %v589
  %v602 = vpack.c.b16 %v599, %v598
  %v603 = vpack.c.b16 %v601, %v600
  %v607 = vsel %vm177, %v593, 0
  %609 = vmatpush.bf16.msra.mxu0 0
  %610 = vmatpush.bf16.msra.mxu0 0
  %611 = vmatpush.bf16.msra.mxu0 0
  %612 = vmatpush.bf16.msra.mxu0 0
  %613 = vmatpush.bf16.msra.mxu0 0
  %614 = vmatpush.bf16.msra.mxu0 0
  %615 = vmatpush.bf16.msra.mxu0 %v603
  %616 = vmatpush.bf16.msra.mxu0 %v602
  %617 = vmatmul.bf16.gmra.mxu0 %v607
  %v618 = vpop.f32.mrf.mxu0
  %v619 = vadd.f32 0.0, %v618
  %v620 = vpop.f32.mrf.mxu0
  %621 = vdwg.mxu0
  %v622 = vunpack.c.l.bf16 %v585
  %v623 = vadd.f32 %v622, %v619
  %v624 = vxor.u32 %v623, 2147483648
  %v625 = vmul.f32 %v624, 1.442695
  %v626 = vpow.pop %v625
  %v627 = vadd.f32 %v626, 1.0
  %v628 = vrcp.pop %v627
  %v629 = vmul.f32 %v627, %v628
  %v630 = vsub.f32 1.0, %v629
  %v631 = vmul.f32 %v628, %v630
  %v632 = vadd.f32 %v628, %v631
  %vm633 = vweird.f32 %v627
  %vm634 = vweird.f32 %v628
  %vm635 = vmor %vm633, %vm634
  %v636 = vsel %vm635, %v628, %v632
  %v637 = vand.u32 2147483647, %v627
  %vm638 = vcmp.eq.f32.partialorder %v637, 8.507059e+37
  %v639 = vand.u32 %v627, 2147483648
  %v640 = vor.u32 1.1754944e-38, %v639
  %v641 = vsel %vm638, %v640, %v636
  %v642 = vmul.f32 1.0, %v641
  %v643 = vtanh.pop %v623
  %v644 = vmul.f32 %v642, %v476
  %646 = vrot.lane.b32.xlu0 %v643, 64
  %v647 = vpop.permute.xlu0 %646
  %v649 = vmul.f32 %v642, %v647
  %651 = vrot.lane.b32.xlu0 %v649, 32
  %v652 = vpop.permute.xlu0 %651
  %v654 = vadd.f32 %v644, %v652
  %v655 = vtanh.pop %v654
  %657 = vrot.lane.b32.xlu0 %v655, 64
  %v658 = vpop.permute.xlu0 %657
  %v660 = vmul.f32 %v642, %v658
  %v661 = vpack.c.bf16 %v583, %v583
  %v663 = vrot.slane %v661, 3
  %v666 = vsel %vm306, %v661, %v663
  %668 = vrot.lane.b32.xlu0 %v666, 32
  %v669 = vpop.permute.xlu0 %668
  %s671 = scalar_lea.vmem %s5, 2
  %672 = vst.msk [vmem:[%s671] sm:$0x1] %vm314, %v669
  %v673 = vpack.c.bf16 %v660, %v660
  %v675 = vrot.slane %v673, 3
  %v678 = vsel %vm306, %v673, %v675
  %680 = vrot.lane.b32.xlu0 %v678, 64
  %v681 = vpop.permute.xlu0 %680
  %s683 = scalar_lea.vmem %s5, 5
  %684 = vst.msk [vmem:[%s683] sm:$0x1] %vm327, %v681
  %s685 = scalar_lea.vmem [#allocation2], 3
  %v686 = vld [vmem:[%s685] sm:$0x1]
  %v687 = vld [vmem:[%s3] sm:$0xf]
  %v688 = vld [vmem:[%s3 + $0x4] sm:$0xf]
  %v689 = vld [vmem:[%s3 + $0x8] sm:$0xf]
  %v690 = vld [vmem:[%s3 + $0xc] sm:$0xf]
  %v691 = vunpack.c.l.b16 %v661
  %v692 = vpack.c.b16 %v691, %v691
  %693 = vrot.lane.b32.xlu0 %v692, 32
  %v694 = vpop.permute.xlu0 %693
  %v699 = vunpack.c.l.b16 %v687
  %v700 = vunpack.c.l.b16 %v688
  %v701 = vunpack.c.l.b16 %v689
  %v702 = vunpack.c.l.b16 %v690
  %v703 = vpack.c.b16 %v700, %v699
  %v704 = vpack.c.b16 %v702, %v701
  %v708 = vsel %vm177, %v694, 0
  %710 = vmatpush.bf16.msra.mxu0 0
  %711 = vmatpush.bf16.msra.mxu0 0
  %712 = vmatpush.bf16.msra.mxu0 0
  %713 = vmatpush.bf16.msra.mxu0 0
  %714 = vmatpush.bf16.msra.mxu0 0
  %715 = vmatpush.bf16.msra.mxu0 0
  %716 = vmatpush.bf16.msra.mxu0 %v704
  %717 = vmatpush.bf16.msra.mxu0 %v703
  %718 = vmatmul.bf16.gmra.mxu0 %v708
  %v719 = vpop.f32.mrf.mxu0
  %v720 = vadd.f32 0.0, %v719
  %v721 = vpop.f32.mrf.mxu0
  %722 = vdwg.mxu0
  %v723 = vunpack.c.l.bf16 %v686
  %v724 = vadd.f32 %v723, %v720
  %v725 = vxor.u32 %v724, 2147483648
  %v726 = vmul.f32 %v725, 1.442695
  %v727 = vpow.pop %v726
  %v728 = vadd.f32 %v727, 1.0
  %v729 = vrcp.pop %v728
  %v730 = vmul.f32 %v728, %v729
  %v731 = vsub.f32 1.0, %v730
  %v732 = vmul.f32 %v729, %v731
  %v733 = vadd.f32 %v729, %v732
  %vm734 = vweird.f32 %v728
  %vm735 = vweird.f32 %v729
  %vm736 = vmor %vm734, %vm735
  %v737 = vsel %vm736, %v729, %v733
  %v738 = vand.u32 2147483647, %v728
  %vm739 = vcmp.eq.f32.partialorder %v738, 8.507059e+37
  %v740 = vand.u32 %v728, 2147483648
  %v741 = vor.u32 1.1754944e-38, %v740
  %v742 = vsel %vm739, %v741, %v737
  %v743 = vmul.f32 1.0, %v742
  %v744 = vtanh.pop %v724
  %v745 = vmul.f32 %v743, %v577
  %747 = vrot.lane.b32.xlu0 %v744, 64
  %v748 = vpop.permute.xlu0 %747
  %v750 = vmul.f32 %v743, %v748
  %752 = vrot.lane.b32.xlu0 %v750, 32
  %v753 = vpop.permute.xlu0 %752
  %v755 = vadd.f32 %v745, %v753
  %v756 = vtanh.pop %v755
  %758 = vrot.lane.b32.xlu0 %v756, 64
  %v759 = vpop.permute.xlu0 %758
  %v761 = vmul.f32 %v743, %v759
  %s762 = scalar_lea.vmem [#allocation3], 4
  %v763 = vld [vmem:[%s762] sm:$0x1]
  %v764 = vld [vmem:[%s4] sm:$0xf]
  %v765 = vld [vmem:[%s4 + $0x4] sm:$0xf]
  %v766 = vld [vmem:[%s4 + $0x8] sm:$0xf]
  %v767 = vld [vmem:[%s4 + $0xc] sm:$0xf]
  %v768 = vunpack.c.l.b16 %v673
  %v769 = vpack.c.b16 %v768, %v768
  %770 = vrot.lane.b32.xlu0 %v769, 32
  %v771 = vpop.permute.xlu0 %770
  %v776 = vunpack.c.l.b16 %v764
  %v777 = vunpack.c.l.b16 %v765
  %v778 = vunpack.c.l.b16 %v766
  %v779 = vunpack.c.l.b16 %v767
  %v780 = vpack.c.b16 %v777, %v776
  %v781 = vpack.c.b16 %v779, %v778
  %v785 = vsel %vm177, %v771, 0
  %787 = vmatpush.bf16.msra.mxu0 0
  %788 = vmatpush.bf16.msra.mxu0 0
  %789 = vmatpush.bf16.msra.mxu0 0
  %790 = vmatpush.bf16.msra.mxu0 0
  %791 = vmatpush.bf16.msra.mxu0 0
  %792 = vmatpush.bf16.msra.mxu0 0
  %793 = vmatpush.bf16.msra.mxu0 %v781
  %794 = vmatpush.bf16.msra.mxu0 %v780
  %795 = vmatmul.bf16.gmra.mxu0 %v785
  %v796 = vpop.f32.mrf.mxu0
  %v797 = vadd.f32 0.0, %v796
  %v798 = vpop.f32.mrf.mxu0
  %799 = vdwg.mxu0
  %v800 = vunpack.c.l.bf16 %v763
  %v801 = vadd.f32 %v800, %v797
  %v802 = vxor.u32 %v801, 2147483648
  %v803 = vmul.f32 %v802, 1.442695
  %v804 = vpow.pop %v803
  %v805 = vadd.f32 %v804, 1.0
  %v806 = vrcp.pop %v805
  %v807 = vmul.f32 %v805, %v806
  %v808 = vsub.f32 1.0, %v807
  %v809 = vmul.f32 %v806, %v808
  %v810 = vadd.f32 %v806, %v809
  %vm811 = vweird.f32 %v805
  %vm812 = vweird.f32 %v806
  %vm813 = vmor %vm811, %vm812
  %v814 = vsel %vm813, %v806, %v810
  %v815 = vand.u32 2147483647, %v805
  %vm816 = vcmp.eq.f32.partialorder %v815, 8.507059e+37
  %v817 = vand.u32 %v805, 2147483648
  %v818 = vor.u32 1.1754944e-38, %v817
  %v819 = vsel %vm816, %v818, %v814
  %v820 = vmul.f32 1.0, %v819
  %v821 = vtanh.pop %v801
  %v822 = vmul.f32 %v820, %v654
  %824 = vrot.lane.b32.xlu0 %v821, 64
  %v825 = vpop.permute.xlu0 %824
  %v827 = vmul.f32 %v820, %v825
  %829 = vrot.lane.b32.xlu0 %v827, 32
  %v830 = vpop.permute.xlu0 %829
  %v832 = vadd.f32 %v822, %v830
  %v833 = vtanh.pop %v832
  %835 = vrot.lane.b32.xlu0 %v833, 64
  %v836 = vpop.permute.xlu0 %835
  %v838 = vmul.f32 %v820, %v836
  %v839 = vpack.c.bf16 %v761, %v761
  %v841 = vrot.slane %v839, 3
  %v844 = vsel %vm306, %v839, %v841
  %846 = vrot.lane.b32.xlu0 %v844, 32
  %v847 = vpop.permute.xlu0 %846
  %s849 = scalar_lea.vmem %s5, 3
  %850 = vst.msk [vmem:[%s849] sm:$0x1] %vm314, %v847
  %v851 = vpack.c.bf16 %v838, %v838
  %v853 = vrot.slane %v851, 3
  %v856 = vsel %vm306, %v851, %v853
  %858 = vrot.lane.b32.xlu0 %v856, 64
  %v859 = vpop.permute.xlu0 %858
  %s861 = scalar_lea.vmem %s5, 4
  %862 = vst.msk [vmem:[%s861] sm:$0x1] %vm327, %v859
  %s863 = scalar_lea.vmem [#allocation2], 4
  %v864 = vld [vmem:[%s863] sm:$0x1]
  %v865 = vld [vmem:[%s3] sm:$0xf]
  %v866 = vld [vmem:[%s3 + $0x4] sm:$0xf]
  %v867 = vld [vmem:[%s3 + $0x8] sm:$0xf]
  %v868 = vld [vmem:[%s3 + $0xc] sm:$0xf]
  %v869 = vunpack.c.l.b16 %v839
  %v870 = vpack.c.b16 %v869, %v869
  %871 = vrot.lane.b32.xlu0 %v870, 32
  %v872 = vpop.permute.xlu0 %871
  %v877 = vunpack.c.l.b16 %v865
  %v878 = vunpack.c.l.b16 %v866
  %v879 = vunpack.c.l.b16 %v867
  %v880 = vunpack.c.l.b16 %v868
  %v881 = vpack.c.b16 %v878, %v877
  %v882 = vpack.c.b16 %v880, %v879
  %v886 = vsel %vm177, %v872, 0
  %888 = vmatpush.bf16.msra.mxu0 0
  %889 = vmatpush.bf16.msra.mxu0 0
  %890 = vmatpush.bf16.msra.mxu0 0
  %891 = vmatpush.bf16.msra.mxu0 0
  %892 = vmatpush.bf16.msra.mxu0 0
  %893 = vmatpush.bf16.msra.mxu0 0
  %894 = vmatpush.bf16.msra.mxu0 %v882
  %895 = vmatpush.bf16.msra.mxu0 %v881
  %896 = vmatmul.bf16.gmra.mxu0 %v886
  %v897 = vpop.f32.mrf.mxu0
  %v898 = vadd.f32 0.0, %v897
  %v899 = vpop.f32.mrf.mxu0
  %900 = vdwg.mxu0
  %v901 = vunpack.c.l.bf16 %v864
  %v902 = vadd.f32 %v901, %v898
  %v903 = vxor.u32 %v902, 2147483648
  %v904 = vmul.f32 %v903, 1.442695
  %v905 = vpow.pop %v904
  %v906 = vadd.f32 %v905, 1.0
  %v907 = vrcp.pop %v906
  %v908 = vmul.f32 %v906, %v907
  %v909 = vsub.f32 1.0, %v908
  %v910 = vmul.f32 %v907, %v909
  %v911 = vadd.f32 %v907, %v910
  %vm912 = vweird.f32 %v906
  %vm913 = vweird.f32 %v907
  %vm914 = vmor %vm912, %vm913
  %v915 = vsel %vm914, %v907, %v911
  %v916 = vand.u32 2147483647, %v906
  %vm917 = vcmp.eq.f32.partialorder %v916, 8.507059e+37
  %v918 = vand.u32 %v906, 2147483648
  %v919 = vor.u32 1.1754944e-38, %v918
  %v920 = vsel %vm917, %v919, %v915
  %v921 = vmul.f32 1.0, %v920
  %v922 = vtanh.pop %v902
  %v923 = vmul.f32 %v921, %v755
  %925 = vrot.lane.b32.xlu0 %v922, 64
  %v926 = vpop.permute.xlu0 %925
  %v928 = vmul.f32 %v921, %v926
  %930 = vrot.lane.b32.xlu0 %v928, 32
  %v931 = vpop.permute.xlu0 %930
  %v933 = vadd.f32 %v923, %v931
  %v934 = vtanh.pop %v933
  %936 = vrot.lane.b32.xlu0 %v934, 64
  %v937 = vpop.permute.xlu0 %936
  %v939 = vmul.f32 %v921, %v937
  %s940 = scalar_lea.vmem [#allocation3], 3
  %v941 = vld [vmem:[%s940] sm:$0x1]
  %v942 = vld [vmem:[%s4] sm:$0xf]
  %v943 = vld [vmem:[%s4 + $0x4] sm:$0xf]
  %v944 = vld [vmem:[%s4 + $0x8] sm:$0xf]
  %v945 = vld [vmem:[%s4 + $0xc] sm:$0xf]
  %v946 = vunpack.c.l.b16 %v851
  %v947 = vpack.c.b16 %v946, %v946
  %948 = vrot.lane.b32.xlu0 %v947, 32
  %v949 = vpop.permute.xlu0 %948
  %v954 = vunpack.c.l.b16 %v942
  %v955 = vunpack.c.l.b16 %v943
  %v956 = vunpack.c.l.b16 %v944
  %v957 = vunpack.c.l.b16 %v945
  %v958 = vpack.c.b16 %v955, %v954
  %v959 = vpack.c.b16 %v957, %v956
  %v963 = vsel %vm177, %v949, 0
  %965 = vmatpush.bf16.msra.mxu0 0
  %966 = vmatpush.bf16.msra.mxu0 0
  %967 = vmatpush.bf16.msra.mxu0 0
  %968 = vmatpush.bf16.msra.mxu0 0
  %969 = vmatpush.bf16.msra.mxu0 0
  %970 = vmatpush.bf16.msra.mxu0 0
  %971 = vmatpush.bf16.msra.mxu0 %v959
  %972 = vmatpush.bf16.msra.mxu0 %v958
  %973 = vmatmul.bf16.gmra.mxu0 %v963
  %v974 = vpop.f32.mrf.mxu0
  %v975 = vadd.f32 0.0, %v974
  %v976 = vpop.f32.mrf.mxu0
  %977 = vdwg.mxu0
  %v978 = vunpack.c.l.bf16 %v941
  %v979 = vadd.f32 %v978, %v975
  %v980 = vxor.u32 %v979, 2147483648
  %v981 = vmul.f32 %v980, 1.442695
  %v982 = vpow.pop %v981
  %v983 = vadd.f32 %v982, 1.0
  %v984 = vrcp.pop %v983
  %v985 = vmul.f32 %v983, %v984
  %v986 = vsub.f32 1.0, %v985
  %v987 = vmul.f32 %v984, %v986
  %v988 = vadd.f32 %v984, %v987
  %vm989 = vweird.f32 %v983
  %vm990 = vweird.f32 %v984
  %vm991 = vmor %vm989, %vm990
  %v992 = vsel %vm991, %v984, %v988
  %v993 = vand.u32 2147483647, %v983
  %vm994 = vcmp.eq.f32.partialorder %v993, 8.507059e+37
  %v995 = vand.u32 %v983, 2147483648
  %v996 = vor.u32 1.1754944e-38, %v995
  %v997 = vsel %vm994, %v996, %v992
  %v998 = vmul.f32 1.0, %v997
  %v999 = vtanh.pop %v979
  %v1000 = vmul.f32 %v998, %v832
  %1002 = vrot.lane.b32.xlu0 %v999, 64
  %v1003 = vpop.permute.xlu0 %1002
  %v1005 = vmul.f32 %v998, %v1003
  %1007 = vrot.lane.b32.xlu0 %v1005, 32
  %v1008 = vpop.permute.xlu0 %1007
  %v1010 = vadd.f32 %v1000, %v1008
  %v1011 = vtanh.pop %v1010
  %1013 = vrot.lane.b32.xlu0 %v1011, 64
  %v1014 = vpop.permute.xlu0 %1013
  %v1016 = vmul.f32 %v998, %v1014
  %v1017 = vpack.c.bf16 %v939, %v939
  %v1019 = vrot.slane %v1017, 3
  %v1022 = vsel %vm306, %v1017, %v1019
  %1024 = vrot.lane.b32.xlu0 %v1022, 32
  %v1025 = vpop.permute.xlu0 %1024
  %1027 = vst.msk [vmem:[%s861] sm:$0x1] %vm314, %v1025
  %v1028 = vpack.c.bf16 %v1016, %v1016
  %v1030 = vrot.slane %v1028, 3
  %v1033 = vsel %vm306, %v1028, %v1030
  %1035 = vrot.lane.b32.xlu0 %v1033, 64
  %v1036 = vpop.permute.xlu0 %1035
  %1038 = vst.msk [vmem:[%s849] sm:$0x1] %vm327, %v1036
  %s1039 = scalar_lea.vmem [#allocation2], 5
  %v1040 = vld [vmem:[%s1039] sm:$0x1]
  %v1041 = vld [vmem:[%s3] sm:$0xf]
  %v1042 = vld [vmem:[%s3 + $0x4] sm:$0xf]
  %v1043 = vld [vmem:[%s3 + $0x8] sm:$0xf]
  %v1044 = vld [vmem:[%s3 + $0xc] sm:$0xf]
  %v1045 = vunpack.c.l.b16 %v1017
  %v1046 = vpack.c.b16 %v1045, %v1045
  %1047 = vrot.lane.b32.xlu0 %v1046, 32
  %v1048 = vpop.permute.xlu0 %1047
  %v1053 = vunpack.c.l.b16 %v1041
  %v1054 = vunpack.c.l.b16 %v1042
  %v1055 = vunpack.c.l.b16 %v1043
  %v1056 = vunpack.c.l.b16 %v1044
  %v1057 = vpack.c.b16 %v1054, %v1053
  %v1058 = vpack.c.b16 %v1056, %v1055
  %v1062 = vsel %vm177, %v1048, 0
  %1064 = vmatpush.bf16.msra.mxu0 0
  %1065 = vmatpush.bf16.msra.mxu0 0
  %1066 = vmatpush.bf16.msra.mxu0 0
  %1067 = vmatpush.bf16.msra.mxu0 0
  %1068 = vmatpush.bf16.msra.mxu0 0
  %1069 = vmatpush.bf16.msra.mxu0 0
  %1070 = vmatpush.bf16.msra.mxu0 %v1058
  %1071 = vmatpush.bf16.msra.mxu0 %v1057
  %1072 = vmatmul.bf16.gmra.mxu0 %v1062
  %v1073 = vpop.f32.mrf.mxu0
  %v1074 = vadd.f32 0.0, %v1073
  %v1075 = vpop.f32.mrf.mxu0
  %1076 = vdwg.mxu0
  %v1077 = vunpack.c.l.bf16 %v1040
  %v1078 = vadd.f32 %v1077, %v1074
  %v1079 = vxor.u32 %v1078, 2147483648
  %v1080 = vmul.f32 %v1079, 1.442695
  %v1081 = vpow.pop %v1080
  %v1082 = vadd.f32 %v1081, 1.0
  %v1083 = vrcp.pop %v1082
  %v1084 = vmul.f32 %v1082, %v1083
  %v1085 = vsub.f32 1.0, %v1084
  %v1086 = vmul.f32 %v1083, %v1085
  %v1087 = vadd.f32 %v1083, %v1086
  %vm1088 = vweird.f32 %v1082
  %vm1089 = vweird.f32 %v1083
  %vm1090 = vmor %vm1088, %vm1089
  %v1091 = vsel %vm1090, %v1083, %v1087
  %v1092 = vand.u32 2147483647, %v1082
  %vm1093 = vcmp.eq.f32.partialorder %v1092, 8.507059e+37
  %v1094 = vand.u32 %v1082, 2147483648
  %v1095 = vor.u32 1.1754944e-38, %v1094
  %v1096 = vsel %vm1093, %v1095, %v1091
  %v1097 = vmul.f32 1.0, %v1096
  %v1098 = vtanh.pop %v1078
  %v1099 = vmul.f32 %v1097, %v933
  %1101 = vrot.lane.b32.xlu0 %v1098, 64
  %v1102 = vpop.permute.xlu0 %1101
  %v1104 = vmul.f32 %v1097, %v1102
  %1106 = vrot.lane.b32.xlu0 %v1104, 32
  %v1107 = vpop.permute.xlu0 %1106
  %v1109 = vadd.f32 %v1099, %v1107
  %v1110 = vtanh.pop %v1109
  %1112 = vrot.lane.b32.xlu0 %v1110, 64
  %v1113 = vpop.permute.xlu0 %1112
  %v1115 = vmul.f32 %v1097, %v1113
  %s1116 = scalar_lea.vmem [#allocation3], 2
  %v1117 = vld [vmem:[%s1116] sm:$0x1]
  %v1118 = vld [vmem:[%s4] sm:$0xf]
  %v1119 = vld [vmem:[%s4 + $0x4] sm:$0xf]
  %v1120 = vld [vmem:[%s4 + $0x8] sm:$0xf]
  %v1121 = vld [vmem:[%s4 + $0xc] sm:$0xf]
  %v1122 = vunpack.c.l.b16 %v1028
  %v1123 = vpack.c.b16 %v1122, %v1122
  %1124 = vrot.lane.b32.xlu0 %v1123, 32
  %v1125 = vpop.permute.xlu0 %1124
  %v1130 = vunpack.c.l.b16 %v1118
  %v1131 = vunpack.c.l.b16 %v1119
  %v1132 = vunpack.c.l.b16 %v1120
  %v1133 = vunpack.c.l.b16 %v1121
  %v1134 = vpack.c.b16 %v1131, %v1130
  %v1135 = vpack.c.b16 %v1133, %v1132
  %v1139 = vsel %vm177, %v1125, 0
  %1141 = vmatpush.bf16.msra.mxu0 0
  %1142 = vmatpush.bf16.msra.mxu0 0
  %1143 = vmatpush.bf16.msra.mxu0 0
  %1144 = vmatpush.bf16.msra.mxu0 0
  %1145 = vmatpush.bf16.msra.mxu0 0
  %1146 = vmatpush.bf16.msra.mxu0 0
  %1147 = vmatpush.bf16.msra.mxu0 %v1135
  %1148 = vmatpush.bf16.msra.mxu0 %v1134
  %1149 = vmatmul.bf16.gmra.mxu0 %v1139
  %v1150 = vpop.f32.mrf.mxu0
  %v1151 = vadd.f32 0.0, %v1150
  %v1152 = vpop.f32.mrf.mxu0
  %1153 = vdwg.mxu0
  %v1154 = vunpack.c.l.bf16 %v1117
  %v1155 = vadd.f32 %v1154, %v1151
  %v1156 = vxor.u32 %v1155, 2147483648
  %v1157 = vmul.f32 %v1156, 1.442695
  %v1158 = vpow.pop %v1157
  %v1159 = vadd.f32 %v1158, 1.0
  %v1160 = vrcp.pop %v1159
  %v1161 = vmul.f32 %v1159, %v1160
  %v1162 = vsub.f32 1.0, %v1161
  %v1163 = vmul.f32 %v1160, %v1162
  %v1164 = vadd.f32 %v1160, %v1163
  %vm1165 = vweird.f32 %v1159
  %vm1166 = vweird.f32 %v1160
  %vm1167 = vmor %vm1165, %vm1166
  %v1168 = vsel %vm1167, %v1160, %v1164
  %v1169 = vand.u32 2147483647, %v1159
  %vm1170 = vcmp.eq.f32.partialorder %v1169, 8.507059e+37
  %v1171 = vand.u32 %v1159, 2147483648
  %v1172 = vor.u32 1.1754944e-38, %v1171
  %v1173 = vsel %vm1170, %v1172, %v1168
  %v1174 = vmul.f32 1.0, %v1173
  %v1175 = vtanh.pop %v1155
  %v1176 = vmul.f32 %v1174, %v1010
  %1178 = vrot.lane.b32.xlu0 %v1175, 64
  %v1179 = vpop.permute.xlu0 %1178
  %v1181 = vmul.f32 %v1174, %v1179
  %1183 = vrot.lane.b32.xlu0 %v1181, 32
  %v1184 = vpop.permute.xlu0 %1183
  %v1186 = vadd.f32 %v1176, %v1184
  %v1187 = vtanh.pop %v1186
  %1189 = vrot.lane.b32.xlu0 %v1187, 64
  %v1190 = vpop.permute.xlu0 %1189
  %v1192 = vmul.f32 %v1174, %v1190
  %v1193 = vpack.c.bf16 %v1115, %v1115
  %v1195 = vrot.slane %v1193, 3
  %v1198 = vsel %vm306, %v1193, %v1195
  %1200 = vrot.lane.b32.xlu0 %v1198, 32
  %v1201 = vpop.permute.xlu0 %1200
  %1203 = vst.msk [vmem:[%s683] sm:$0x1] %vm314, %v1201
  %v1204 = vpack.c.bf16 %v1192, %v1192
  %v1206 = vrot.slane %v1204, 3
  %v1209 = vsel %vm306, %v1204, %v1206
  %1211 = vrot.lane.b32.xlu0 %v1209, 64
  %v1212 = vpop.permute.xlu0 %1211
  %1214 = vst.msk [vmem:[%s671] sm:$0x1] %vm327, %v1212
  %s1215 = scalar_lea.vmem [#allocation2], 6
  %v1216 = vld [vmem:[%s1215] sm:$0x1]
  %v1217 = vld [vmem:[%s3] sm:$0xf]
  %v1218 = vld [vmem:[%s3 + $0x4] sm:$0xf]
  %v1219 = vld [vmem:[%s3 + $0x8] sm:$0xf]
  %v1220 = vld [vmem:[%s3 + $0xc] sm:$0xf]
  %v1221 = vunpack.c.l.b16 %v1193
  %v1222 = vpack.c.b16 %v1221, %v1221
  %1223 = vrot.lane.b32.xlu0 %v1222, 32
  %v1224 = vpop.permute.xlu0 %1223
  %v1229 = vunpack.c.l.b16 %v1217
  %v1230 = vunpack.c.l.b16 %v1218
  %v1231 = vunpack.c.l.b16 %v1219
  %v1232 = vunpack.c.l.b16 %v1220
  %v1233 = vpack.c.b16 %v1230, %v1229
  %v1234 = vpack.c.b16 %v1232, %v1231
  %v1238 = vsel %vm177, %v1224, 0
  %1240 = vmatpush.bf16.msra.mxu0 0
  %1241 = vmatpush.bf16.msra.mxu0 0
  %1242 = vmatpush.bf16.msra.mxu0 0
  %1243 = vmatpush.bf16.msra.mxu0 0
  %1244 = vmatpush.bf16.msra.mxu0 0
  %1245 = vmatpush.bf16.msra.mxu0 0
  %1246 = vmatpush.bf16.msra.mxu0 %v1234
  %1247 = vmatpush.bf16.msra.mxu0 %v1233
  %1248 = vmatmul.bf16.gmra.mxu0 %v1238
  %v1249 = vpop.f32.mrf.mxu0
  %v1250 = vadd.f32 0.0, %v1249
  %v1251 = vpop.f32.mrf.mxu0
  %1252 = vdwg.mxu0
  %v1253 = vunpack.c.l.bf16 %v1216
  %v1254 = vadd.f32 %v1253, %v1250
  %v1255 = vxor.u32 %v1254, 2147483648
  %v1256 = vmul.f32 %v1255, 1.442695
  %v1257 = vpow.pop %v1256
  %v1258 = vadd.f32 %v1257, 1.0
  %v1259 = vrcp.pop %v1258
  %v1260 = vmul.f32 %v1258, %v1259
  %v1261 = vsub.f32 1.0, %v1260
  %v1262 = vmul.f32 %v1259, %v1261
  %v1263 = vadd.f32 %v1259, %v1262
  %vm1264 = vweird.f32 %v1258
  %vm1265 = vweird.f32 %v1259
  %vm1266 = vmor %vm1264, %vm1265
  %v1267 = vsel %vm1266, %v1259, %v1263
  %v1268 = vand.u32 2147483647, %v1258
  %vm1269 = vcmp.eq.f32.partialorder %v1268, 8.507059e+37
  %v1270 = vand.u32 %v1258, 2147483648
  %v1271 = vor.u32 1.1754944e-38, %v1270
  %v1272 = vsel %vm1269, %v1271, %v1267
  %v1273 = vmul.f32 1.0, %v1272
  %v1274 = vtanh.pop %v1254
  %v1275 = vmul.f32 %v1273, %v1109
  %1277 = vrot.lane.b32.xlu0 %v1274, 64
  %v1278 = vpop.permute.xlu0 %1277
  %v1280 = vmul.f32 %v1273, %v1278
  %1282 = vrot.lane.b32.xlu0 %v1280, 32
  %v1283 = vpop.permute.xlu0 %1282
  %v1285 = vadd.f32 %v1275, %v1283
  %v1286 = vtanh.pop %v1285
  %1288 = vrot.lane.b32.xlu0 %v1286, 64
  %v1289 = vpop.permute.xlu0 %1288
  %v1291 = vmul.f32 %v1273, %v1289
  %s1292 = scalar_lea.vmem [#allocation3], 1
  %v1293 = vld [vmem:[%s1292] sm:$0x1]
  %v1294 = vld [vmem:[%s4] sm:$0xf]
  %v1295 = vld [vmem:[%s4 + $0x4] sm:$0xf]
  %v1296 = vld [vmem:[%s4 + $0x8] sm:$0xf]
  %v1297 = vld [vmem:[%s4 + $0xc] sm:$0xf]
  %v1298 = vunpack.c.l.b16 %v1204
  %v1299 = vpack.c.b16 %v1298, %v1298
  %1300 = vrot.lane.b32.xlu0 %v1299, 32
  %v1301 = vpop.permute.xlu0 %1300
  %v1306 = vunpack.c.l.b16 %v1294
  %v1307 = vunpack.c.l.b16 %v1295
  %v1308 = vunpack.c.l.b16 %v1296
  %v1309 = vunpack.c.l.b16 %v1297
  %v1310 = vpack.c.b16 %v1307, %v1306
  %v1311 = vpack.c.b16 %v1309, %v1308
  %v1315 = vsel %vm177, %v1301, 0
  %1317 = vmatpush.bf16.msra.mxu0 0
  %1318 = vmatpush.bf16.msra.mxu0 0
  %1319 = vmatpush.bf16.msra.mxu0 0
  %1320 = vmatpush.bf16.msra.mxu0 0
  %1321 = vmatpush.bf16.msra.mxu0 0
  %1322 = vmatpush.bf16.msra.mxu0 0
  %1323 = vmatpush.bf16.msra.mxu0 %v1311
  %1324 = vmatpush.bf16.msra.mxu0 %v1310
  %1325 = vmatmul.bf16.gmra.mxu0 %v1315
  %v1326 = vpop.f32.mrf.mxu0
  %v1327 = vadd.f32 0.0, %v1326
  %v1328 = vpop.f32.mrf.mxu0
  %1329 = vdwg.mxu0
  %v1330 = vunpack.c.l.bf16 %v1293
  %v1331 = vadd.f32 %v1330, %v1327
  %v1332 = vxor.u32 %v1331, 2147483648
  %v1333 = vmul.f32 %v1332, 1.442695
  %v1334 = vpow.pop %v1333
  %v1335 = vadd.f32 %v1334, 1.0
  %v1336 = vrcp.pop %v1335
  %v1337 = vmul.f32 %v1335, %v1336
  %v1338 = vsub.f32 1.0, %v1337
  %v1339 = vmul.f32 %v1336, %v1338
  %v1340 = vadd.f32 %v1336, %v1339
  %vm1341 = vweird.f32 %v1335
  %vm1342 = vweird.f32 %v1336
  %vm1343 = vmor %vm1341, %vm1342
  %v1344 = vsel %vm1343, %v1336, %v1340
  %v1345 = vand.u32 2147483647, %v1335
  %vm1346 = vcmp.eq.f32.partialorder %v1345, 8.507059e+37
  %v1347 = vand.u32 %v1335, 2147483648
  %v1348 = vor.u32 1.1754944e-38, %v1347
  %v1349 = vsel %vm1346, %v1348, %v1344
  %v1350 = vmul.f32 1.0, %v1349
  %v1351 = vtanh.pop %v1331
  %v1352 = vmul.f32 %v1350, %v1186
  %1354 = vrot.lane.b32.xlu0 %v1351, 64
  %v1355 = vpop.permute.xlu0 %1354
  %v1357 = vmul.f32 %v1350, %v1355
  %1359 = vrot.lane.b32.xlu0 %v1357, 32
  %v1360 = vpop.permute.xlu0 %1359
  %v1362 = vadd.f32 %v1352, %v1360
  %v1363 = vtanh.pop %v1362
  %1365 = vrot.lane.b32.xlu0 %v1363, 64
  %v1366 = vpop.permute.xlu0 %1365
  %v1368 = vmul.f32 %v1350, %v1366
  %v1369 = vpack.c.bf16 %v1291, %v1291
  %v1371 = vrot.slane %v1369, 3
  %v1374 = vsel %vm306, %v1369, %v1371
  %1376 = vrot.lane.b32.xlu0 %v1374, 32
  %v1377 = vpop.permute.xlu0 %1376
  %1379 = vst.msk [vmem:[%s505] sm:$0x1] %vm314, %v1377
  %v1380 = vpack.c.bf16 %v1368, %v1368
  %v1382 = vrot.slane %v1380, 3
  %v1385 = vsel %vm306, %v1380, %v1382
  %1387 = vrot.lane.b32.xlu0 %v1385, 64
  %v1388 = vpop.permute.xlu0 %1387
  %1390 = vst.msk [vmem:[%s493] sm:$0x1] %vm327, %v1388
  %s1391 = scalar_lea.vmem [#allocation2], 7
  %v1392 = vld [vmem:[%s1391] sm:$0x1]
  %v1393 = vld [vmem:[%s3] sm:$0xf]
  %v1394 = vld [vmem:[%s3 + $0x4] sm:$0xf]
  %v1395 = vld [vmem:[%s3 + $0x8] sm:$0xf]
  %v1396 = vld [vmem:[%s3 + $0xc] sm:$0xf]
  %v1397 = vunpack.c.l.b16 %v1369
  %v1398 = vpack.c.b16 %v1397, %v1397
  %1399 = vrot.lane.b32.xlu0 %v1398, 32
  %v1400 = vpop.permute.xlu0 %1399
  %v1405 = vunpack.c.l.b16 %v1393
  %v1406 = vunpack.c.l.b16 %v1394
  %v1407 = vunpack.c.l.b16 %v1395
  %v1408 = vunpack.c.l.b16 %v1396
  %v1409 = vpack.c.b16 %v1406, %v1405
  %v1410 = vpack.c.b16 %v1408, %v1407
  %v1414 = vsel %vm177, %v1400, 0
  %1416 = vmatpush.bf16.msra.mxu0 0
  %1417 = vmatpush.bf16.msra.mxu0 0
  %1418 = vmatpush.bf16.msra.mxu0 0
  %1419 = vmatpush.bf16.msra.mxu0 0
  %1420 = vmatpush.bf16.msra.mxu0 0
  %1421 = vmatpush.bf16.msra.mxu0 0
  %1422 = vmatpush.bf16.msra.mxu0 %v1410
  %1423 = vmatpush.bf16.msra.mxu0 %v1409
  %1424 = vmatmul.bf16.gmra.mxu0 %v1414
  %v1425 = vpop.f32.mrf.mxu0
  %v1426 = vadd.f32 0.0, %v1425
  %v1427 = vpop.f32.mrf.mxu0
  %1428 = vdwg.mxu0
  %v1429 = vunpack.c.l.bf16 %v1392
  %v1430 = vadd.f32 %v1429, %v1426
  %v1431 = vxor.u32 %v1430, 2147483648
  %v1432 = vmul.f32 %v1431, 1.442695
  %v1433 = vpow.pop %v1432
  %v1434 = vadd.f32 %v1433, 1.0
  %v1435 = vrcp.pop %v1434
  %v1436 = vmul.f32 %v1434, %v1435
  %v1437 = vsub.f32 1.0, %v1436
  %v1438 = vmul.f32 %v1435, %v1437
  %v1439 = vadd.f32 %v1435, %v1438
  %vm1440 = vweird.f32 %v1434
  %vm1441 = vweird.f32 %v1435
  %vm1442 = vmor %vm1440, %vm1441
  %v1443 = vsel %vm1442, %v1435, %v1439
  %v1444 = vand.u32 2147483647, %v1434
  %vm1445 = vcmp.eq.f32.partialorder %v1444, 8.507059e+37
  %v1446 = vand.u32 %v1434, 2147483648
  %v1447 = vor.u32 1.1754944e-38, %v1446
  %v1448 = vsel %vm1445, %v1447, %v1443
  %v1449 = vmul.f32 1.0, %v1448
  %v1450 = vtanh.pop %v1430
  %v1451 = vmul.f32 %v1449, %v1285
  %1453 = vrot.lane.b32.xlu0 %v1450, 64
  %v1454 = vpop.permute.xlu0 %1453
  %v1456 = vmul.f32 %v1449, %v1454
  %1458 = vrot.lane.b32.xlu0 %v1456, 32
  %v1459 = vpop.permute.xlu0 %1458
  %v1461 = vadd.f32 %v1451, %v1459
  %v1462 = vtanh.pop %v1461
  %1464 = vrot.lane.b32.xlu0 %v1462, 64
  %v1465 = vpop.permute.xlu0 %1464
  %v1467 = vmul.f32 %v1449, %v1465
  %v1468 = vld [vmem:[#allocation3] sm:$0x1]
  %v1469 = vld [vmem:[%s4] sm:$0xf]
  %v1470 = vld [vmem:[%s4 + $0x4] sm:$0xf]
  %v1471 = vld [vmem:[%s4 + $0x8] sm:$0xf]
  %v1472 = vld [vmem:[%s4 + $0xc] sm:$0xf]
  %v1473 = vunpack.c.l.b16 %v1380
  %v1474 = vpack.c.b16 %v1473, %v1473
  %1475 = vrot.lane.b32.xlu0 %v1474, 32
  %v1476 = vpop.permute.xlu0 %1475
  %v1481 = vunpack.c.l.b16 %v1469
  %v1482 = vunpack.c.l.b16 %v1470
  %v1483 = vunpack.c.l.b16 %v1471
  %v1484 = vunpack.c.l.b16 %v1472
  %v1485 = vpack.c.b16 %v1482, %v1481
  %v1486 = vpack.c.b16 %v1484, %v1483
  %v1490 = vsel %vm177, %v1476, 0
  %1492 = vmatpush.bf16.msra.mxu0 0
  %1493 = vmatpush.bf16.msra.mxu0 0
  %1494 = vmatpush.bf16.msra.mxu0 0
  %1495 = vmatpush.bf16.msra.mxu0 0
  %1496 = vmatpush.bf16.msra.mxu0 0
  %1497 = vmatpush.bf16.msra.mxu0 0
  %1498 = vmatpush.bf16.msra.mxu0 %v1486
  %1499 = vmatpush.bf16.msra.mxu0 %v1485
  %1500 = vmatmul.bf16.gmra.mxu0 %v1490
  %v1501 = vpop.f32.mrf.mxu0
  %v1502 = vadd.f32 0.0, %v1501
  %v1503 = vpop.f32.mrf.mxu0
  %1504 = vdwg.mxu0
  %v1505 = vunpack.c.l.bf16 %v1468
  %v1506 = vadd.f32 %v1505, %v1502
  %v1507 = vxor.u32 %v1506, 2147483648
  %v1508 = vmul.f32 %v1507, 1.442695
  %v1509 = vpow.pop %v1508
  %v1510 = vadd.f32 %v1509, 1.0
  %v1511 = vrcp.pop %v1510
  %v1512 = vmul.f32 %v1510, %v1511
  %v1513 = vsub.f32 1.0, %v1512
  %v1514 = vmul.f32 %v1511, %v1513
  %v1515 = vadd.f32 %v1511, %v1514
  %vm1516 = vweird.f32 %v1510
  %vm1517 = vweird.f32 %v1511
  %vm1518 = vmor %vm1516, %vm1517
  %v1519 = vsel %vm1518, %v1511, %v1515
  %v1520 = vand.u32 2147483647, %v1510
  %vm1521 = vcmp.eq.f32.partialorder %v1520, 8.507059e+37
  %v1522 = vand.u32 %v1510, 2147483648
  %v1523 = vor.u32 1.1754944e-38, %v1522
  %v1524 = vsel %vm1521, %v1523, %v1519
  %v1525 = vmul.f32 1.0, %v1524
  %v1526 = vtanh.pop %v1506
  %v1527 = vmul.f32 %v1525, %v1362
  %1529 = vrot.lane.b32.xlu0 %v1526, 64
  %v1530 = vpop.permute.xlu0 %1529
  %v1532 = vmul.f32 %v1525, %v1530
  %1534 = vrot.lane.b32.xlu0 %v1532, 32
  %v1535 = vpop.permute.xlu0 %1534
  %v1537 = vadd.f32 %v1527, %v1535
  %v1538 = vtanh.pop %v1537
  %1540 = vrot.lane.b32.xlu0 %v1538, 64
  %v1541 = vpop.permute.xlu0 %1540
  %v1543 = vmul.f32 %v1525, %v1541
  %v1544 = vpack.c.bf16 %v1467, %v1467
  %v1546 = vrot.slane %v1544, 3
  %v1549 = vsel %vm306, %v1544, %v1546
  %1551 = vrot.lane.b32.xlu0 %v1549, 32
  %v1552 = vpop.permute.xlu0 %1551
  %1554 = vst.msk [vmem:[%s326] sm:$0x1] %vm314, %v1552
  %v1555 = vpack.c.bf16 %v1543, %v1543
  %v1557 = vrot.slane %v1555, 3
  %v1560 = vsel %vm306, %v1555, %v1557
  %1562 = vrot.lane.b32.xlu0 %v1560, 64
  %v1563 = vpop.permute.xlu0 %1562
  %1565 = vst.msk [vmem:[%s5] sm:$0x1] %vm327, %v1563
  // Predicated region
  $region22: #{deepsignal_rnn_forward.2} parent=0 // pred_check
    _
  $region23: #{deepsignal_rnn_forward.2} parent=0 // pred_check_branch
    %1567 = sbr.rel (0) target = $region25
  $region24: #{deepsignal_rnn_forward.2} parent=0 // pred_region
    _
  $region25: #{deepsignal_rnn_forward.2} parent=0 // pred_fallthru
    _
  // Predicated region
  $region26: #{deepsignal_rnn_forward.2} parent=0 // pred_check
    _
  $region27: #{deepsignal_rnn_forward.2} parent=0 // pred_check_branch
    %1569 = sbr.rel (0) target = $region29
  $region28: #{deepsignal_rnn_forward.2} parent=0 // pred_region
    _
  $region29: #{deepsignal_rnn_forward.2} parent=0 // pred_fallthru
    _

</llo_original>
